<compile_context>
chip_gen: v6e
topology: v6e:2x2x1
jax: 0.10.0
libtpu: 0.0.40
codegen_flags: <defaults>
</compile_context>

<pallas_src>
import math
import jax
import jax.numpy as jnp
from jax import lax
from jax.experimental import pallas as pl
from jax.experimental.pallas import tpu as pltpu

# ---------------- model config (small, consistent with the module) -----------
C_A = 32          # atom single-representation channels
C_AP = 8          # atom pair-representation channels
N_HEADS = 4
D_HEAD = C_A // N_HEADS
TRANS_N = 4       # transition expansion factor
NO_BLOCKS = 2
NBH = NO_BLOCKS * N_HEADS
HIDDEN = TRANS_N * C_A
INF = 1e9
EPS = 1e-5


# ---------------- in-kernel helpers ------------------------------------------
def _layer_norm(x, w, b, eps=EPS):
    mu = jnp.mean(x, axis=-1, keepdims=True)
    var = jnp.mean((x - mu) ** 2, axis=-1, keepdims=True)
    return (x - mu) * jax.lax.rsqrt(var + eps) * w + b


# ---------------- fused AtomTransformer kernel --------------------------------
def _make_kernel(bt, n):
    """bt = batch elements per grid step, n = atoms (N)."""

    def kernel(a_ref, apcm_ref, mask_ref,
               wqkvg_ref, wo_ref, w12_ref, w3_ref, vecp_ref, wbp_ref,
               out_ref, bias_scr):
        # ---- pair bias precompute (channel-major LN + per-head VPU FMAs) ----
        # apcm_ref: [bt, C_AP, n, n] f32; wbp_ref (SMEM): [C_AP+1, NBH] f32
        # (row C_AP holds the folded LN-bias constant).  Mask bias folded once.
        for b in range(bt):
            slabs = [apcm_ref[b, c] for c in range(C_AP)]          # C_AP x [n, n]
            s = slabs[0]
            for c in range(1, C_AP):
                s = s + slabs[c]
            mu = s * (1.0 / C_AP)
            v = (slabs[0] - mu) ** 2
            for c in range(1, C_AP):
                v = v + (slabs[c] - mu) ** 2
            inv = lax.rsqrt(v * (1.0 / C_AP) + EPS)
            norm = [(slabs[c] - mu) * inv for c in range(C_AP)]
            mask_bias = (mask_ref[b] - 1.0) * INF                  # 0 where valid
            for bh in range(NBH):
                acc = mask_bias + wbp_ref[C_AP, bh]                # folded LN bias
                for c in range(C_AP):
                    acc = acc + norm[c] * wbp_ref[c, bh]           # VPU FMA
                bias_scr[b, bh] = acc

        # ---- NO_BLOCKS AtomBlocks, fused; `a` resident as [bt*n, C_A] ----
        a = a_ref[...].reshape(bt * n, C_A)        # free reshape (n % 8 == 0)
        # TODO(synk): for larger NO_BLOCKS switch to lax.fori_loop over blocks.
        for blk in range(NO_BLOCKS):
            vp = vecp_ref[blk]                                     # [8, 4*C_A] f32
            ln_a_w = vp[0:1, :C_A]
            ln_a_b = vp[1:2, :C_A]
            qkvg_b = vp[2:3, :]                                    # scaled bq ++ zeros
            ln_t_w = vp[3:4, :C_A]
            ln_t_b = vp[4:5, :C_A]

            # -------- AttentionWithPairBias --------
            a_ln = _layer_norm(a, ln_a_w, ln_a_b)                  # f32 VPU
            qkvg = jnp.dot(a_ln.astype(jnp.bfloat16), wqkvg_ref[blk],
                           preferred_element_type=jnp.float32) + qkvg_b  # [bt*n, 4C]
            gate = jax.nn.sigmoid(qkvg[:, 3 * C_A:])               # f32 [bt*n, C_A]
            wo_blk = wo_ref[blk]                                   # [H, Dh, C_A] bf16

            outs = []
            for b in range(bt):
                r0 = b * n
                qkvg_rows = qkvg[r0:r0 + n, :]
                gate_rows = gate[r0:r0 + n, :]
                acc = jnp.zeros((n, C_A), jnp.float32)
                for h in range(N_HEADS):
                    lo = h * D_HEAD
                    qh = qkvg_rows[:, lo:lo + D_HEAD].astype(jnp.bfloat16)
                    kh = qkvg_rows[:, C_A + lo:C_A + lo + D_HEAD].astype(jnp.bfloat16)
                    vh = qkvg_rows[:, 2 * C_A + lo:2 * C_A + lo + D_HEAD].astype(jnp.bfloat16)
                    # q @ k^T without an explicit XLU transpose
                    logits = lax.dot_general(
                        qh, kh, (((1,), (1,)), ((), ())),
                        preferred_element_type=jnp.float32)        # [n, n] f32
                    logits = logits + bias_scr[b, blk * N_HEADS + h]
                    m = jnp.max(logits, axis=-1, keepdims=True)
                    p = jnp.exp(logits - m)
                    denom = jnp.sum(p, axis=-1, keepdims=True)
                    attn = p * pl.reciprocal(denom, approx=True)   # EUP, not VALU
                    oh = jnp.dot(attn.astype(jnp.bfloat16), vh,
                                 preferred_element_type=jnp.float32)
                    oh = oh * gate_rows[:, lo:lo + D_HEAD]
                    # output projection folded per head (no head concat)
                    acc = acc + jnp.dot(oh.astype(jnp.bfloat16), wo_blk[h],
                                        preferred_element_type=jnp.float32)
                outs.append(acc)
            attn_out = outs[0] if bt == 1 else jnp.concatenate(outs, axis=0)
            a = a + attn_out                                       # residual 1

            # -------- Transition (SwiGLU) --------
            t_ln = _layer_norm(a, ln_t_w, ln_t_b)
            h12 = jnp.dot(t_ln.astype(jnp.bfloat16), w12_ref[blk],
                          preferred_element_type=jnp.float32)      # [bt*n, 2*HIDDEN]
            hact = jax.nn.silu(h12[:, :HIDDEN]) * h12[:, HIDDEN:]
            a = a + jnp.dot(hact.astype(jnp.bfloat16), w3_ref[blk],
                            preferred_element_type=jnp.float32)    # residual 2

        out_ref[...] = a.reshape(bt, n, C_A).astype(out_ref.dtype)

    return kernel


# ---------------- wrapper ------------------------------------------------------
def _const_spec(shape):
    nd = len(shape)
    return pl.BlockSpec(shape, lambda *_: (0,) * nd)


def _pick_bt(batch):
    # keep >=2 grid steps (v7x has 2 TensorCores); otherwise amortize step cost
    if batch <= 2:
        return 1
    for bt in range(batch // 2, 0, -1):
        if batch % bt == 0:
            return bt
    return 1


def atom_transformer(a, ap, ap_mask, packed):
    B, N, C = a.shape
    assert C == C_A and N % 8 == 0
    # channel-major pair rep: in-kernel pair LN / bias projection stay lane-dense
    # on the key axis.  TODO(synk): have the producer emit ap channel-major to
    # drop this one-time XLA transpose entirely.
    ap_cm = jnp.transpose(ap, (0, 3, 1, 2))            # [B, C_AP, N, N]

    bt = _pick_bt(B)
    grid = (B // bt,)
    kernel = _make_kernel(bt, N)

    in_specs = [
        pl.BlockSpec((bt, N, C), lambda i: (i, 0, 0)),
        pl.BlockSpec((bt, C_AP, N, N), lambda i: (i, 0, 0, 0)),
        pl.BlockSpec((bt, N, N), lambda i: (i, 0, 0)),
        _const_spec(packed["wqkvg"].shape),
        _const_spec(packed["wo"].shape),
        _const_spec(packed["w12"].shape),
        _const_spec(packed["w3"].shape),
        _const_spec(packed["vecp"].shape),
        pl.BlockSpec(memory_space=pltpu.MemorySpace.SMEM),   # pair-bias scalars
    ]
    return pl.pallas_call(
        kernel,
        out_shape=jax.ShapeDtypeStruct((B, N, C), a.dtype),
        grid_spec=pltpu.PrefetchScalarGridSpec(
            num_scalar_prefetch=0,
            grid=grid,
            in_specs=in_specs,
            out_specs=pl.BlockSpec((bt, N, C), lambda i: (i, 0, 0)),
            scratch_shapes=[pltpu.VMEM((bt, NBH, N, N), jnp.float32)],
        ),
        compiler_params=pltpu.CompilerParams(
            dimension_semantics=("parallel",)),
    )(a, ap_cm, ap_mask, packed["wqkvg"], packed["wo"], packed["w12"],
      packed["w3"], packed["vecp"], packed["wbp"])


# ---------------- parameter init & packing ------------------------------------
def init_block_params(key):
    ks = iter(jax.random.split(key, 16))

    def nrm(shape, scl):
        return jax.random.normal(next(ks), shape, jnp.float32) * scl

    def lin(shape, fan_in):
        return nrm(shape, 1.0 / math.sqrt(fan_in))

    return dict(
        ln_a_w=1.0 + nrm((C_A,), 0.1), ln_a_b=nrm((C_A,), 0.05),
        wq=lin((C_A, C_A), C_A), bq=nrm((C_A,), 0.1),
        wk=lin((C_A, C_A), C_A), wv=lin((C_A, C_A), C_A),
        ln_p_w=1.0 + nrm((C_AP,), 0.1), ln_p_b=nrm((C_AP,), 0.05),
        wb=lin((C_AP, N_HEADS), C_AP),
        wg=lin((C_A, C_A), C_A), wo=lin((C_A, C_A), C_A),
        ln_t_w=1.0 + nrm((C_A,), 0.1), ln_t_b=nrm((C_A,), 0.05),
        w1=lin((C_A, TRANS_N * C_A), C_A), w2=lin((C_A, TRANS_N * C_A), C_A),
        w3=lin((TRANS_N * C_A, C_A), TRANS_N * C_A),
    )


def pack_params(params_per_block):
    """Pack per-block params into MXU/VPU-friendly, lane-dense operands."""
    scale = 1.0 / math.sqrt(D_HEAD)
    wqkvg, wo, w12, w3, vecp, wb_cols, bc_cols = [], [], [], [], [], [], []
    for p in params_per_block:
        # fold 1/sqrt(d_head) into the q projection (exact)
        wqkvg.append(jnp.concatenate(
            [p["wq"] * scale, p["wk"], p["wv"], p["wg"]], axis=1))     # [C_A, 4*C_A]
        wo.append(p["wo"].reshape(N_HEADS, D_HEAD, C_A))               # per-head split
        w12.append(jnp.concatenate([p["w1"], p["w2"]], axis=1))        # [C_A, 2*n*C_A]
        w3.append(p["w3"])

        def row(v):
            return jnp.pad(v, (0, 4 * C_A - v.shape[0]))
        qkvg_bias = jnp.concatenate([p["bq"] * scale,
                                     jnp.zeros((3 * C_A,), jnp.float32)])
        zero_row = jnp.zeros((4 * C_A,), jnp.float32)
        vecp.append(jnp.stack([row(p["ln_a_w"]), row(p["ln_a_b"]), qkvg_bias,
                               row(p["ln_t_w"]), row(p["ln_t_b"]),
                               zero_row, zero_row, zero_row]))          # [8, 4*C_A]

        # fold the pair-LN affine into the bias projection (exact)
        wb_cols.append(p["ln_p_w"][:, None] * p["wb"])                  # [C_AP, H]
        bc_cols.append(p["ln_p_b"] @ p["wb"])                           # [H]

    wb_fold = jnp.concatenate(wb_cols, axis=1)                          # [C_AP, NBH]
    bconst = jnp.concatenate(bc_cols)                                   # [NBH]
    wbp = jnp.concatenate([wb_fold, bconst[None, :]], axis=0)           # [C_AP+1, NBH]

    return dict(
        wqkvg=jnp.stack(wqkvg).astype(jnp.bfloat16),   # [NB, C_A, 4*C_A]
        wo=jnp.stack(wo).astype(jnp.bfloat16),         # [NB, H, Dh, C_A]
        w12=jnp.stack(w12).astype(jnp.bfloat16),       # [NB, C_A, 2*n*C_A]
        w3=jnp.stack(w3).astype(jnp.bfloat16),         # [NB, n*C_A, C_A]
        vecp=jnp.stack(vecp).astype(jnp.float32),      # [NB, 8, 4*C_A]
        wbp=wbp.astype(jnp.float32),                   # [C_AP+1, NBH] (SMEM)
    )


# ---------------- pure-JAX f32 reference (module semantics) -------------------
def ref_forward(a, ap, ap_mask, raw_params):
    def ln(x, w, b):
        mu = jnp.mean(x, -1, keepdims=True)
        var = jnp.mean((x - mu) ** 2, -1, keepdims=True)
        return (x - mu) * jax.lax.rsqrt(var + EPS) * w + b

    B, N, _ = a.shape
    scale = 1.0 / math.sqrt(D_HEAD)
    mask_bias = (ap_mask - 1.0) * INF
    for p in raw_params:
        a_ln = ln(a, p["ln_a_w"], p["ln_a_b"])
        q = a_ln @ p["wq"] + p["bq"]
        k = a_ln @ p["wk"]
        v = a_ln @ p["wv"]
        g = jax.nn.sigmoid(a_ln @ p["wg"])
        pair_b = jnp.einsum("bijc,ch->bhij", ln(ap, p["ln_p_w"], p["ln_p_b"]), p["wb"])
        qh = q.reshape(B, N, N_HEADS, D_HEAD).transpose(0, 2, 1, 3)
        kh = k.reshape(B, N, N_HEADS, D_HEAD).transpose(0, 2, 1, 3)
        vh = v.reshape(B, N, N_HEADS, D_HEAD).transpose(0, 2, 1, 3)
        logits = jnp.einsum("bhid,bhjd->bhij", qh, kh) * scale + pair_b + mask_bias[:, None]
        attn = jax.nn.softmax(logits, axis=-1)
        o = jnp.einsum("bhij,bhjd->bhid", attn, vh).transpose(0, 2, 1, 3).reshape(B, N, C_A)
        a = a + (o * g) @ p["wo"]
        t_ln = ln(a, p["ln_t_w"], p["ln_t_b"])
        a = a + (jax.nn.silu(t_ln @ p["w1"]) * (t_ln @ p["w2"])) @ p["w3"]
    return a


# ---------------- main ---------------------------------------------------------
if __name__ == "__main__":
    key = jax.random.PRNGKey(0)
    k_a, k_ap, k_m, k_p = jax.random.split(key, 4)

    B, N = 2, 16
    a = jax.random.normal(k_a, (B, N, C_A), jnp.float32)
    ap = jax.random.normal(k_ap, (B, N, N, C_AP), jnp.float32)
    ap_mask = (jax.random.uniform(k_m, (B, N, N)) > 0.2).astype(jnp.float32)
    ap_mask = jnp.maximum(ap_mask, jnp.eye(N, dtype=jnp.float32)[None])  # keep diag valid

    raw_params = [init_block_params(k) for k in jax.random.split(k_p, NO_BLOCKS)]
    packed = pack_params(raw_params)

    out = atom_transformer(a, ap, ap_mask, packed)
    jax.block_until_ready(out)

    assert out.shape == (B, N, C_A) and bool(jnp.all(jnp.isfinite(out)))

    # loose tolerance: kernel uses bf16 MXU operands + approx reciprocal,
    # reference is exact f32 — this still catches any structural mistake.
    ref = ref_forward(a, ap, ap_mask, raw_params)
    assert bool(jnp.all(jnp.abs(out - ref) <= 0.25 + 0.1 * jnp.abs(ref))), \
        "kernel output deviates from f32 reference"

    print("KERNEL_OK")
</pallas_src>

<mosaic_0001>
module attributes {stable_mosaic.version = 11 : i64} {
  func.func @kernel(%arg0: i32, %arg1: memref<1x16x32xf32, #tpu.memory_space<vmem>>, %arg2: memref<1x8x16x16xf32, #tpu.memory_space<vmem>>, %arg3: memref<1x16x16xf32, #tpu.memory_space<vmem>>, %arg4: memref<2x32x128xbf16, #tpu.memory_space<vmem>>, %arg5: memref<2x4x8x32xbf16, #tpu.memory_space<vmem>>, %arg6: memref<2x32x256xbf16, #tpu.memory_space<vmem>>, %arg7: memref<2x128x32xbf16, #tpu.memory_space<vmem>>, %arg8: memref<2x8x128xf32, #tpu.memory_space<vmem>>, %arg9: memref<9x8xf32, #tpu.memory_space<smem>>, %arg10: memref<1x16x32xf32, #tpu.memory_space<vmem>>, %arg11: memref<1x8x16x16xf32, #tpu.memory_space<vmem>>) attributes {dimension_semantics = [#tpu.dimension_semantics<parallel>], iteration_bounds = array<i64: 2>, scalar_prefetch = 0 : i64, scratch_operands = 1 : i64, tpu.core_type = #tpu.core_type<tc>, window_params = [{transform_indices = @transform_0, window_bounds = array<i64: 1, 16, 32>}, {transform_indices = @transform_1, window_bounds = array<i64: 1, 8, 16, 16>}, {transform_indices = @transform_2, window_bounds = array<i64: 1, 16, 16>}, {pipeline_mode = #tpu.pipeline_mode<synchronous>, transform_indices = @transform_3, window_bounds = array<i64: 2, 32, 128>}, {pipeline_mode = #tpu.pipeline_mode<synchronous>, transform_indices = @transform_4, window_bounds = array<i64: 2, 4, 8, 32>}, {pipeline_mode = #tpu.pipeline_mode<synchronous>, transform_indices = @transform_5, window_bounds = array<i64: 2, 32, 256>}, {pipeline_mode = #tpu.pipeline_mode<synchronous>, transform_indices = @transform_6, window_bounds = array<i64: 2, 128, 32>}, {pipeline_mode = #tpu.pipeline_mode<synchronous>, transform_indices = @transform_7, window_bounds = array<i64: 2, 8, 128>}, {transform_indices = @transform_8, window_bounds = array<i64: 9, 8>}, {transform_indices = @transform_9, window_bounds = array<i64: 1, 16, 32>}]} {
    %c0 = arith.constant 0 : index
    %c0_0 = arith.constant 0 : index
    %c0_1 = arith.constant 0 : index
    %c0_2 = arith.constant 0 : index
    %0 = vector.load %arg2[%c0, %c0_0, %c0_1, %c0_2] : memref<1x8x16x16xf32, #tpu.memory_space<vmem>>, vector<1x1x16x16xf32>
    %1 = vector.shape_cast %0 : vector<1x1x16x16xf32> to vector<16x16xf32>
    %c0_3 = arith.constant 0 : index
    %c1 = arith.constant 1 : index
    %c0_4 = arith.constant 0 : index
    %c0_5 = arith.constant 0 : index
    %2 = vector.load %arg2[%c0_3, %c1, %c0_4, %c0_5] : memref<1x8x16x16xf32, #tpu.memory_space<vmem>>, vector<1x1x16x16xf32>
    %3 = vector.shape_cast %2 : vector<1x1x16x16xf32> to vector<16x16xf32>
    %c0_6 = arith.constant 0 : index
    %c2 = arith.constant 2 : index
    %c0_7 = arith.constant 0 : index
    %c0_8 = arith.constant 0 : index
    %4 = vector.load %arg2[%c0_6, %c2, %c0_7, %c0_8] : memref<1x8x16x16xf32, #tpu.memory_space<vmem>>, vector<1x1x16x16xf32>
    %5 = vector.shape_cast %4 : vector<1x1x16x16xf32> to vector<16x16xf32>
    %c0_9 = arith.constant 0 : index
    %c3 = arith.constant 3 : index
    %c0_10 = arith.constant 0 : index
    %c0_11 = arith.constant 0 : index
    %6 = vector.load %arg2[%c0_9, %c3, %c0_10, %c0_11] : memref<1x8x16x16xf32, #tpu.memory_space<vmem>>, vector<1x1x16x16xf32>
    %7 = vector.shape_cast %6 : vector<1x1x16x16xf32> to vector<16x16xf32>
    %c0_12 = arith.constant 0 : index
    %c4 = arith.constant 4 : index
    %c0_13 = arith.constant 0 : index
    %c0_14 = arith.constant 0 : index
    %8 = vector.load %arg2[%c0_12, %c4, %c0_13, %c0_14] : memref<1x8x16x16xf32, #tpu.memory_space<vmem>>, vector<1x1x16x16xf32>
    %9 = vector.shape_cast %8 : vector<1x1x16x16xf32> to vector<16x16xf32>
    %c0_15 = arith.constant 0 : index
    %c5 = arith.constant 5 : index
    %c0_16 = arith.constant 0 : index
    %c0_17 = arith.constant 0 : index
    %10 = vector.load %arg2[%c0_15, %c5, %c0_16, %c0_17] : memref<1x8x16x16xf32, #tpu.memory_space<vmem>>, vector<1x1x16x16xf32>
    %11 = vector.shape_cast %10 : vector<1x1x16x16xf32> to vector<16x16xf32>
    %c0_18 = arith.constant 0 : index
    %c6 = arith.constant 6 : index
    %c0_19 = arith.constant 0 : index
    %c0_20 = arith.constant 0 : index
    %12 = vector.load %arg2[%c0_18, %c6, %c0_19, %c0_20] : memref<1x8x16x16xf32, #tpu.memory_space<vmem>>, vector<1x1x16x16xf32>
    %13 = vector.shape_cast %12 : vector<1x1x16x16xf32> to vector<16x16xf32>
    %c0_21 = arith.constant 0 : index
    %c7 = arith.constant 7 : index
    %c0_22 = arith.constant 0 : index
    %c0_23 = arith.constant 0 : index
    %14 = vector.load %arg2[%c0_21, %c7, %c0_22, %c0_23] : memref<1x8x16x16xf32, #tpu.memory_space<vmem>>, vector<1x1x16x16xf32>
    %15 = vector.shape_cast %14 : vector<1x1x16x16xf32> to vector<16x16xf32>
    %16 = arith.addf %1, %3 : vector<16x16xf32>
    %17 = arith.addf %16, %5 : vector<16x16xf32>
    %18 = arith.addf %17, %7 : vector<16x16xf32>
    %19 = arith.addf %18, %9 : vector<16x16xf32>
    %20 = arith.addf %19, %11 : vector<16x16xf32>
    %21 = arith.addf %20, %13 : vector<16x16xf32>
    %22 = arith.addf %21, %15 : vector<16x16xf32>
    %cst = arith.constant 1.250000e-01 : f32
    %23 = vector.broadcast %cst : f32 to vector<16x16xf32>
    %24 = arith.mulf %22, %23 : vector<16x16xf32>
    %25 = arith.subf %1, %24 : vector<16x16xf32>
    %26 = arith.mulf %25, %25 : vector<16x16xf32>
    %27 = arith.subf %3, %24 : vector<16x16xf32>
    %28 = arith.mulf %27, %27 : vector<16x16xf32>
    %29 = arith.addf %26, %28 : vector<16x16xf32>
    %30 = arith.subf %5, %24 : vector<16x16xf32>
    %31 = arith.mulf %30, %30 : vector<16x16xf32>
    %32 = arith.addf %29, %31 : vector<16x16xf32>
    %33 = arith.subf %7, %24 : vector<16x16xf32>
    %34 = arith.mulf %33, %33 : vector<16x16xf32>
    %35 = arith.addf %32, %34 : vector<16x16xf32>
    %36 = arith.subf %9, %24 : vector<16x16xf32>
    %37 = arith.mulf %36, %36 : vector<16x16xf32>
    %38 = arith.addf %35, %37 : vector<16x16xf32>
    %39 = arith.subf %11, %24 : vector<16x16xf32>
    %40 = arith.mulf %39, %39 : vector<16x16xf32>
    %41 = arith.addf %38, %40 : vector<16x16xf32>
    %42 = arith.subf %13, %24 : vector<16x16xf32>
    %43 = arith.mulf %42, %42 : vector<16x16xf32>
    %44 = arith.addf %41, %43 : vector<16x16xf32>
    %45 = arith.subf %15, %24 : vector<16x16xf32>
    %46 = arith.mulf %45, %45 : vector<16x16xf32>
    %47 = arith.addf %44, %46 : vector<16x16xf32>
    %cst_24 = arith.constant 1.250000e-01 : f32
    %48 = vector.broadcast %cst_24 : f32 to vector<16x16xf32>
    %49 = arith.mulf %47, %48 : vector<16x16xf32>
    %cst_25 = arith.constant 9.99999974E-6 : f32
    %50 = vector.broadcast %cst_25 : f32 to vector<16x16xf32>
    %51 = arith.addf %49, %50 : vector<16x16xf32>
    %52 = math.rsqrt %51 : vector<16x16xf32>
    %53 = arith.subf %1, %24 : vector<16x16xf32>
    %54 = arith.mulf %53, %52 : vector<16x16xf32>
    %55 = arith.subf %3, %24 : vector<16x16xf32>
    %56 = arith.mulf %55, %52 : vector<16x16xf32>
    %57 = arith.subf %5, %24 : vector<16x16xf32>
    %58 = arith.mulf %57, %52 : vector<16x16xf32>
    %59 = arith.subf %7, %24 : vector<16x16xf32>
    %60 = arith.mulf %59, %52 : vector<16x16xf32>
    %61 = arith.subf %9, %24 : vector<16x16xf32>
    %62 = arith.mulf %61, %52 : vector<16x16xf32>
    %63 = arith.subf %11, %24 : vector<16x16xf32>
    %64 = arith.mulf %63, %52 : vector<16x16xf32>
    %65 = arith.subf %13, %24 : vector<16x16xf32>
    %66 = arith.mulf %65, %52 : vector<16x16xf32>
    %67 = arith.subf %15, %24 : vector<16x16xf32>
    %68 = arith.mulf %67, %52 : vector<16x16xf32>
    %c0_26 = arith.constant 0 : index
    %c0_27 = arith.constant 0 : index
    %c0_28 = arith.constant 0 : index
    %69 = vector.load %arg3[%c0_26, %c0_27, %c0_28] : memref<1x16x16xf32, #tpu.memory_space<vmem>>, vector<1x16x16xf32>
    %70 = vector.shape_cast %69 : vector<1x16x16xf32> to vector<16x16xf32>
    %cst_29 = arith.constant 1.000000e+00 : f32
    %71 = vector.broadcast %cst_29 : f32 to vector<16x16xf32>
    %72 = arith.subf %70, %71 : vector<16x16xf32>
    %cst_30 = arith.constant 1.000000e+09 : f32
    %73 = vector.broadcast %cst_30 : f32 to vector<16x16xf32>
    %74 = arith.mulf %72, %73 : vector<16x16xf32>
    %c8 = arith.constant 8 : index
    %c0_31 = arith.constant 0 : index
    %75 = memref.load %arg9[%c8, %c0_31] : memref<9x8xf32, #tpu.memory_space<smem>>
    %76 = vector.broadcast %75 : f32 to vector<16x16xf32>
    %77 = arith.addf %74, %76 : vector<16x16xf32>
    %c0_32 = arith.constant 0 : index
    %c0_33 = arith.constant 0 : index
    %78 = memref.load %arg9[%c0_32, %c0_33] : memref<9x8xf32, #tpu.memory_space<smem>>
    %79 = vector.broadcast %78 : f32 to vector<16x16xf32>
    %80 = arith.mulf %54, %79 : vector<16x16xf32>
    %81 = arith.addf %77, %80 : vector<16x16xf32>
    %c1_34 = arith.constant 1 : index
    %c0_35 = arith.constant 0 : index
    %82 = memref.load %arg9[%c1_34, %c0_35] : memref<9x8xf32, #tpu.memory_space<smem>>
    %83 = vector.broadcast %82 : f32 to vector<16x16xf32>
    %84 = arith.mulf %56, %83 : vector<16x16xf32>
    %85 = arith.addf %81, %84 : vector<16x16xf32>
    %c2_36 = arith.constant 2 : index
    %c0_37 = arith.constant 0 : index
    %86 = memref.load %arg9[%c2_36, %c0_37] : memref<9x8xf32, #tpu.memory_space<smem>>
    %87 = vector.broadcast %86 : f32 to vector<16x16xf32>
    %88 = arith.mulf %58, %87 : vector<16x16xf32>
    %89 = arith.addf %85, %88 : vector<16x16xf32>
    %c3_38 = arith.constant 3 : index
    %c0_39 = arith.constant 0 : index
    %90 = memref.load %arg9[%c3_38, %c0_39] : memref<9x8xf32, #tpu.memory_space<smem>>
    %91 = vector.broadcast %90 : f32 to vector<16x16xf32>
    %92 = arith.mulf %60, %91 : vector<16x16xf32>
    %93 = arith.addf %89, %92 : vector<16x16xf32>
    %c4_40 = arith.constant 4 : index
    %c0_41 = arith.constant 0 : index
    %94 = memref.load %arg9[%c4_40, %c0_41] : memref<9x8xf32, #tpu.memory_space<smem>>
    %95 = vector.broadcast %94 : f32 to vector<16x16xf32>
    %96 = arith.mulf %62, %95 : vector<16x16xf32>
    %97 = arith.addf %93, %96 : vector<16x16xf32>
    %c5_42 = arith.constant 5 : index
    %c0_43 = arith.constant 0 : index
    %98 = memref.load %arg9[%c5_42, %c0_43] : memref<9x8xf32, #tpu.memory_space<smem>>
    %99 = vector.broadcast %98 : f32 to vector<16x16xf32>
    %100 = arith.mulf %64, %99 : vector<16x16xf32>
    %101 = arith.addf %97, %100 : vector<16x16xf32>
    %c6_44 = arith.constant 6 : index
    %c0_45 = arith.constant 0 : index
    %102 = memref.load %arg9[%c6_44, %c0_45] : memref<9x8xf32, #tpu.memory_space<smem>>
    %103 = vector.broadcast %102 : f32 to vector<16x16xf32>
    %104 = arith.mulf %66, %103 : vector<16x16xf32>
    %105 = arith.addf %101, %104 : vector<16x16xf32>
    %c7_46 = arith.constant 7 : index
    %c0_47 = arith.constant 0 : index
    %106 = memref.load %arg9[%c7_46, %c0_47] : memref<9x8xf32, #tpu.memory_space<smem>>
    %107 = vector.broadcast %106 : f32 to vector<16x16xf32>
    %108 = arith.mulf %68, %107 : vector<16x16xf32>
    %109 = arith.addf %105, %108 : vector<16x16xf32>
    %c0_48 = arith.constant 0 : index
    %c0_49 = arith.constant 0 : index
    %c0_50 = arith.constant 0 : index
    %c0_51 = arith.constant 0 : index
    %110 = vector.load %arg11[%c0_48, %c0_49, %c0_50, %c0_51] : memref<1x8x16x16xf32, #tpu.memory_space<vmem>>, vector<1x1x16x16xf32>
    %111 = vector.shape_cast %110 : vector<1x1x16x16xf32> to vector<16x16xf32>
    %112 = vector.shape_cast %109 : vector<16x16xf32> to vector<1x1x16x16xf32>
    tpu.vector_store %arg11[%c0_48, %c0_49, %c0_50, %c0_51], %112 {strides = array<i32>} : memref<1x8x16x16xf32, #tpu.memory_space<vmem>>, vector<1x1x16x16xf32>,
    %c8_52 = arith.constant 8 : index
    %c1_53 = arith.constant 1 : index
    %113 = memref.load %arg9[%c8_52, %c1_53] : memref<9x8xf32, #tpu.memory_space<smem>>
    %114 = vector.broadcast %113 : f32 to vector<16x16xf32>
    %115 = arith.addf %74, %114 : vector<16x16xf32>
    %c0_54 = arith.constant 0 : index
    %c1_55 = arith.constant 1 : index
    %116 = memref.load %arg9[%c0_54, %c1_55] : memref<9x8xf32, #tpu.memory_space<smem>>
    %117 = vector.broadcast %116 : f32 to vector<16x16xf32>
    %118 = arith.mulf %54, %117 : vector<16x16xf32>
    %119 = arith.addf %115, %118 : vector<16x16xf32>
    %c1_56 = arith.constant 1 : index
    %c1_57 = arith.constant 1 : index
    %120 = memref.load %arg9[%c1_56, %c1_57] : memref<9x8xf32, #tpu.memory_space<smem>>
    %121 = vector.broadcast %120 : f32 to vector<16x16xf32>
    %122 = arith.mulf %56, %121 : vector<16x16xf32>
    %123 = arith.addf %119, %122 : vector<16x16xf32>
    %c2_58 = arith.constant 2 : index
    %c1_59 = arith.constant 1 : index
    %124 = memref.load %arg9[%c2_58, %c1_59] : memref<9x8xf32, #tpu.memory_space<smem>>
    %125 = vector.broadcast %124 : f32 to vector<16x16xf32>
    %126 = arith.mulf %58, %125 : vector<16x16xf32>
    %127 = arith.addf %123, %126 : vector<16x16xf32>
    %c3_60 = arith.constant 3 : index
    %c1_61 = arith.constant 1 : index
    %128 = memref.load %arg9[%c3_60, %c1_61] : memref<9x8xf32, #tpu.memory_space<smem>>
    %129 = vector.broadcast %128 : f32 to vector<16x16xf32>
    %130 = arith.mulf %60, %129 : vector<16x16xf32>
    %131 = arith.addf %127, %130 : vector<16x16xf32>
    %c4_62 = arith.constant 4 : index
    %c1_63 = arith.constant 1 : index
    %132 = memref.load %arg9[%c4_62, %c1_63] : memref<9x8xf32, #tpu.memory_space<smem>>
    %133 = vector.broadcast %132 : f32 to vector<16x16xf32>
    %134 = arith.mulf %62, %133 : vector<16x16xf32>
    %135 = arith.addf %131, %134 : vector<16x16xf32>
    %c5_64 = arith.constant 5 : index
    %c1_65 = arith.constant 1 : index
    %136 = memref.load %arg9[%c5_64, %c1_65] : memref<9x8xf32, #tpu.memory_space<smem>>
    %137 = vector.broadcast %136 : f32 to vector<16x16xf32>
    %138 = arith.mulf %64, %137 : vector<16x16xf32>
    %139 = arith.addf %135, %138 : vector<16x16xf32>
    %c6_66 = arith.constant 6 : index
    %c1_67 = arith.constant 1 : index
    %140 = memref.load %arg9[%c6_66, %c1_67] : memref<9x8xf32, #tpu.memory_space<smem>>
    %141 = vector.broadcast %140 : f32 to vector<16x16xf32>
    %142 = arith.mulf %66, %141 : vector<16x16xf32>
    %143 = arith.addf %139, %142 : vector<16x16xf32>
    %c7_68 = arith.constant 7 : index
    %c1_69 = arith.constant 1 : index
    %144 = memref.load %arg9[%c7_68, %c1_69] : memref<9x8xf32, #tpu.memory_space<smem>>
    %145 = vector.broadcast %144 : f32 to vector<16x16xf32>
    %146 = arith.mulf %68, %145 : vector<16x16xf32>
    %147 = arith.addf %143, %146 : vector<16x16xf32>
    %c0_70 = arith.constant 0 : index
    %c1_71 = arith.constant 1 : index
    %c0_72 = arith.constant 0 : index
    %c0_73 = arith.constant 0 : index
    %148 = vector.load %arg11[%c0_70, %c1_71, %c0_72, %c0_73] : memref<1x8x16x16xf32, #tpu.memory_space<vmem>>, vector<1x1x16x16xf32>
    %149 = vector.shape_cast %148 : vector<1x1x16x16xf32> to vector<16x16xf32>
    %150 = vector.shape_cast %147 : vector<16x16xf32> to vector<1x1x16x16xf32>
    tpu.vector_store %arg11[%c0_70, %c1_71, %c0_72, %c0_73], %150 {strides = array<i32>} : memref<1x8x16x16xf32, #tpu.memory_space<vmem>>, vector<1x1x16x16xf32>,
    %c8_74 = arith.constant 8 : index
    %c2_75 = arith.constant 2 : index
    %151 = memref.load %arg9[%c8_74, %c2_75] : memref<9x8xf32, #tpu.memory_space<smem>>
    %152 = vector.broadcast %151 : f32 to vector<16x16xf32>
    %153 = arith.addf %74, %152 : vector<16x16xf32>
    %c0_76 = arith.constant 0 : index
    %c2_77 = arith.constant 2 : index
    %154 = memref.load %arg9[%c0_76, %c2_77] : memref<9x8xf32, #tpu.memory_space<smem>>
    %155 = vector.broadcast %154 : f32 to vector<16x16xf32>
    %156 = arith.mulf %54, %155 : vector<16x16xf32>
    %157 = arith.addf %153, %156 : vector<16x16xf32>
    %c1_78 = arith.constant 1 : index
    %c2_79 = arith.constant 2 : index
    %158 = memref.load %arg9[%c1_78, %c2_79] : memref<9x8xf32, #tpu.memory_space<smem>>
    %159 = vector.broadcast %158 : f32 to vector<16x16xf32>
    %160 = arith.mulf %56, %159 : vector<16x16xf32>
    %161 = arith.addf %157, %160 : vector<16x16xf32>
    %c2_80 = arith.constant 2 : index
    %c2_81 = arith.constant 2 : index
    %162 = memref.load %arg9[%c2_80, %c2_81] : memref<9x8xf32, #tpu.memory_space<smem>>
    %163 = vector.broadcast %162 : f32 to vector<16x16xf32>
    %164 = arith.mulf %58, %163 : vector<16x16xf32>
    %165 = arith.addf %161, %164 : vector<16x16xf32>
    %c3_82 = arith.constant 3 : index
    %c2_83 = arith.constant 2 : index
    %166 = memref.load %arg9[%c3_82, %c2_83] : memref<9x8xf32, #tpu.memory_space<smem>>
    %167 = vector.broadcast %166 : f32 to vector<16x16xf32>
    %168 = arith.mulf %60, %167 : vector<16x16xf32>
    %169 = arith.addf %165, %168 : vector<16x16xf32>
    %c4_84 = arith.constant 4 : index
    %c2_85 = arith.constant 2 : index
    %170 = memref.load %arg9[%c4_84, %c2_85] : memref<9x8xf32, #tpu.memory_space<smem>>
    %171 = vector.broadcast %170 : f32 to vector<16x16xf32>
    %172 = arith.mulf %62, %171 : vector<16x16xf32>
    %173 = arith.addf %169, %172 : vector<16x16xf32>
    %c5_86 = arith.constant 5 : index
    %c2_87 = arith.constant 2 : index
    %174 = memref.load %arg9[%c5_86, %c2_87] : memref<9x8xf32, #tpu.memory_space<smem>>
    %175 = vector.broadcast %174 : f32 to vector<16x16xf32>
    %176 = arith.mulf %64, %175 : vector<16x16xf32>
    %177 = arith.addf %173, %176 : vector<16x16xf32>
    %c6_88 = arith.constant 6 : index
    %c2_89 = arith.constant 2 : index
    %178 = memref.load %arg9[%c6_88, %c2_89] : memref<9x8xf32, #tpu.memory_space<smem>>
    %179 = vector.broadcast %178 : f32 to vector<16x16xf32>
    %180 = arith.mulf %66, %179 : vector<16x16xf32>
    %181 = arith.addf %177, %180 : vector<16x16xf32>
    %c7_90 = arith.constant 7 : index
    %c2_91 = arith.constant 2 : index
    %182 = memref.load %arg9[%c7_90, %c2_91] : memref<9x8xf32, #tpu.memory_space<smem>>
    %183 = vector.broadcast %182 : f32 to vector<16x16xf32>
    %184 = arith.mulf %68, %183 : vector<16x16xf32>
    %185 = arith.addf %181, %184 : vector<16x16xf32>
    %c0_92 = arith.constant 0 : index
    %c2_93 = arith.constant 2 : index
    %c0_94 = arith.constant 0 : index
    %c0_95 = arith.constant 0 : index
    %186 = vector.load %arg11[%c0_92, %c2_93, %c0_94, %c0_95] : memref<1x8x16x16xf32, #tpu.memory_space<vmem>>, vector<1x1x16x16xf32>
    %187 = vector.shape_cast %186 : vector<1x1x16x16xf32> to vector<16x16xf32>
    %188 = vector.shape_cast %185 : vector<16x16xf32> to vector<1x1x16x16xf32>
    tpu.vector_store %arg11[%c0_92, %c2_93, %c0_94, %c0_95], %188 {strides = array<i32>} : memref<1x8x16x16xf32, #tpu.memory_space<vmem>>, vector<1x1x16x16xf32>,
    %c8_96 = arith.constant 8 : index
    %c3_97 = arith.constant 3 : index
    %189 = memref.load %arg9[%c8_96, %c3_97] : memref<9x8xf32, #tpu.memory_space<smem>>
    %190 = vector.broadcast %189 : f32 to vector<16x16xf32>
    %191 = arith.addf %74, %190 : vector<16x16xf32>
    %c0_98 = arith.constant 0 : index
    %c3_99 = arith.constant 3 : index
    %192 = memref.load %arg9[%c0_98, %c3_99] : memref<9x8xf32, #tpu.memory_space<smem>>
    %193 = vector.broadcast %192 : f32 to vector<16x16xf32>
    %194 = arith.mulf %54, %193 : vector<16x16xf32>
    %195 = arith.addf %191, %194 : vector<16x16xf32>
    %c1_100 = arith.constant 1 : index
    %c3_101 = arith.constant 3 : index
    %196 = memref.load %arg9[%c1_100, %c3_101] : memref<9x8xf32, #tpu.memory_space<smem>>
    %197 = vector.broadcast %196 : f32 to vector<16x16xf32>
    %198 = arith.mulf %56, %197 : vector<16x16xf32>
    %199 = arith.addf %195, %198 : vector<16x16xf32>
    %c2_102 = arith.constant 2 : index
    %c3_103 = arith.constant 3 : index
    %200 = memref.load %arg9[%c2_102, %c3_103] : memref<9x8xf32, #tpu.memory_space<smem>>
    %201 = vector.broadcast %200 : f32 to vector<16x16xf32>
    %202 = arith.mulf %58, %201 : vector<16x16xf32>
    %203 = arith.addf %199, %202 : vector<16x16xf32>
    %c3_104 = arith.constant 3 : index
    %c3_105 = arith.constant 3 : index
    %204 = memref.load %arg9[%c3_104, %c3_105] : memref<9x8xf32, #tpu.memory_space<smem>>
    %205 = vector.broadcast %204 : f32 to vector<16x16xf32>
    %206 = arith.mulf %60, %205 : vector<16x16xf32>
    %207 = arith.addf %203, %206 : vector<16x16xf32>
    %c4_106 = arith.constant 4 : index
    %c3_107 = arith.constant 3 : index
    %208 = memref.load %arg9[%c4_106, %c3_107] : memref<9x8xf32, #tpu.memory_space<smem>>
    %209 = vector.broadcast %208 : f32 to vector<16x16xf32>
    %210 = arith.mulf %62, %209 : vector<16x16xf32>
    %211 = arith.addf %207, %210 : vector<16x16xf32>
    %c5_108 = arith.constant 5 : index
    %c3_109 = arith.constant 3 : index
    %212 = memref.load %arg9[%c5_108, %c3_109] : memref<9x8xf32, #tpu.memory_space<smem>>
    %213 = vector.broadcast %212 : f32 to vector<16x16xf32>
    %214 = arith.mulf %64, %213 : vector<16x16xf32>
    %215 = arith.addf %211, %214 : vector<16x16xf32>
    %c6_110 = arith.constant 6 : index
    %c3_111 = arith.constant 3 : index
    %216 = memref.load %arg9[%c6_110, %c3_111] : memref<9x8xf32, #tpu.memory_space<smem>>
    %217 = vector.broadcast %216 : f32 to vector<16x16xf32>
    %218 = arith.mulf %66, %217 : vector<16x16xf32>
    %219 = arith.addf %215, %218 : vector<16x16xf32>
    %c7_112 = arith.constant 7 : index
    %c3_113 = arith.constant 3 : index
    %220 = memref.load %arg9[%c7_112, %c3_113] : memref<9x8xf32, #tpu.memory_space<smem>>
    %221 = vector.broadcast %220 : f32 to vector<16x16xf32>
    %222 = arith.mulf %68, %221 : vector<16x16xf32>
    %223 = arith.addf %219, %222 : vector<16x16xf32>
    %c0_114 = arith.constant 0 : index
    %c3_115 = arith.constant 3 : index
    %c0_116 = arith.constant 0 : index
    %c0_117 = arith.constant 0 : index
    %224 = vector.load %arg11[%c0_114, %c3_115, %c0_116, %c0_117] : memref<1x8x16x16xf32, #tpu.memory_space<vmem>>, vector<1x1x16x16xf32>
    %225 = vector.shape_cast %224 : vector<1x1x16x16xf32> to vector<16x16xf32>
    %226 = vector.shape_cast %223 : vector<16x16xf32> to vector<1x1x16x16xf32>
    tpu.vector_store %arg11[%c0_114, %c3_115, %c0_116, %c0_117], %226 {strides = array<i32>} : memref<1x8x16x16xf32, #tpu.memory_space<vmem>>, vector<1x1x16x16xf32>,
    %c8_118 = arith.constant 8 : index
    %c4_119 = arith.constant 4 : index
    %227 = memref.load %arg9[%c8_118, %c4_119] : memref<9x8xf32, #tpu.memory_space<smem>>
    %228 = vector.broadcast %227 : f32 to vector<16x16xf32>
    %229 = arith.addf %74, %228 : vector<16x16xf32>
    %c0_120 = arith.constant 0 : index
    %c4_121 = arith.constant 4 : index
    %230 = memref.load %arg9[%c0_120, %c4_121] : memref<9x8xf32, #tpu.memory_space<smem>>
    %231 = vector.broadcast %230 : f32 to vector<16x16xf32>
    %232 = arith.mulf %54, %231 : vector<16x16xf32>
    %233 = arith.addf %229, %232 : vector<16x16xf32>
    %c1_122 = arith.constant 1 : index
    %c4_123 = arith.constant 4 : index
    %234 = memref.load %arg9[%c1_122, %c4_123] : memref<9x8xf32, #tpu.memory_space<smem>>
    %235 = vector.broadcast %234 : f32 to vector<16x16xf32>
    %236 = arith.mulf %56, %235 : vector<16x16xf32>
    %237 = arith.addf %233, %236 : vector<16x16xf32>
    %c2_124 = arith.constant 2 : index
    %c4_125 = arith.constant 4 : index
    %238 = memref.load %arg9[%c2_124, %c4_125] : memref<9x8xf32, #tpu.memory_space<smem>>
    %239 = vector.broadcast %238 : f32 to vector<16x16xf32>
    %240 = arith.mulf %58, %239 : vector<16x16xf32>
    %241 = arith.addf %237, %240 : vector<16x16xf32>
    %c3_126 = arith.constant 3 : index
    %c4_127 = arith.constant 4 : index
    %242 = memref.load %arg9[%c3_126, %c4_127] : memref<9x8xf32, #tpu.memory_space<smem>>
    %243 = vector.broadcast %242 : f32 to vector<16x16xf32>
    %244 = arith.mulf %60, %243 : vector<16x16xf32>
    %245 = arith.addf %241, %244 : vector<16x16xf32>
    %c4_128 = arith.constant 4 : index
    %c4_129 = arith.constant 4 : index
    %246 = memref.load %arg9[%c4_128, %c4_129] : memref<9x8xf32, #tpu.memory_space<smem>>
    %247 = vector.broadcast %246 : f32 to vector<16x16xf32>
    %248 = arith.mulf %62, %247 : vector<16x16xf32>
    %249 = arith.addf %245, %248 : vector<16x16xf32>
    %c5_130 = arith.constant 5 : index
    %c4_131 = arith.constant 4 : index
    %250 = memref.load %arg9[%c5_130, %c4_131] : memref<9x8xf32, #tpu.memory_space<smem>>
    %251 = vector.broadcast %250 : f32 to vector<16x16xf32>
    %252 = arith.mulf %64, %251 : vector<16x16xf32>
    %253 = arith.addf %249, %252 : vector<16x16xf32>
    %c6_132 = arith.constant 6 : index
    %c4_133 = arith.constant 4 : index
    %254 = memref.load %arg9[%c6_132, %c4_133] : memref<9x8xf32, #tpu.memory_space<smem>>
    %255 = vector.broadcast %254 : f32 to vector<16x16xf32>
    %256 = arith.mulf %66, %255 : vector<16x16xf32>
    %257 = arith.addf %253, %256 : vector<16x16xf32>
    %c7_134 = arith.constant 7 : index
    %c4_135 = arith.constant 4 : index
    %258 = memref.load %arg9[%c7_134, %c4_135] : memref<9x8xf32, #tpu.memory_space<smem>>
    %259 = vector.broadcast %258 : f32 to vector<16x16xf32>
    %260 = arith.mulf %68, %259 : vector<16x16xf32>
    %261 = arith.addf %257, %260 : vector<16x16xf32>
    %c0_136 = arith.constant 0 : index
    %c4_137 = arith.constant 4 : index
    %c0_138 = arith.constant 0 : index
    %c0_139 = arith.constant 0 : index
    %262 = vector.load %arg11[%c0_136, %c4_137, %c0_138, %c0_139] : memref<1x8x16x16xf32, #tpu.memory_space<vmem>>, vector<1x1x16x16xf32>
    %263 = vector.shape_cast %262 : vector<1x1x16x16xf32> to vector<16x16xf32>
    %264 = vector.shape_cast %261 : vector<16x16xf32> to vector<1x1x16x16xf32>
    tpu.vector_store %arg11[%c0_136, %c4_137, %c0_138, %c0_139], %264 {strides = array<i32>} : memref<1x8x16x16xf32, #tpu.memory_space<vmem>>, vector<1x1x16x16xf32>,
    %c8_140 = arith.constant 8 : index
    %c5_141 = arith.constant 5 : index
    %265 = memref.load %arg9[%c8_140, %c5_141] : memref<9x8xf32, #tpu.memory_space<smem>>
    %266 = vector.broadcast %265 : f32 to vector<16x16xf32>
    %267 = arith.addf %74, %266 : vector<16x16xf32>
    %c0_142 = arith.constant 0 : index
    %c5_143 = arith.constant 5 : index
    %268 = memref.load %arg9[%c0_142, %c5_143] : memref<9x8xf32, #tpu.memory_space<smem>>
    %269 = vector.broadcast %268 : f32 to vector<16x16xf32>
    %270 = arith.mulf %54, %269 : vector<16x16xf32>
    %271 = arith.addf %267, %270 : vector<16x16xf32>
    %c1_144 = arith.constant 1 : index
    %c5_145 = arith.constant 5 : index
    %272 = memref.load %arg9[%c1_144, %c5_145] : memref<9x8xf32, #tpu.memory_space<smem>>
    %273 = vector.broadcast %272 : f32 to vector<16x16xf32>
    %274 = arith.mulf %56, %273 : vector<16x16xf32>
    %275 = arith.addf %271, %274 : vector<16x16xf32>
    %c2_146 = arith.constant 2 : index
    %c5_147 = arith.constant 5 : index
    %276 = memref.load %arg9[%c2_146, %c5_147] : memref<9x8xf32, #tpu.memory_space<smem>>
    %277 = vector.broadcast %276 : f32 to vector<16x16xf32>
    %278 = arith.mulf %58, %277 : vector<16x16xf32>
    %279 = arith.addf %275, %278 : vector<16x16xf32>
    %c3_148 = arith.constant 3 : index
    %c5_149 = arith.constant 5 : index
    %280 = memref.load %arg9[%c3_148, %c5_149] : memref<9x8xf32, #tpu.memory_space<smem>>
    %281 = vector.broadcast %280 : f32 to vector<16x16xf32>
    %282 = arith.mulf %60, %281 : vector<16x16xf32>
    %283 = arith.addf %279, %282 : vector<16x16xf32>
    %c4_150 = arith.constant 4 : index
    %c5_151 = arith.constant 5 : index
    %284 = memref.load %arg9[%c4_150, %c5_151] : memref<9x8xf32, #tpu.memory_space<smem>>
    %285 = vector.broadcast %284 : f32 to vector<16x16xf32>
    %286 = arith.mulf %62, %285 : vector<16x16xf32>
    %287 = arith.addf %283, %286 : vector<16x16xf32>
    %c5_152 = arith.constant 5 : index
    %c5_153 = arith.constant 5 : index
    %288 = memref.load %arg9[%c5_152, %c5_153] : memref<9x8xf32, #tpu.memory_space<smem>>
    %289 = vector.broadcast %288 : f32 to vector<16x16xf32>
    %290 = arith.mulf %64, %289 : vector<16x16xf32>
    %291 = arith.addf %287, %290 : vector<16x16xf32>
    %c6_154 = arith.constant 6 : index
    %c5_155 = arith.constant 5 : index
    %292 = memref.load %arg9[%c6_154, %c5_155] : memref<9x8xf32, #tpu.memory_space<smem>>
    %293 = vector.broadcast %292 : f32 to vector<16x16xf32>
    %294 = arith.mulf %66, %293 : vector<16x16xf32>
    %295 = arith.addf %291, %294 : vector<16x16xf32>
    %c7_156 = arith.constant 7 : index
    %c5_157 = arith.constant 5 : index
    %296 = memref.load %arg9[%c7_156, %c5_157] : memref<9x8xf32, #tpu.memory_space<smem>>
    %297 = vector.broadcast %296 : f32 to vector<16x16xf32>
    %298 = arith.mulf %68, %297 : vector<16x16xf32>
    %299 = arith.addf %295, %298 : vector<16x16xf32>
    %c0_158 = arith.constant 0 : index
    %c5_159 = arith.constant 5 : index
    %c0_160 = arith.constant 0 : index
    %c0_161 = arith.constant 0 : index
    %300 = vector.load %arg11[%c0_158, %c5_159, %c0_160, %c0_161] : memref<1x8x16x16xf32, #tpu.memory_space<vmem>>, vector<1x1x16x16xf32>
    %301 = vector.shape_cast %300 : vector<1x1x16x16xf32> to vector<16x16xf32>
    %302 = vector.shape_cast %299 : vector<16x16xf32> to vector<1x1x16x16xf32>
    tpu.vector_store %arg11[%c0_158, %c5_159, %c0_160, %c0_161], %302 {strides = array<i32>} : memref<1x8x16x16xf32, #tpu.memory_space<vmem>>, vector<1x1x16x16xf32>,
    %c8_162 = arith.constant 8 : index
    %c6_163 = arith.constant 6 : index
    %303 = memref.load %arg9[%c8_162, %c6_163] : memref<9x8xf32, #tpu.memory_space<smem>>
    %304 = vector.broadcast %303 : f32 to vector<16x16xf32>
    %305 = arith.addf %74, %304 : vector<16x16xf32>
    %c0_164 = arith.constant 0 : index
    %c6_165 = arith.constant 6 : index
    %306 = memref.load %arg9[%c0_164, %c6_165] : memref<9x8xf32, #tpu.memory_space<smem>>
    %307 = vector.broadcast %306 : f32 to vector<16x16xf32>
    %308 = arith.mulf %54, %307 : vector<16x16xf32>
    %309 = arith.addf %305, %308 : vector<16x16xf32>
    %c1_166 = arith.constant 1 : index
    %c6_167 = arith.constant 6 : index
    %310 = memref.load %arg9[%c1_166, %c6_167] : memref<9x8xf32, #tpu.memory_space<smem>>
    %311 = vector.broadcast %310 : f32 to vector<16x16xf32>
    %312 = arith.mulf %56, %311 : vector<16x16xf32>
    %313 = arith.addf %309, %312 : vector<16x16xf32>
    %c2_168 = arith.constant 2 : index
    %c6_169 = arith.constant 6 : index
    %314 = memref.load %arg9[%c2_168, %c6_169] : memref<9x8xf32, #tpu.memory_space<smem>>
    %315 = vector.broadcast %314 : f32 to vector<16x16xf32>
    %316 = arith.mulf %58, %315 : vector<16x16xf32>
    %317 = arith.addf %313, %316 : vector<16x16xf32>
    %c3_170 = arith.constant 3 : index
    %c6_171 = arith.constant 6 : index
    %318 = memref.load %arg9[%c3_170, %c6_171] : memref<9x8xf32, #tpu.memory_space<smem>>
    %319 = vector.broadcast %318 : f32 to vector<16x16xf32>
    %320 = arith.mulf %60, %319 : vector<16x16xf32>
    %321 = arith.addf %317, %320 : vector<16x16xf32>
    %c4_172 = arith.constant 4 : index
    %c6_173 = arith.constant 6 : index
    %322 = memref.load %arg9[%c4_172, %c6_173] : memref<9x8xf32, #tpu.memory_space<smem>>
    %323 = vector.broadcast %322 : f32 to vector<16x16xf32>
    %324 = arith.mulf %62, %323 : vector<16x16xf32>
    %325 = arith.addf %321, %324 : vector<16x16xf32>
    %c5_174 = arith.constant 5 : index
    %c6_175 = arith.constant 6 : index
    %326 = memref.load %arg9[%c5_174, %c6_175] : memref<9x8xf32, #tpu.memory_space<smem>>
    %327 = vector.broadcast %326 : f32 to vector<16x16xf32>
    %328 = arith.mulf %64, %327 : vector<16x16xf32>
    %329 = arith.addf %325, %328 : vector<16x16xf32>
    %c6_176 = arith.constant 6 : index
    %c6_177 = arith.constant 6 : index
    %330 = memref.load %arg9[%c6_176, %c6_177] : memref<9x8xf32, #tpu.memory_space<smem>>
    %331 = vector.broadcast %330 : f32 to vector<16x16xf32>
    %332 = arith.mulf %66, %331 : vector<16x16xf32>
    %333 = arith.addf %329, %332 : vector<16x16xf32>
    %c7_178 = arith.constant 7 : index
    %c6_179 = arith.constant 6 : index
    %334 = memref.load %arg9[%c7_178, %c6_179] : memref<9x8xf32, #tpu.memory_space<smem>>
    %335 = vector.broadcast %334 : f32 to vector<16x16xf32>
    %336 = arith.mulf %68, %335 : vector<16x16xf32>
    %337 = arith.addf %333, %336 : vector<16x16xf32>
    %c0_180 = arith.constant 0 : index
    %c6_181 = arith.constant 6 : index
    %c0_182 = arith.constant 0 : index
    %c0_183 = arith.constant 0 : index
    %338 = vector.load %arg11[%c0_180, %c6_181, %c0_182, %c0_183] : memref<1x8x16x16xf32, #tpu.memory_space<vmem>>, vector<1x1x16x16xf32>
    %339 = vector.shape_cast %338 : vector<1x1x16x16xf32> to vector<16x16xf32>
    %340 = vector.shape_cast %337 : vector<16x16xf32> to vector<1x1x16x16xf32>
    tpu.vector_store %arg11[%c0_180, %c6_181, %c0_182, %c0_183], %340 {strides = array<i32>} : memref<1x8x16x16xf32, #tpu.memory_space<vmem>>, vector<1x1x16x16xf32>,
    %c8_184 = arith.constant 8 : index
    %c7_185 = arith.constant 7 : index
    %341 = memref.load %arg9[%c8_184, %c7_185] : memref<9x8xf32, #tpu.memory_space<smem>>
    %342 = vector.broadcast %341 : f32 to vector<16x16xf32>
    %343 = arith.addf %74, %342 : vector<16x16xf32>
    %c0_186 = arith.constant 0 : index
    %c7_187 = arith.constant 7 : index
    %344 = memref.load %arg9[%c0_186, %c7_187] : memref<9x8xf32, #tpu.memory_space<smem>>
    %345 = vector.broadcast %344 : f32 to vector<16x16xf32>
    %346 = arith.mulf %54, %345 : vector<16x16xf32>
    %347 = arith.addf %343, %346 : vector<16x16xf32>
    %c1_188 = arith.constant 1 : index
    %c7_189 = arith.constant 7 : index
    %348 = memref.load %arg9[%c1_188, %c7_189] : memref<9x8xf32, #tpu.memory_space<smem>>
    %349 = vector.broadcast %348 : f32 to vector<16x16xf32>
    %350 = arith.mulf %56, %349 : vector<16x16xf32>
    %351 = arith.addf %347, %350 : vector<16x16xf32>
    %c2_190 = arith.constant 2 : index
    %c7_191 = arith.constant 7 : index
    %352 = memref.load %arg9[%c2_190, %c7_191] : memref<9x8xf32, #tpu.memory_space<smem>>
    %353 = vector.broadcast %352 : f32 to vector<16x16xf32>
    %354 = arith.mulf %58, %353 : vector<16x16xf32>
    %355 = arith.addf %351, %354 : vector<16x16xf32>
    %c3_192 = arith.constant 3 : index
    %c7_193 = arith.constant 7 : index
    %356 = memref.load %arg9[%c3_192, %c7_193] : memref<9x8xf32, #tpu.memory_space<smem>>
    %357 = vector.broadcast %356 : f32 to vector<16x16xf32>
    %358 = arith.mulf %60, %357 : vector<16x16xf32>
    %359 = arith.addf %355, %358 : vector<16x16xf32>
    %c4_194 = arith.constant 4 : index
    %c7_195 = arith.constant 7 : index
    %360 = memref.load %arg9[%c4_194, %c7_195] : memref<9x8xf32, #tpu.memory_space<smem>>
    %361 = vector.broadcast %360 : f32 to vector<16x16xf32>
    %362 = arith.mulf %62, %361 : vector<16x16xf32>
    %363 = arith.addf %359, %362 : vector<16x16xf32>
    %c5_196 = arith.constant 5 : index
    %c7_197 = arith.constant 7 : index
    %364 = memref.load %arg9[%c5_196, %c7_197] : memref<9x8xf32, #tpu.memory_space<smem>>
    %365 = vector.broadcast %364 : f32 to vector<16x16xf32>
    %366 = arith.mulf %64, %365 : vector<16x16xf32>
    %367 = arith.addf %363, %366 : vector<16x16xf32>
    %c6_198 = arith.constant 6 : index
    %c7_199 = arith.constant 7 : index
    %368 = memref.load %arg9[%c6_198, %c7_199] : memref<9x8xf32, #tpu.memory_space<smem>>
    %369 = vector.broadcast %368 : f32 to vector<16x16xf32>
    %370 = arith.mulf %66, %369 : vector<16x16xf32>
    %371 = arith.addf %367, %370 : vector<16x16xf32>
    %c7_200 = arith.constant 7 : index
    %c7_201 = arith.constant 7 : index
    %372 = memref.load %arg9[%c7_200, %c7_201] : memref<9x8xf32, #tpu.memory_space<smem>>
    %373 = vector.broadcast %372 : f32 to vector<16x16xf32>
    %374 = arith.mulf %68, %373 : vector<16x16xf32>
    %375 = arith.addf %371, %374 : vector<16x16xf32>
    %c0_202 = arith.constant 0 : index
    %c7_203 = arith.constant 7 : index
    %c0_204 = arith.constant 0 : index
    %c0_205 = arith.constant 0 : index
    %376 = vector.load %arg11[%c0_202, %c7_203, %c0_204, %c0_205] : memref<1x8x16x16xf32, #tpu.memory_space<vmem>>, vector<1x1x16x16xf32>
    %377 = vector.shape_cast %376 : vector<1x1x16x16xf32> to vector<16x16xf32>
    %378 = vector.shape_cast %375 : vector<16x16xf32> to vector<1x1x16x16xf32>
    tpu.vector_store %arg11[%c0_202, %c7_203, %c0_204, %c0_205], %378 {strides = array<i32>} : memref<1x8x16x16xf32, #tpu.memory_space<vmem>>, vector<1x1x16x16xf32>,
    %c0_206 = arith.constant 0 : index
    %c0_207 = arith.constant 0 : index
    %c0_208 = arith.constant 0 : index
    %379 = vector.load %arg1[%c0_206, %c0_207, %c0_208] : memref<1x16x32xf32, #tpu.memory_space<vmem>>, vector<1x16x32xf32>
    %380 = vector.shape_cast %379 : vector<1x16x32xf32> to vector<16x32xf32>
    %c0_209 = arith.constant 0 : index
    %c0_210 = arith.constant 0 : index
    %c0_211 = arith.constant 0 : index
    %381 = vector.load %arg8[%c0_209, %c0_210, %c0_211] : memref<2x8x128xf32, #tpu.memory_space<vmem>>, vector<1x8x128xf32>
    %382 = vector.shape_cast %381 : vector<1x8x128xf32> to vector<8x128xf32>
    %383 = vector.extract_strided_slice %382 {offsets = [0, 0], sizes = [1, 32], strides = [1, 1]} : vector<8x128xf32> to vector<1x32xf32>
    %384 = vector.extract_strided_slice %382 {offsets = [1, 0], sizes = [1, 32], strides = [1, 1]} : vector<8x128xf32> to vector<1x32xf32>
    %385 = vector.extract_strided_slice %382 {offsets = [2, 0], sizes = [1, 128], strides = [1, 1]} : vector<8x128xf32> to vector<1x128xf32>
    %386 = vector.extract_strided_slice %382 {offsets = [3, 0], sizes = [1, 32], strides = [1, 1]} : vector<8x128xf32> to vector<1x32xf32>
    %387 = vector.extract_strided_slice %382 {offsets = [4, 0], sizes = [1, 32], strides = [1, 1]} : vector<8x128xf32> to vector<1x32xf32>
    %cst_212 = arith.constant dense<0.000000e+00> : vector<16xf32>
    %388 = vector.multi_reduction <add>, %380, %cst_212 [1] : vector<16x32xf32> to vector<16xf32>
    %389 = vector.shape_cast %388 : vector<16xf32> to vector<16x1xf32>
    %cst_213 = arith.constant 3.200000e+01 : f32
    %390 = vector.broadcast %cst_213 : f32 to vector<16x1xf32>
    %391 = arith.divf %389, %390 : vector<16x1xf32>
    %392 = vector.broadcast %391 : vector<16x1xf32> to vector<16x32xf32>
    %393 = arith.subf %380, %392 : vector<16x32xf32>
    %394 = arith.mulf %393, %393 : vector<16x32xf32>
    %cst_214 = arith.constant dense<0.000000e+00> : vector<16xf32>
    %395 = vector.multi_reduction <add>, %394, %cst_214 [1] : vector<16x32xf32> to vector<16xf32>
    %396 = vector.shape_cast %395 : vector<16xf32> to vector<16x1xf32>
    %cst_215 = arith.constant 3.200000e+01 : f32
    %397 = vector.broadcast %cst_215 : f32 to vector<16x1xf32>
    %398 = arith.divf %396, %397 : vector<16x1xf32>
    %399 = vector.broadcast %391 : vector<16x1xf32> to vector<16x32xf32>
    %400 = arith.subf %380, %399 : vector<16x32xf32>
    %cst_216 = arith.constant 9.99999974E-6 : f32
    %401 = vector.broadcast %cst_216 : f32 to vector<16x1xf32>
    %402 = arith.addf %398, %401 : vector<16x1xf32>
    %403 = math.rsqrt %402 : vector<16x1xf32>
    %404 = vector.broadcast %403 : vector<16x1xf32> to vector<16x32xf32>
    %405 = arith.mulf %400, %404 : vector<16x32xf32>
    %406 = vector.broadcast %383 : vector<1x32xf32> to vector<16x32xf32>
    %407 = arith.mulf %405, %406 : vector<16x32xf32>
    %408 = vector.broadcast %384 : vector<1x32xf32> to vector<16x32xf32>
    %409 = arith.addf %407, %408 : vector<16x32xf32>
    %410 = arith.truncf %409 : vector<16x32xf32> to vector<16x32xbf16>
    %c0_217 = arith.constant 0 : index
    %c0_218 = arith.constant 0 : index
    %c0_219 = arith.constant 0 : index
    %411 = vector.load %arg4[%c0_217, %c0_218, %c0_219] : memref<2x32x128xbf16, #tpu.memory_space<vmem>>, vector<1x32x128xbf16>
    %412 = vector.shape_cast %411 : vector<1x32x128xbf16> to vector<32x128xbf16>
    %cst_220 = arith.constant dense<0.000000e+00> : vector<16x128xf32>
    %413 = tpu.matmul %410, %412, %cst_220 {dimension_numbers = #tpu.dot_dimension_numbers<[1], [0], [0], [1], [0, 0, 1, 1], [], []>} : vector<16x32xbf16>, vector<32x128xbf16>, vector<16x128xf32> -> vector<16x128xf32>
    %414 = vector.broadcast %385 : vector<1x128xf32> to vector<16x128xf32>
    %415 = arith.addf %413, %414 : vector<16x128xf32>
    %416 = vector.extract_strided_slice %415 {offsets = [0, 96], sizes = [16, 32], strides = [1, 1]} : vector<16x128xf32> to vector<16x32xf32>
    %417 = arith.negf %416 : vector<16x32xf32>
    %418 = math.exp %417 : vector<16x32xf32>
    %cst_221 = arith.constant 1.000000e+00 : f32
    %419 = vector.broadcast %cst_221 : f32 to vector<16x32xf32>
    %420 = arith.addf %419, %418 : vector<16x32xf32>
    %421 = arith.divf %419, %420 : vector<16x32xf32>
    %c0_222 = arith.constant 0 : index
    %c0_223 = arith.constant 0 : index
    %c0_224 = arith.constant 0 : index
    %c0_225 = arith.constant 0 : index
    %422 = vector.load %arg5[%c0_222, %c0_223, %c0_224, %c0_225] : memref<2x4x8x32xbf16, #tpu.memory_space<vmem>>, vector<1x4x8x32xbf16>
    %423 = vector.shape_cast %422 : vector<1x4x8x32xbf16> to vector<4x8x32xbf16>
    %cst_226 = arith.constant 0.000000e+00 : f32
    %424 = vector.broadcast %cst_226 : f32 to vector<16x32xf32>
    %425 = vector.extract_strided_slice %415 {offsets = [0, 0], sizes = [16, 8], strides = [1, 1]} : vector<16x128xf32> to vector<16x8xf32>
    %426 = arith.truncf %425 : vector<16x8xf32> to vector<16x8xbf16>
    %427 = vector.extract_strided_slice %415 {offsets = [0, 32], sizes = [16, 8], strides = [1, 1]} : vector<16x128xf32> to vector<16x8xf32>
    %428 = arith.truncf %427 : vector<16x8xf32> to vector<16x8xbf16>
    %429 = vector.extract_strided_slice %415 {offsets = [0, 64], sizes = [16, 8], strides = [1, 1]} : vector<16x128xf32> to vector<16x8xf32>
    %430 = arith.truncf %429 : vector<16x8xf32> to vector<16x8xbf16>
    %cst_227 = arith.constant dense<0.000000e+00> : vector<16x16xf32>
    %431 = tpu.matmul %426, %428, %cst_227 {dimension_numbers = #tpu.dot_dimension_numbers<[1], [1], [0], [0], [0, 0, 1, 0], [], []>} : vector<16x8xbf16>, vector<16x8xbf16>, vector<16x16xf32> -> vector<16x16xf32>
    %c0_228 = arith.constant 0 : index
    %c0_229 = arith.constant 0 : index
    %c0_230 = arith.constant 0 : index
    %c0_231 = arith.constant 0 : index
    %432 = vector.load %arg11[%c0_228, %c0_229, %c0_230, %c0_231] : memref<1x8x16x16xf32, #tpu.memory_space<vmem>>, vector<1x1x16x16xf32>
    %433 = vector.shape_cast %432 : vector<1x1x16x16xf32> to vector<16x16xf32>
    %434 = arith.addf %431, %433 : vector<16x16xf32>
    %cst_232 = arith.constant dense<0xFF800000> : vector<16xf32>
    %435 = vector.multi_reduction <maximumf>, %434, %cst_232 [1] : vector<16x16xf32> to vector<16xf32>
    %436 = vector.shape_cast %435 : vector<16xf32> to vector<16x1xf32>
    %437 = vector.broadcast %436 : vector<16x1xf32> to vector<16x16xf32>
    %438 = arith.subf %434, %437 : vector<16x16xf32>
    %439 = math.exp %438 : vector<16x16xf32>
    %cst_233 = arith.constant dense<0.000000e+00> : vector<16xf32>
    %440 = vector.multi_reduction <add>, %439, %cst_233 [1] : vector<16x16xf32> to vector<16xf32>
    %441 = vector.shape_cast %440 : vector<16xf32> to vector<16x1xf32>
    %442 = tpu.reciprocal %441 {approx = true} : vector<16x1xf32> -> vector<16x1xf32>
    %443 = vector.broadcast %442 : vector<16x1xf32> to vector<16x16xf32>
    %444 = arith.mulf %439, %443 : vector<16x16xf32>
    %445 = arith.truncf %444 : vector<16x16xf32> to vector<16x16xbf16>
    %cst_234 = arith.constant dense<0.000000e+00> : vector<16x8xf32>
    %446 = tpu.matmul %445, %430, %cst_234 {dimension_numbers = #tpu.dot_dimension_numbers<[1], [0], [0], [1], [0, 0, 1, 1], [], []>} : vector<16x16xbf16>, vector<16x8xbf16>, vector<16x8xf32> -> vector<16x8xf32>
    %447 = vector.extract_strided_slice %421 {offsets = [0, 0], sizes = [16, 8], strides = [1, 1]} : vector<16x32xf32> to vector<16x8xf32>
    %448 = arith.mulf %446, %447 : vector<16x8xf32>
    %449 = arith.truncf %448 : vector<16x8xf32> to vector<16x8xbf16>
    %450 = vector.extract_strided_slice %423 {offsets = [0, 0, 0], sizes = [1, 8, 32], strides = [1, 1, 1]} : vector<4x8x32xbf16> to vector<1x8x32xbf16>
    %451 = vector.shape_cast %450 : vector<1x8x32xbf16> to vector<8x32xbf16>
    %cst_235 = arith.constant dense<0.000000e+00> : vector<16x32xf32>
    %452 = tpu.matmul %449, %451, %cst_235 {dimension_numbers = #tpu.dot_dimension_numbers<[1], [0], [0], [1], [0, 0, 1, 1], [], []>} : vector<16x8xbf16>, vector<8x32xbf16>, vector<16x32xf32> -> vector<16x32xf32>
    %453 = arith.addf %424, %452 : vector<16x32xf32>
    %454 = vector.extract_strided_slice %415 {offsets = [0, 8], sizes = [16, 8], strides = [1, 1]} : vector<16x128xf32> to vector<16x8xf32>
    %455 = arith.truncf %454 : vector<16x8xf32> to vector<16x8xbf16>
    %456 = vector.extract_strided_slice %415 {offsets = [0, 40], sizes = [16, 8], strides = [1, 1]} : vector<16x128xf32> to vector<16x8xf32>
    %457 = arith.truncf %456 : vector<16x8xf32> to vector<16x8xbf16>
    %458 = vector.extract_strided_slice %415 {offsets = [0, 72], sizes = [16, 8], strides = [1, 1]} : vector<16x128xf32> to vector<16x8xf32>
    %459 = arith.truncf %458 : vector<16x8xf32> to vector<16x8xbf16>
    %cst_236 = arith.constant dense<0.000000e+00> : vector<16x16xf32>
    %460 = tpu.matmul %455, %457, %cst_236 {dimension_numbers = #tpu.dot_dimension_numbers<[1], [1], [0], [0], [0, 0, 1, 0], [], []>} : vector<16x8xbf16>, vector<16x8xbf16>, vector<16x16xf32> -> vector<16x16xf32>
    %c0_237 = arith.constant 0 : index
    %c1_238 = arith.constant 1 : index
    %c0_239 = arith.constant 0 : index
    %c0_240 = arith.constant 0 : index
    %461 = vector.load %arg11[%c0_237, %c1_238, %c0_239, %c0_240] : memref<1x8x16x16xf32, #tpu.memory_space<vmem>>, vector<1x1x16x16xf32>
    %462 = vector.shape_cast %461 : vector<1x1x16x16xf32> to vector<16x16xf32>
    %463 = arith.addf %460, %462 : vector<16x16xf32>
    %cst_241 = arith.constant dense<0xFF800000> : vector<16xf32>
    %464 = vector.multi_reduction <maximumf>, %463, %cst_241 [1] : vector<16x16xf32> to vector<16xf32>
    %465 = vector.shape_cast %464 : vector<16xf32> to vector<16x1xf32>
    %466 = vector.broadcast %465 : vector<16x1xf32> to vector<16x16xf32>
    %467 = arith.subf %463, %466 : vector<16x16xf32>
    %468 = math.exp %467 : vector<16x16xf32>
    %cst_242 = arith.constant dense<0.000000e+00> : vector<16xf32>
    %469 = vector.multi_reduction <add>, %468, %cst_242 [1] : vector<16x16xf32> to vector<16xf32>
    %470 = vector.shape_cast %469 : vector<16xf32> to vector<16x1xf32>
    %471 = tpu.reciprocal %470 {approx = true} : vector<16x1xf32> -> vector<16x1xf32>
    %472 = vector.broadcast %471 : vector<16x1xf32> to vector<16x16xf32>
    %473 = arith.mulf %468, %472 : vector<16x16xf32>
    %474 = arith.truncf %473 : vector<16x16xf32> to vector<16x16xbf16>
    %cst_243 = arith.constant dense<0.000000e+00> : vector<16x8xf32>
    %475 = tpu.matmul %474, %459, %cst_243 {dimension_numbers = #tpu.dot_dimension_numbers<[1], [0], [0], [1], [0, 0, 1, 1], [], []>} : vector<16x16xbf16>, vector<16x8xbf16>, vector<16x8xf32> -> vector<16x8xf32>
    %476 = vector.extract_strided_slice %421 {offsets = [0, 8], sizes = [16, 8], strides = [1, 1]} : vector<16x32xf32> to vector<16x8xf32>
    %477 = arith.mulf %475, %476 : vector<16x8xf32>
    %478 = arith.truncf %477 : vector<16x8xf32> to vector<16x8xbf16>
    %479 = vector.extract_strided_slice %423 {offsets = [1, 0, 0], sizes = [1, 8, 32], strides = [1, 1, 1]} : vector<4x8x32xbf16> to vector<1x8x32xbf16>
    %480 = vector.shape_cast %479 : vector<1x8x32xbf16> to vector<8x32xbf16>
    %cst_244 = arith.constant dense<0.000000e+00> : vector<16x32xf32>
    %481 = tpu.matmul %478, %480, %cst_244 {dimension_numbers = #tpu.dot_dimension_numbers<[1], [0], [0], [1], [0, 0, 1, 1], [], []>} : vector<16x8xbf16>, vector<8x32xbf16>, vector<16x32xf32> -> vector<16x32xf32>
    %482 = arith.addf %453, %481 : vector<16x32xf32>
    %483 = vector.extract_strided_slice %415 {offsets = [0, 16], sizes = [16, 8], strides = [1, 1]} : vector<16x128xf32> to vector<16x8xf32>
    %484 = arith.truncf %483 : vector<16x8xf32> to vector<16x8xbf16>
    %485 = vector.extract_strided_slice %415 {offsets = [0, 48], sizes = [16, 8], strides = [1, 1]} : vector<16x128xf32> to vector<16x8xf32>
    %486 = arith.truncf %485 : vector<16x8xf32> to vector<16x8xbf16>
    %487 = vector.extract_strided_slice %415 {offsets = [0, 80], sizes = [16, 8], strides = [1, 1]} : vector<16x128xf32> to vector<16x8xf32>
    %488 = arith.truncf %487 : vector<16x8xf32> to vector<16x8xbf16>
    %cst_245 = arith.constant dense<0.000000e+00> : vector<16x16xf32>
    %489 = tpu.matmul %484, %486, %cst_245 {dimension_numbers = #tpu.dot_dimension_numbers<[1], [1], [0], [0], [0, 0, 1, 0], [], []>} : vector<16x8xbf16>, vector<16x8xbf16>, vector<16x16xf32> -> vector<16x16xf32>
    %c0_246 = arith.constant 0 : index
    %c2_247 = arith.constant 2 : index
    %c0_248 = arith.constant 0 : index
    %c0_249 = arith.constant 0 : index
    %490 = vector.load %arg11[%c0_246, %c2_247, %c0_248, %c0_249] : memref<1x8x16x16xf32, #tpu.memory_space<vmem>>, vector<1x1x16x16xf32>
    %491 = vector.shape_cast %490 : vector<1x1x16x16xf32> to vector<16x16xf32>
    %492 = arith.addf %489, %491 : vector<16x16xf32>
    %cst_250 = arith.constant dense<0xFF800000> : vector<16xf32>
    %493 = vector.multi_reduction <maximumf>, %492, %cst_250 [1] : vector<16x16xf32> to vector<16xf32>
    %494 = vector.shape_cast %493 : vector<16xf32> to vector<16x1xf32>
    %495 = vector.broadcast %494 : vector<16x1xf32> to vector<16x16xf32>
    %496 = arith.subf %492, %495 : vector<16x16xf32>
    %497 = math.exp %496 : vector<16x16xf32>
    %cst_251 = arith.constant dense<0.000000e+00> : vector<16xf32>
    %498 = vector.multi_reduction <add>, %497, %cst_251 [1] : vector<16x16xf32> to vector<16xf32>
    %499 = vector.shape_cast %498 : vector<16xf32> to vector<16x1xf32>
    %500 = tpu.reciprocal %499 {approx = true} : vector<16x1xf32> -> vector<16x1xf32>
    %501 = vector.broadcast %500 : vector<16x1xf32> to vector<16x16xf32>
    %502 = arith.mulf %497, %501 : vector<16x16xf32>
    %503 = arith.truncf %502 : vector<16x16xf32> to vector<16x16xbf16>
    %cst_252 = arith.constant dense<0.000000e+00> : vector<16x8xf32>
    %504 = tpu.matmul %503, %488, %cst_252 {dimension_numbers = #tpu.dot_dimension_numbers<[1], [0], [0], [1], [0, 0, 1, 1], [], []>} : vector<16x16xbf16>, vector<16x8xbf16>, vector<16x8xf32> -> vector<16x8xf32>
    %505 = vector.extract_strided_slice %421 {offsets = [0, 16], sizes = [16, 8], strides = [1, 1]} : vector<16x32xf32> to vector<16x8xf32>
    %506 = arith.mulf %504, %505 : vector<16x8xf32>
    %507 = arith.truncf %506 : vector<16x8xf32> to vector<16x8xbf16>
    %508 = vector.extract_strided_slice %423 {offsets = [2, 0, 0], sizes = [1, 8, 32], strides = [1, 1, 1]} : vector<4x8x32xbf16> to vector<1x8x32xbf16>
    %509 = vector.shape_cast %508 : vector<1x8x32xbf16> to vector<8x32xbf16>
    %cst_253 = arith.constant dense<0.000000e+00> : vector<16x32xf32>
    %510 = tpu.matmul %507, %509, %cst_253 {dimension_numbers = #tpu.dot_dimension_numbers<[1], [0], [0], [1], [0, 0, 1, 1], [], []>} : vector<16x8xbf16>, vector<8x32xbf16>, vector<16x32xf32> -> vector<16x32xf32>
    %511 = arith.addf %482, %510 : vector<16x32xf32>
    %512 = vector.extract_strided_slice %415 {offsets = [0, 24], sizes = [16, 8], strides = [1, 1]} : vector<16x128xf32> to vector<16x8xf32>
    %513 = arith.truncf %512 : vector<16x8xf32> to vector<16x8xbf16>
    %514 = vector.extract_strided_slice %415 {offsets = [0, 56], sizes = [16, 8], strides = [1, 1]} : vector<16x128xf32> to vector<16x8xf32>
    %515 = arith.truncf %514 : vector<16x8xf32> to vector<16x8xbf16>
    %516 = vector.extract_strided_slice %415 {offsets = [0, 88], sizes = [16, 8], strides = [1, 1]} : vector<16x128xf32> to vector<16x8xf32>
    %517 = arith.truncf %516 : vector<16x8xf32> to vector<16x8xbf16>
    %cst_254 = arith.constant dense<0.000000e+00> : vector<16x16xf32>
    %518 = tpu.matmul %513, %515, %cst_254 {dimension_numbers = #tpu.dot_dimension_numbers<[1], [1], [0], [0], [0, 0, 1, 0], [], []>} : vector<16x8xbf16>, vector<16x8xbf16>, vector<16x16xf32> -> vector<16x16xf32>
    %c0_255 = arith.constant 0 : index
    %c3_256 = arith.constant 3 : index
    %c0_257 = arith.constant 0 : index
    %c0_258 = arith.constant 0 : index
    %519 = vector.load %arg11[%c0_255, %c3_256, %c0_257, %c0_258] : memref<1x8x16x16xf32, #tpu.memory_space<vmem>>, vector<1x1x16x16xf32>
    %520 = vector.shape_cast %519 : vector<1x1x16x16xf32> to vector<16x16xf32>
    %521 = arith.addf %518, %520 : vector<16x16xf32>
    %cst_259 = arith.constant dense<0xFF800000> : vector<16xf32>
    %522 = vector.multi_reduction <maximumf>, %521, %cst_259 [1] : vector<16x16xf32> to vector<16xf32>
    %523 = vector.shape_cast %522 : vector<16xf32> to vector<16x1xf32>
    %524 = vector.broadcast %523 : vector<16x1xf32> to vector<16x16xf32>
    %525 = arith.subf %521, %524 : vector<16x16xf32>
    %526 = math.exp %525 : vector<16x16xf32>
    %cst_260 = arith.constant dense<0.000000e+00> : vector<16xf32>
    %527 = vector.multi_reduction <add>, %526, %cst_260 [1] : vector<16x16xf32> to vector<16xf32>
    %528 = vector.shape_cast %527 : vector<16xf32> to vector<16x1xf32>
    %529 = tpu.reciprocal %528 {approx = true} : vector<16x1xf32> -> vector<16x1xf32>
    %530 = vector.broadcast %529 : vector<16x1xf32> to vector<16x16xf32>
    %531 = arith.mulf %526, %530 : vector<16x16xf32>
    %532 = arith.truncf %531 : vector<16x16xf32> to vector<16x16xbf16>
    %cst_261 = arith.constant dense<0.000000e+00> : vector<16x8xf32>
    %533 = tpu.matmul %532, %517, %cst_261 {dimension_numbers = #tpu.dot_dimension_numbers<[1], [0], [0], [1], [0, 0, 1, 1], [], []>} : vector<16x16xbf16>, vector<16x8xbf16>, vector<16x8xf32> -> vector<16x8xf32>
    %534 = vector.extract_strided_slice %421 {offsets = [0, 24], sizes = [16, 8], strides = [1, 1]} : vector<16x32xf32> to vector<16x8xf32>
    %535 = arith.mulf %533, %534 : vector<16x8xf32>
    %536 = arith.truncf %535 : vector<16x8xf32> to vector<16x8xbf16>
    %537 = vector.extract_strided_slice %423 {offsets = [3, 0, 0], sizes = [1, 8, 32], strides = [1, 1, 1]} : vector<4x8x32xbf16> to vector<1x8x32xbf16>
    %538 = vector.shape_cast %537 : vector<1x8x32xbf16> to vector<8x32xbf16>
    %cst_262 = arith.constant dense<0.000000e+00> : vector<16x32xf32>
    %539 = tpu.matmul %536, %538, %cst_262 {dimension_numbers = #tpu.dot_dimension_numbers<[1], [0], [0], [1], [0, 0, 1, 1], [], []>} : vector<16x8xbf16>, vector<8x32xbf16>, vector<16x32xf32> -> vector<16x32xf32>
    %540 = arith.addf %511, %539 : vector<16x32xf32>
    %541 = arith.addf %380, %540 : vector<16x32xf32>
    %cst_263 = arith.constant dense<0.000000e+00> : vector<16xf32>
    %542 = vector.multi_reduction <add>, %541, %cst_263 [1] : vector<16x32xf32> to vector<16xf32>
    %543 = vector.shape_cast %542 : vector<16xf32> to vector<16x1xf32>
    %cst_264 = arith.constant 3.200000e+01 : f32
    %544 = vector.broadcast %cst_264 : f32 to vector<16x1xf32>
    %545 = arith.divf %543, %544 : vector<16x1xf32>
    %546 = vector.broadcast %545 : vector<16x1xf32> to vector<16x32xf32>
    %547 = arith.subf %541, %546 : vector<16x32xf32>
    %548 = arith.mulf %547, %547 : vector<16x32xf32>
    %cst_265 = arith.constant dense<0.000000e+00> : vector<16xf32>
    %549 = vector.multi_reduction <add>, %548, %cst_265 [1] : vector<16x32xf32> to vector<16xf32>
    %550 = vector.shape_cast %549 : vector<16xf32> to vector<16x1xf32>
    %cst_266 = arith.constant 3.200000e+01 : f32
    %551 = vector.broadcast %cst_266 : f32 to vector<16x1xf32>
    %552 = arith.divf %550, %551 : vector<16x1xf32>
    %553 = vector.broadcast %545 : vector<16x1xf32> to vector<16x32xf32>
    %554 = arith.subf %541, %553 : vector<16x32xf32>
    %cst_267 = arith.constant 9.99999974E-6 : f32
    %555 = vector.broadcast %cst_267 : f32 to vector<16x1xf32>
    %556 = arith.addf %552, %555 : vector<16x1xf32>
    %557 = math.rsqrt %556 : vector<16x1xf32>
    %558 = vector.broadcast %557 : vector<16x1xf32> to vector<16x32xf32>
    %559 = arith.mulf %554, %558 : vector<16x32xf32>
    %560 = vector.broadcast %386 : vector<1x32xf32> to vector<16x32xf32>
    %561 = arith.mulf %559, %560 : vector<16x32xf32>
    %562 = vector.broadcast %387 : vector<1x32xf32> to vector<16x32xf32>
    %563 = arith.addf %561, %562 : vector<16x32xf32>
    %564 = arith.truncf %563 : vector<16x32xf32> to vector<16x32xbf16>
    %c0_268 = arith.constant 0 : index
    %c0_269 = arith.constant 0 : index
    %c0_270 = arith.constant 0 : index
    %565 = vector.load %arg6[%c0_268, %c0_269, %c0_270] : memref<2x32x256xbf16, #tpu.memory_space<vmem>>, vector<1x32x256xbf16>
    %566 = vector.shape_cast %565 : vector<1x32x256xbf16> to vector<32x256xbf16>
    %cst_271 = arith.constant dense<0.000000e+00> : vector<16x256xf32>
    %567 = tpu.matmul %564, %566, %cst_271 {dimension_numbers = #tpu.dot_dimension_numbers<[1], [0], [0], [1], [0, 0, 1, 1], [], []>} : vector<16x32xbf16>, vector<32x256xbf16>, vector<16x256xf32> -> vector<16x256xf32>
    %568 = vector.extract_strided_slice %567 {offsets = [0, 0], sizes = [16, 128], strides = [1, 1]} : vector<16x256xf32> to vector<16x128xf32>
    %569 = arith.negf %568 : vector<16x128xf32>
    %570 = math.exp %569 : vector<16x128xf32>
    %cst_272 = arith.constant 1.000000e+00 : f32
    %571 = vector.broadcast %cst_272 : f32 to vector<16x128xf32>
    %572 = arith.addf %571, %570 : vector<16x128xf32>
    %573 = arith.divf %571, %572 : vector<16x128xf32>
    %574 = arith.mulf %568, %573 : vector<16x128xf32>
    %575 = vector.extract_strided_slice %567 {offsets = [0, 128], sizes = [16, 128], strides = [1, 1]} : vector<16x256xf32> to vector<16x128xf32>
    %576 = arith.mulf %574, %575 : vector<16x128xf32>
    %577 = arith.truncf %576 : vector<16x128xf32> to vector<16x128xbf16>
    %c0_273 = arith.constant 0 : index
    %c0_274 = arith.constant 0 : index
    %c0_275 = arith.constant 0 : index
    %578 = vector.load %arg7[%c0_273, %c0_274, %c0_275] : memref<2x128x32xbf16, #tpu.memory_space<vmem>>, vector<1x128x32xbf16>
    %579 = vector.shape_cast %578 : vector<1x128x32xbf16> to vector<128x32xbf16>
    %cst_276 = arith.constant dense<0.000000e+00> : vector<16x32xf32>
    %580 = tpu.matmul %577, %579, %cst_276 {dimension_numbers = #tpu.dot_dimension_numbers<[1], [0], [0], [1], [0, 0, 1, 1], [], []>} : vector<16x128xbf16>, vector<128x32xbf16>, vector<16x32xf32> -> vector<16x32xf32>
    %581 = arith.addf %541, %580 : vector<16x32xf32>
    %c1_277 = arith.constant 1 : index
    %c0_278 = arith.constant 0 : index
    %c0_279 = arith.constant 0 : index
    %582 = vector.load %arg8[%c1_277, %c0_278, %c0_279] : memref<2x8x128xf32, #tpu.memory_space<vmem>>, vector<1x8x128xf32>
    %583 = vector.shape_cast %582 : vector<1x8x128xf32> to vector<8x128xf32>
    %584 = vector.extract_strided_slice %583 {offsets = [0, 0], sizes = [1, 32], strides = [1, 1]} : vector<8x128xf32> to vector<1x32xf32>
    %585 = vector.extract_strided_slice %583 {offsets = [1, 0], sizes = [1, 32], strides = [1, 1]} : vector<8x128xf32> to vector<1x32xf32>
    %586 = vector.extract_strided_slice %583 {offsets = [2, 0], sizes = [1, 128], strides = [1, 1]} : vector<8x128xf32> to vector<1x128xf32>
    %587 = vector.extract_strided_slice %583 {offsets = [3, 0], sizes = [1, 32], strides = [1, 1]} : vector<8x128xf32> to vector<1x32xf32>
    %588 = vector.extract_strided_slice %583 {offsets = [4, 0], sizes = [1, 32], strides = [1, 1]} : vector<8x128xf32> to vector<1x32xf32>
    %cst_280 = arith.constant dense<0.000000e+00> : vector<16xf32>
    %589 = vector.multi_reduction <add>, %581, %cst_280 [1] : vector<16x32xf32> to vector<16xf32>
    %590 = vector.shape_cast %589 : vector<16xf32> to vector<16x1xf32>
    %cst_281 = arith.constant 3.200000e+01 : f32
    %591 = vector.broadcast %cst_281 : f32 to vector<16x1xf32>
    %592 = arith.divf %590, %591 : vector<16x1xf32>
    %593 = vector.broadcast %592 : vector<16x1xf32> to vector<16x32xf32>
    %594 = arith.subf %581, %593 : vector<16x32xf32>
    %595 = arith.mulf %594, %594 : vector<16x32xf32>
    %cst_282 = arith.constant dense<0.000000e+00> : vector<16xf32>
    %596 = vector.multi_reduction <add>, %595, %cst_282 [1] : vector<16x32xf32> to vector<16xf32>
    %597 = vector.shape_cast %596 : vector<16xf32> to vector<16x1xf32>
    %cst_283 = arith.constant 3.200000e+01 : f32
    %598 = vector.broadcast %cst_283 : f32 to vector<16x1xf32>
    %599 = arith.divf %597, %598 : vector<16x1xf32>
    %600 = vector.broadcast %592 : vector<16x1xf32> to vector<16x32xf32>
    %601 = arith.subf %581, %600 : vector<16x32xf32>
    %cst_284 = arith.constant 9.99999974E-6 : f32
    %602 = vector.broadcast %cst_284 : f32 to vector<16x1xf32>
    %603 = arith.addf %599, %602 : vector<16x1xf32>
    %604 = math.rsqrt %603 : vector<16x1xf32>
    %605 = vector.broadcast %604 : vector<16x1xf32> to vector<16x32xf32>
    %606 = arith.mulf %601, %605 : vector<16x32xf32>
    %607 = vector.broadcast %584 : vector<1x32xf32> to vector<16x32xf32>
    %608 = arith.mulf %606, %607 : vector<16x32xf32>
    %609 = vector.broadcast %585 : vector<1x32xf32> to vector<16x32xf32>
    %610 = arith.addf %608, %609 : vector<16x32xf32>
    %611 = arith.truncf %610 : vector<16x32xf32> to vector<16x32xbf16>
    %c1_285 = arith.constant 1 : index
    %c0_286 = arith.constant 0 : index
    %c0_287 = arith.constant 0 : index
    %612 = vector.load %arg4[%c1_285, %c0_286, %c0_287] : memref<2x32x128xbf16, #tpu.memory_space<vmem>>, vector<1x32x128xbf16>
    %613 = vector.shape_cast %612 : vector<1x32x128xbf16> to vector<32x128xbf16>
    %cst_288 = arith.constant dense<0.000000e+00> : vector<16x128xf32>
    %614 = tpu.matmul %611, %613, %cst_288 {dimension_numbers = #tpu.dot_dimension_numbers<[1], [0], [0], [1], [0, 0, 1, 1], [], []>} : vector<16x32xbf16>, vector<32x128xbf16>, vector<16x128xf32> -> vector<16x128xf32>
    %615 = vector.broadcast %586 : vector<1x128xf32> to vector<16x128xf32>
    %616 = arith.addf %614, %615 : vector<16x128xf32>
    %617 = vector.extract_strided_slice %616 {offsets = [0, 96], sizes = [16, 32], strides = [1, 1]} : vector<16x128xf32> to vector<16x32xf32>
    %618 = arith.negf %617 : vector<16x32xf32>
    %619 = math.exp %618 : vector<16x32xf32>
    %cst_289 = arith.constant 1.000000e+00 : f32
    %620 = vector.broadcast %cst_289 : f32 to vector<16x32xf32>
    %621 = arith.addf %620, %619 : vector<16x32xf32>
    %622 = arith.divf %620, %621 : vector<16x32xf32>
    %c1_290 = arith.constant 1 : index
    %c0_291 = arith.constant 0 : index
    %c0_292 = arith.constant 0 : index
    %c0_293 = arith.constant 0 : index
    %623 = vector.load %arg5[%c1_290, %c0_291, %c0_292, %c0_293] : memref<2x4x8x32xbf16, #tpu.memory_space<vmem>>, vector<1x4x8x32xbf16>
    %624 = vector.shape_cast %623 : vector<1x4x8x32xbf16> to vector<4x8x32xbf16>
    %cst_294 = arith.constant 0.000000e+00 : f32
    %625 = vector.broadcast %cst_294 : f32 to vector<16x32xf32>
    %626 = vector.extract_strided_slice %616 {offsets = [0, 0], sizes = [16, 8], strides = [1, 1]} : vector<16x128xf32> to vector<16x8xf32>
    %627 = arith.truncf %626 : vector<16x8xf32> to vector<16x8xbf16>
    %628 = vector.extract_strided_slice %616 {offsets = [0, 32], sizes = [16, 8], strides = [1, 1]} : vector<16x128xf32> to vector<16x8xf32>
    %629 = arith.truncf %628 : vector<16x8xf32> to vector<16x8xbf16>
    %630 = vector.extract_strided_slice %616 {offsets = [0, 64], sizes = [16, 8], strides = [1, 1]} : vector<16x128xf32> to vector<16x8xf32>
    %631 = arith.truncf %630 : vector<16x8xf32> to vector<16x8xbf16>
    %cst_295 = arith.constant dense<0.000000e+00> : vector<16x16xf32>
    %632 = tpu.matmul %627, %629, %cst_295 {dimension_numbers = #tpu.dot_dimension_numbers<[1], [1], [0], [0], [0, 0, 1, 0], [], []>} : vector<16x8xbf16>, vector<16x8xbf16>, vector<16x16xf32> -> vector<16x16xf32>
    %c0_296 = arith.constant 0 : index
    %c4_297 = arith.constant 4 : index
    %c0_298 = arith.constant 0 : index
    %c0_299 = arith.constant 0 : index
    %633 = vector.load %arg11[%c0_296, %c4_297, %c0_298, %c0_299] : memref<1x8x16x16xf32, #tpu.memory_space<vmem>>, vector<1x1x16x16xf32>
    %634 = vector.shape_cast %633 : vector<1x1x16x16xf32> to vector<16x16xf32>
    %635 = arith.addf %632, %634 : vector<16x16xf32>
    %cst_300 = arith.constant dense<0xFF800000> : vector<16xf32>
    %636 = vector.multi_reduction <maximumf>, %635, %cst_300 [1] : vector<16x16xf32> to vector<16xf32>
    %637 = vector.shape_cast %636 : vector<16xf32> to vector<16x1xf32>
    %638 = vector.broadcast %637 : vector<16x1xf32> to vector<16x16xf32>
    %639 = arith.subf %635, %638 : vector<16x16xf32>
    %640 = math.exp %639 : vector<16x16xf32>
    %cst_301 = arith.constant dense<0.000000e+00> : vector<16xf32>
    %641 = vector.multi_reduction <add>, %640, %cst_301 [1] : vector<16x16xf32> to vector<16xf32>
    %642 = vector.shape_cast %641 : vector<16xf32> to vector<16x1xf32>
    %643 = tpu.reciprocal %642 {approx = true} : vector<16x1xf32> -> vector<16x1xf32>
    %644 = vector.broadcast %643 : vector<16x1xf32> to vector<16x16xf32>
    %645 = arith.mulf %640, %644 : vector<16x16xf32>
    %646 = arith.truncf %645 : vector<16x16xf32> to vector<16x16xbf16>
    %cst_302 = arith.constant dense<0.000000e+00> : vector<16x8xf32>
    %647 = tpu.matmul %646, %631, %cst_302 {dimension_numbers = #tpu.dot_dimension_numbers<[1], [0], [0], [1], [0, 0, 1, 1], [], []>} : vector<16x16xbf16>, vector<16x8xbf16>, vector<16x8xf32> -> vector<16x8xf32>
    %648 = vector.extract_strided_slice %622 {offsets = [0, 0], sizes = [16, 8], strides = [1, 1]} : vector<16x32xf32> to vector<16x8xf32>
    %649 = arith.mulf %647, %648 : vector<16x8xf32>
    %650 = arith.truncf %649 : vector<16x8xf32> to vector<16x8xbf16>
    %651 = vector.extract_strided_slice %624 {offsets = [0, 0, 0], sizes = [1, 8, 32], strides = [1, 1, 1]} : vector<4x8x32xbf16> to vector<1x8x32xbf16>
    %652 = vector.shape_cast %651 : vector<1x8x32xbf16> to vector<8x32xbf16>
    %cst_303 = arith.constant dense<0.000000e+00> : vector<16x32xf32>
    %653 = tpu.matmul %650, %652, %cst_303 {dimension_numbers = #tpu.dot_dimension_numbers<[1], [0], [0], [1], [0, 0, 1, 1], [], []>} : vector<16x8xbf16>, vector<8x32xbf16>, vector<16x32xf32> -> vector<16x32xf32>
    %654 = arith.addf %625, %653 : vector<16x32xf32>
    %655 = vector.extract_strided_slice %616 {offsets = [0, 8], sizes = [16, 8], strides = [1, 1]} : vector<16x128xf32> to vector<16x8xf32>
    %656 = arith.truncf %655 : vector<16x8xf32> to vector<16x8xbf16>
    %657 = vector.extract_strided_slice %616 {offsets = [0, 40], sizes = [16, 8], strides = [1, 1]} : vector<16x128xf32> to vector<16x8xf32>
    %658 = arith.truncf %657 : vector<16x8xf32> to vector<16x8xbf16>
    %659 = vector.extract_strided_slice %616 {offsets = [0, 72], sizes = [16, 8], strides = [1, 1]} : vector<16x128xf32> to vector<16x8xf32>
    %660 = arith.truncf %659 : vector<16x8xf32> to vector<16x8xbf16>
    %cst_304 = arith.constant dense<0.000000e+00> : vector<16x16xf32>
    %661 = tpu.matmul %656, %658, %cst_304 {dimension_numbers = #tpu.dot_dimension_numbers<[1], [1], [0], [0], [0, 0, 1, 0], [], []>} : vector<16x8xbf16>, vector<16x8xbf16>, vector<16x16xf32> -> vector<16x16xf32>
    %c0_305 = arith.constant 0 : index
    %c5_306 = arith.constant 5 : index
    %c0_307 = arith.constant 0 : index
    %c0_308 = arith.constant 0 : index
    %662 = vector.load %arg11[%c0_305, %c5_306, %c0_307, %c0_308] : memref<1x8x16x16xf32, #tpu.memory_space<vmem>>, vector<1x1x16x16xf32>
    %663 = vector.shape_cast %662 : vector<1x1x16x16xf32> to vector<16x16xf32>
    %664 = arith.addf %661, %663 : vector<16x16xf32>
    %cst_309 = arith.constant dense<0xFF800000> : vector<16xf32>
    %665 = vector.multi_reduction <maximumf>, %664, %cst_309 [1] : vector<16x16xf32> to vector<16xf32>
    %666 = vector.shape_cast %665 : vector<16xf32> to vector<16x1xf32>
    %667 = vector.broadcast %666 : vector<16x1xf32> to vector<16x16xf32>
    %668 = arith.subf %664, %667 : vector<16x16xf32>
    %669 = math.exp %668 : vector<16x16xf32>
    %cst_310 = arith.constant dense<0.000000e+00> : vector<16xf32>
    %670 = vector.multi_reduction <add>, %669, %cst_310 [1] : vector<16x16xf32> to vector<16xf32>
    %671 = vector.shape_cast %670 : vector<16xf32> to vector<16x1xf32>
    %672 = tpu.reciprocal %671 {approx = true} : vector<16x1xf32> -> vector<16x1xf32>
    %673 = vector.broadcast %672 : vector<16x1xf32> to vector<16x16xf32>
    %674 = arith.mulf %669, %673 : vector<16x16xf32>
    %675 = arith.truncf %674 : vector<16x16xf32> to vector<16x16xbf16>
    %cst_311 = arith.constant dense<0.000000e+00> : vector<16x8xf32>
    %676 = tpu.matmul %675, %660, %cst_311 {dimension_numbers = #tpu.dot_dimension_numbers<[1], [0], [0], [1], [0, 0, 1, 1], [], []>} : vector<16x16xbf16>, vector<16x8xbf16>, vector<16x8xf32> -> vector<16x8xf32>
    %677 = vector.extract_strided_slice %622 {offsets = [0, 8], sizes = [16, 8], strides = [1, 1]} : vector<16x32xf32> to vector<16x8xf32>
    %678 = arith.mulf %676, %677 : vector<16x8xf32>
    %679 = arith.truncf %678 : vector<16x8xf32> to vector<16x8xbf16>
    %680 = vector.extract_strided_slice %624 {offsets = [1, 0, 0], sizes = [1, 8, 32], strides = [1, 1, 1]} : vector<4x8x32xbf16> to vector<1x8x32xbf16>
    %681 = vector.shape_cast %680 : vector<1x8x32xbf16> to vector<8x32xbf16>
    %cst_312 = arith.constant dense<0.000000e+00> : vector<16x32xf32>
    %682 = tpu.matmul %679, %681, %cst_312 {dimension_numbers = #tpu.dot_dimension_numbers<[1], [0], [0], [1], [0, 0, 1, 1], [], []>} : vector<16x8xbf16>, vector<8x32xbf16>, vector<16x32xf32> -> vector<16x32xf32>
    %683 = arith.addf %654, %682 : vector<16x32xf32>
    %684 = vector.extract_strided_slice %616 {offsets = [0, 16], sizes = [16, 8], strides = [1, 1]} : vector<16x128xf32> to vector<16x8xf32>
    %685 = arith.truncf %684 : vector<16x8xf32> to vector<16x8xbf16>
    %686 = vector.extract_strided_slice %616 {offsets = [0, 48], sizes = [16, 8], strides = [1, 1]} : vector<16x128xf32> to vector<16x8xf32>
    %687 = arith.truncf %686 : vector<16x8xf32> to vector<16x8xbf16>
    %688 = vector.extract_strided_slice %616 {offsets = [0, 80], sizes = [16, 8], strides = [1, 1]} : vector<16x128xf32> to vector<16x8xf32>
    %689 = arith.truncf %688 : vector<16x8xf32> to vector<16x8xbf16>
    %cst_313 = arith.constant dense<0.000000e+00> : vector<16x16xf32>
    %690 = tpu.matmul %685, %687, %cst_313 {dimension_numbers = #tpu.dot_dimension_numbers<[1], [1], [0], [0], [0, 0, 1, 0], [], []>} : vector<16x8xbf16>, vector<16x8xbf16>, vector<16x16xf32> -> vector<16x16xf32>
    %c0_314 = arith.constant 0 : index
    %c6_315 = arith.constant 6 : index
    %c0_316 = arith.constant 0 : index
    %c0_317 = arith.constant 0 : index
    %691 = vector.load %arg11[%c0_314, %c6_315, %c0_316, %c0_317] : memref<1x8x16x16xf32, #tpu.memory_space<vmem>>, vector<1x1x16x16xf32>
    %692 = vector.shape_cast %691 : vector<1x1x16x16xf32> to vector<16x16xf32>
    %693 = arith.addf %690, %692 : vector<16x16xf32>
    %cst_318 = arith.constant dense<0xFF800000> : vector<16xf32>
    %694 = vector.multi_reduction <maximumf>, %693, %cst_318 [1] : vector<16x16xf32> to vector<16xf32>
    %695 = vector.shape_cast %694 : vector<16xf32> to vector<16x1xf32>
    %696 = vector.broadcast %695 : vector<16x1xf32> to vector<16x16xf32>
    %697 = arith.subf %693, %696 : vector<16x16xf32>
    %698 = math.exp %697 : vector<16x16xf32>
    %cst_319 = arith.constant dense<0.000000e+00> : vector<16xf32>
    %699 = vector.multi_reduction <add>, %698, %cst_319 [1] : vector<16x16xf32> to vector<16xf32>
    %700 = vector.shape_cast %699 : vector<16xf32> to vector<16x1xf32>
    %701 = tpu.reciprocal %700 {approx = true} : vector<16x1xf32> -> vector<16x1xf32>
    %702 = vector.broadcast %701 : vector<16x1xf32> to vector<16x16xf32>
    %703 = arith.mulf %698, %702 : vector<16x16xf32>
    %704 = arith.truncf %703 : vector<16x16xf32> to vector<16x16xbf16>
    %cst_320 = arith.constant dense<0.000000e+00> : vector<16x8xf32>
    %705 = tpu.matmul %704, %689, %cst_320 {dimension_numbers = #tpu.dot_dimension_numbers<[1], [0], [0], [1], [0, 0, 1, 1], [], []>} : vector<16x16xbf16>, vector<16x8xbf16>, vector<16x8xf32> -> vector<16x8xf32>
    %706 = vector.extract_strided_slice %622 {offsets = [0, 16], sizes = [16, 8], strides = [1, 1]} : vector<16x32xf32> to vector<16x8xf32>
    %707 = arith.mulf %705, %706 : vector<16x8xf32>
    %708 = arith.truncf %707 : vector<16x8xf32> to vector<16x8xbf16>
    %709 = vector.extract_strided_slice %624 {offsets = [2, 0, 0], sizes = [1, 8, 32], strides = [1, 1, 1]} : vector<4x8x32xbf16> to vector<1x8x32xbf16>
    %710 = vector.shape_cast %709 : vector<1x8x32xbf16> to vector<8x32xbf16>
    %cst_321 = arith.constant dense<0.000000e+00> : vector<16x32xf32>
    %711 = tpu.matmul %708, %710, %cst_321 {dimension_numbers = #tpu.dot_dimension_numbers<[1], [0], [0], [1], [0, 0, 1, 1], [], []>} : vector<16x8xbf16>, vector<8x32xbf16>, vector<16x32xf32> -> vector<16x32xf32>
    %712 = arith.addf %683, %711 : vector<16x32xf32>
    %713 = vector.extract_strided_slice %616 {offsets = [0, 24], sizes = [16, 8], strides = [1, 1]} : vector<16x128xf32> to vector<16x8xf32>
    %714 = arith.truncf %713 : vector<16x8xf32> to vector<16x8xbf16>
    %715 = vector.extract_strided_slice %616 {offsets = [0, 56], sizes = [16, 8], strides = [1, 1]} : vector<16x128xf32> to vector<16x8xf32>
    %716 = arith.truncf %715 : vector<16x8xf32> to vector<16x8xbf16>
    %717 = vector.extract_strided_slice %616 {offsets = [0, 88], sizes = [16, 8], strides = [1, 1]} : vector<16x128xf32> to vector<16x8xf32>
    %718 = arith.truncf %717 : vector<16x8xf32> to vector<16x8xbf16>
    %cst_322 = arith.constant dense<0.000000e+00> : vector<16x16xf32>
    %719 = tpu.matmul %714, %716, %cst_322 {dimension_numbers = #tpu.dot_dimension_numbers<[1], [1], [0], [0], [0, 0, 1, 0], [], []>} : vector<16x8xbf16>, vector<16x8xbf16>, vector<16x16xf32> -> vector<16x16xf32>
    %c0_323 = arith.constant 0 : index
    %c7_324 = arith.constant 7 : index
    %c0_325 = arith.constant 0 : index
    %c0_326 = arith.constant 0 : index
    %720 = vector.load %arg11[%c0_323, %c7_324, %c0_325, %c0_326] : memref<1x8x16x16xf32, #tpu.memory_space<vmem>>, vector<1x1x16x16xf32>
    %721 = vector.shape_cast %720 : vector<1x1x16x16xf32> to vector<16x16xf32>
    %722 = arith.addf %719, %721 : vector<16x16xf32>
    %cst_327 = arith.constant dense<0xFF800000> : vector<16xf32>
    %723 = vector.multi_reduction <maximumf>, %722, %cst_327 [1] : vector<16x16xf32> to vector<16xf32>
    %724 = vector.shape_cast %723 : vector<16xf32> to vector<16x1xf32>
    %725 = vector.broadcast %724 : vector<16x1xf32> to vector<16x16xf32>
    %726 = arith.subf %722, %725 : vector<16x16xf32>
    %727 = math.exp %726 : vector<16x16xf32>
    %cst_328 = arith.constant dense<0.000000e+00> : vector<16xf32>
    %728 = vector.multi_reduction <add>, %727, %cst_328 [1] : vector<16x16xf32> to vector<16xf32>
    %729 = vector.shape_cast %728 : vector<16xf32> to vector<16x1xf32>
    %730 = tpu.reciprocal %729 {approx = true} : vector<16x1xf32> -> vector<16x1xf32>
    %731 = vector.broadcast %730 : vector<16x1xf32> to vector<16x16xf32>
    %732 = arith.mulf %727, %731 : vector<16x16xf32>
    %733 = arith.truncf %732 : vector<16x16xf32> to vector<16x16xbf16>
    %cst_329 = arith.constant dense<0.000000e+00> : vector<16x8xf32>
    %734 = tpu.matmul %733, %718, %cst_329 {dimension_numbers = #tpu.dot_dimension_numbers<[1], [0], [0], [1], [0, 0, 1, 1], [], []>} : vector<16x16xbf16>, vector<16x8xbf16>, vector<16x8xf32> -> vector<16x8xf32>
    %735 = vector.extract_strided_slice %622 {offsets = [0, 24], sizes = [16, 8], strides = [1, 1]} : vector<16x32xf32> to vector<16x8xf32>
    %736 = arith.mulf %734, %735 : vector<16x8xf32>
    %737 = arith.truncf %736 : vector<16x8xf32> to vector<16x8xbf16>
    %738 = vector.extract_strided_slice %624 {offsets = [3, 0, 0], sizes = [1, 8, 32], strides = [1, 1, 1]} : vector<4x8x32xbf16> to vector<1x8x32xbf16>
    %739 = vector.shape_cast %738 : vector<1x8x32xbf16> to vector<8x32xbf16>
    %cst_330 = arith.constant dense<0.000000e+00> : vector<16x32xf32>
    %740 = tpu.matmul %737, %739, %cst_330 {dimension_numbers = #tpu.dot_dimension_numbers<[1], [0], [0], [1], [0, 0, 1, 1], [], []>} : vector<16x8xbf16>, vector<8x32xbf16>, vector<16x32xf32> -> vector<16x32xf32>
    %741 = arith.addf %712, %740 : vector<16x32xf32>
    %742 = arith.addf %581, %741 : vector<16x32xf32>
    %cst_331 = arith.constant dense<0.000000e+00> : vector<16xf32>
    %743 = vector.multi_reduction <add>, %742, %cst_331 [1] : vector<16x32xf32> to vector<16xf32>
    %744 = vector.shape_cast %743 : vector<16xf32> to vector<16x1xf32>
    %cst_332 = arith.constant 3.200000e+01 : f32
    %745 = vector.broadcast %cst_332 : f32 to vector<16x1xf32>
    %746 = arith.divf %744, %745 : vector<16x1xf32>
    %747 = vector.broadcast %746 : vector<16x1xf32> to vector<16x32xf32>
    %748 = arith.subf %742, %747 : vector<16x32xf32>
    %749 = arith.mulf %748, %748 : vector<16x32xf32>
    %cst_333 = arith.constant dense<0.000000e+00> : vector<16xf32>
    %750 = vector.multi_reduction <add>, %749, %cst_333 [1] : vector<16x32xf32> to vector<16xf32>
    %751 = vector.shape_cast %750 : vector<16xf32> to vector<16x1xf32>
    %cst_334 = arith.constant 3.200000e+01 : f32
    %752 = vector.broadcast %cst_334 : f32 to vector<16x1xf32>
    %753 = arith.divf %751, %752 : vector<16x1xf32>
    %754 = vector.broadcast %746 : vector<16x1xf32> to vector<16x32xf32>
    %755 = arith.subf %742, %754 : vector<16x32xf32>
    %cst_335 = arith.constant 9.99999974E-6 : f32
    %756 = vector.broadcast %cst_335 : f32 to vector<16x1xf32>
    %757 = arith.addf %753, %756 : vector<16x1xf32>
    %758 = math.rsqrt %757 : vector<16x1xf32>
    %759 = vector.broadcast %758 : vector<16x1xf32> to vector<16x32xf32>
    %760 = arith.mulf %755, %759 : vector<16x32xf32>
    %761 = vector.broadcast %587 : vector<1x32xf32> to vector<16x32xf32>
    %762 = arith.mulf %760, %761 : vector<16x32xf32>
    %763 = vector.broadcast %588 : vector<1x32xf32> to vector<16x32xf32>
    %764 = arith.addf %762, %763 : vector<16x32xf32>
    %765 = arith.truncf %764 : vector<16x32xf32> to vector<16x32xbf16>
    %c1_336 = arith.constant 1 : index
    %c0_337 = arith.constant 0 : index
    %c0_338 = arith.constant 0 : index
    %766 = vector.load %arg6[%c1_336, %c0_337, %c0_338] : memref<2x32x256xbf16, #tpu.memory_space<vmem>>, vector<1x32x256xbf16>
    %767 = vector.shape_cast %766 : vector<1x32x256xbf16> to vector<32x256xbf16>
    %cst_339 = arith.constant dense<0.000000e+00> : vector<16x256xf32>
    %768 = tpu.matmul %765, %767, %cst_339 {dimension_numbers = #tpu.dot_dimension_numbers<[1], [0], [0], [1], [0, 0, 1, 1], [], []>} : vector<16x32xbf16>, vector<32x256xbf16>, vector<16x256xf32> -> vector<16x256xf32>
    %769 = vector.extract_strided_slice %768 {offsets = [0, 0], sizes = [16, 128], strides = [1, 1]} : vector<16x256xf32> to vector<16x128xf32>
    %770 = arith.negf %769 : vector<16x128xf32>
    %771 = math.exp %770 : vector<16x128xf32>
    %cst_340 = arith.constant 1.000000e+00 : f32
    %772 = vector.broadcast %cst_340 : f32 to vector<16x128xf32>
    %773 = arith.addf %772, %771 : vector<16x128xf32>
    %774 = arith.divf %772, %773 : vector<16x128xf32>
    %775 = arith.mulf %769, %774 : vector<16x128xf32>
    %776 = vector.extract_strided_slice %768 {offsets = [0, 128], sizes = [16, 128], strides = [1, 1]} : vector<16x256xf32> to vector<16x128xf32>
    %777 = arith.mulf %775, %776 : vector<16x128xf32>
    %778 = arith.truncf %777 : vector<16x128xf32> to vector<16x128xbf16>
    %c1_341 = arith.constant 1 : index
    %c0_342 = arith.constant 0 : index
    %c0_343 = arith.constant 0 : index
    %779 = vector.load %arg7[%c1_341, %c0_342, %c0_343] : memref<2x128x32xbf16, #tpu.memory_space<vmem>>, vector<1x128x32xbf16>
    %780 = vector.shape_cast %779 : vector<1x128x32xbf16> to vector<128x32xbf16>
    %cst_344 = arith.constant dense<0.000000e+00> : vector<16x32xf32>
    %781 = tpu.matmul %778, %780, %cst_344 {dimension_numbers = #tpu.dot_dimension_numbers<[1], [0], [0], [1], [0, 0, 1, 1], [], []>} : vector<16x128xbf16>, vector<128x32xbf16>, vector<16x32xf32> -> vector<16x32xf32>
    %782 = arith.addf %742, %781 : vector<16x32xf32>
    %783 = vector.shape_cast %782 : vector<16x32xf32> to vector<1x16x32xf32>
    %c0_345 = arith.constant 0 : index
    %c0_346 = arith.constant 0 : index
    %c0_347 = arith.constant 0 : index
    %784 = vector.load %arg10[%c0_345, %c0_346, %c0_347] : memref<1x16x32xf32, #tpu.memory_space<vmem>>, vector<1x16x32xf32>
    tpu.vector_store %arg10[%c0_345, %c0_346, %c0_347], %783 {strides = array<i32>} : memref<1x16x32xf32, #tpu.memory_space<vmem>>, vector<1x16x32xf32>,
    return
  }
  func.func @transform_0(%arg0: i32) -> (i32, i32, i32) {
    %c0_i32 = arith.constant 0 : i32
    %c0_i32_0 = arith.constant 0 : i32
    %c0_i32_1 = arith.constant 0 : i32
    return %arg0, %c0_i32, %c0_i32_0 : i32, i32, i32
  }
  func.func @transform_1(%arg0: i32) -> (i32, i32, i32, i32) {
    %c0_i32 = arith.constant 0 : i32
    %c0_i32_0 = arith.constant 0 : i32
    %c0_i32_1 = arith.constant 0 : i32
    %c0_i32_2 = arith.constant 0 : i32
    return %arg0, %c0_i32, %c0_i32_0, %c0_i32_1 : i32, i32, i32, i32
  }
  func.func @transform_2(%arg0: i32) -> (i32, i32, i32) {
    %c0_i32 = arith.constant 0 : i32
    %c0_i32_0 = arith.constant 0 : i32
    %c0_i32_1 = arith.constant 0 : i32
    return %arg0, %c0_i32, %c0_i32_0 : i32, i32, i32
  }
  func.func @transform_3(%arg0: i32) -> (i32, i32, i32) {
    %c0_i32 = arith.constant 0 : i32
    %c0_i32_0 = arith.constant 0 : i32
    %c0_i32_1 = arith.constant 0 : i32
    %c0_i32_2 = arith.constant 0 : i32
    return %c0_i32, %c0_i32_0, %c0_i32_1 : i32, i32, i32
  }
  func.func @transform_4(%arg0: i32) -> (i32, i32, i32, i32) {
    %c0_i32 = arith.constant 0 : i32
    %c0_i32_0 = arith.constant 0 : i32
    %c0_i32_1 = arith.constant 0 : i32
    %c0_i32_2 = arith.constant 0 : i32
    %c0_i32_3 = arith.constant 0 : i32
    return %c0_i32, %c0_i32_0, %c0_i32_1, %c0_i32_2 : i32, i32, i32, i32
  }
  func.func @transform_5(%arg0: i32) -> (i32, i32, i32) {
    %c0_i32 = arith.constant 0 : i32
    %c0_i32_0 = arith.constant 0 : i32
    %c0_i32_1 = arith.constant 0 : i32
    %c0_i32_2 = arith.constant 0 : i32
    return %c0_i32, %c0_i32_0, %c0_i32_1 : i32, i32, i32
  }
  func.func @transform_6(%arg0: i32) -> (i32, i32, i32) {
    %c0_i32 = arith.constant 0 : i32
    %c0_i32_0 = arith.constant 0 : i32
    %c0_i32_1 = arith.constant 0 : i32
    %c0_i32_2 = arith.constant 0 : i32
    return %c0_i32, %c0_i32_0, %c0_i32_1 : i32, i32, i32
  }
  func.func @transform_7(%arg0: i32) -> (i32, i32, i32) {
    %c0_i32 = arith.constant 0 : i32
    %c0_i32_0 = arith.constant 0 : i32
    %c0_i32_1 = arith.constant 0 : i32
    %c0_i32_2 = arith.constant 0 : i32
    return %c0_i32, %c0_i32_0, %c0_i32_1 : i32, i32, i32
  }
  func.func @transform_8(%arg0: i32) -> (i32, i32) {
    %c0_i32 = arith.constant 0 : i32
    %c0_i32_0 = arith.constant 0 : i32
    %c0_i32_1 = arith.constant 0 : i32
    return %c0_i32, %c0_i32_0 : i32, i32
  }
  func.func @transform_9(%arg0: i32) -> (i32, i32, i32) {
    %c0_i32 = arith.constant 0 : i32
    %c0_i32_0 = arith.constant 0 : i32
    %c0_i32_1 = arith.constant 0 : i32
    return %arg0, %c0_i32, %c0_i32_0 : i32, i32, i32
  }
}

</mosaic_0001>

<llo_original>
// kernel: tpu_custom_call.1
$region0: #{tpu_custom_call.1}
  #allocation0 [shape = 'u32[]', space=smem, size = 0x4, offset = 0x4, fixed_abs, tag = 'smem constant byte address 0x4 - core index']
  #allocation1 [shape = 'u32[144,128]{1,0:T(1,128)}', space=vmem, size = 0x12000, scoped, tag = 'internal scratch']
  #allocation2 [shape = 'f32[1,8,16,16]{3,2,1,0:T(8,128)}', space=vmem, size = 0x10000, scoped, tag = 'scratch operand']
  %s0 = inlined_call_operand.vmem [shape: f32[2,16,32], index: 0, kind: input, shape index: {}]
  %s1 = inlined_call_operand.hbm [shape: f32[2,8,16,16], index: 1, kind: input, shape index: {}]
  %s2 = inlined_call_operand.vmem [shape: f32[2,16,16], index: 2, kind: input, shape index: {}]
  %s3 = inlined_call_operand.vmem [shape: bf16[2,32,128], index: 3, kind: input, shape index: {}]
  %s4 = inlined_call_operand.hbm [shape: bf16[2,4,8,32], index: 4, kind: input, shape index: {}]
  %s5 = inlined_call_operand.vmem [shape: bf16[2,32,256], index: 5, kind: input, shape index: {}]
  %s6 = inlined_call_operand.vmem [shape: bf16[2,128,32], index: 6, kind: input, shape index: {}]
  %s7 = inlined_call_operand.hbm [shape: f32[2,8,128], index: 7, kind: input, shape index: {}]
  %s8 = inlined_call_operand.vmem [shape: f32[9,8], index: 8, kind: input, shape index: {}]
  %s9 = inlined_call_operand.hbm [shape: f32[2,16,32], index: 9, kind: output, shape index: {}]
  %s10 = sld [smem:[#allocation0]]
  $region85: #{tpu_custom_call.1} parent=0
    _
  %s12 = ssub.s32 1, %s10
  %s13 = scalar_select 0, %s12, %s10
  $region1: #{tpu_custom_call.1} parent=0
    #allocation3 [shape = 'u8[131072]{0}', space=vmem, size = 0x20000, scoped, tag = 'input window, operand 1']
    #allocation4 [shape = 's32[2]{0}', space=sflag, size = 0x8, scoped, tag = 'scoped memory for tpu_custom_call.1']
    #allocation5 [shape = 's32[2]{0}', space=sflag, size = 0x8, scoped, tag = 'scoped memory for tpu_custom_call.1']
    #allocation6 [shape = 's32[2]{0}', space=sflag, size = 0x8, scoped, tag = 'scoped memory for tpu_custom_call.1']
    #allocation7 [shape = 'u8[16384]{0}', space=vmem, size = 0x4000, scoped, tag = 'input window, operand 4, single buffered']
    #allocation8 [shape = 's32[1]{0}', space=sflag, size = 0x4, scoped, tag = 'scoped memory for tpu_custom_call.1']
    #allocation9 [shape = 'u8[8192]{0}', space=vmem, size = 0x2000, scoped, tag = 'input window, operand 7, single buffered']
    #allocation10 [shape = 'u8[8192]{0}', space=smem, size = 0x2000, scoped, tag = 'input window, operand 8, single buffered']
    #allocation11 [shape = 'u8[16384]{0}', space=vmem, size = 0x4000, scoped, tag = 'output window, operand 0']
    %14 = vsyncpa [#allocation4], 0
    %s15 = scalar_lea.sflag [#allocation4], 1
    %16 = vsyncpa %s15, 0
    %17 = vsyncpa [#allocation8], 0
    %18 = vsyncpa [#allocation6], 0
    %19 = vsyncpa [#allocation5], 0
    %s20 = scalar_lea.sflag [#allocation5], 1
    %21 = vsyncpa %s20, 0
    loop: start=0, step=1, limit=4
    $region2: #{tpu_custom_call.1} parent=1 // loop_pre_header
      _
    $region3: #{tpu_custom_call.1} parent=1 // loop_header
      %s23 = sphi 0, %s27
      %p24 = scmp.ge.s32.totalorder %s23, 4
      %s33 = sphi 0, %s35
      %s36 = sphi 0, %s33
      %s37 = sphi 0, %s36
      %s53 = sphi 0, %s37
      %s59 = sphi 0, %s61
      %s62 = sphi 0, %s59
      %s63 = sphi 0, %s62
      %s79 = sphi 0, %s63
      %s85 = sphi 0, %s87
      %s88 = sphi 0, %s85
      %s89 = sphi 0, %s88
      %s105 = sphi 0, %s89
      %s109 = sphi 0, %s109
      %s111 = sphi 0, %s109
      %s112 = sphi 0, %s111
      %s126 = sphi 0, %s112
      %s130 = sphi 0, %s130
      %s132 = sphi 0, %s130
      %s133 = sphi 0, %s132
      %s147 = sphi 0, %s133
      %s151 = sphi 0, %s151
      %s153 = sphi 0, %s151
      %s154 = sphi 0, %s153
      %s168 = sphi 0, %s154
      %s172 = sphi 0, %s172
      %s174 = sphi 0, %s172
      %s175 = sphi 0, %s174
      %s189 = sphi 0, %s175
      %s193 = sphi 0, %s193
      %s195 = sphi 0, %s193
      %s196 = sphi 0, %s195
      %s210 = sphi 0, %s196
      %s214 = sphi 0, %s214
      %s216 = sphi 0, %s214
      %s217 = sphi 0, %s216
      %s231 = sphi 0, %s217
      %s237 = sphi 0, %s239
      %s240 = sphi 0, %s237
      %s241 = sphi 0, %s240
      %s257 = sphi 0, %s241
    $region4: #{tpu_custom_call.1} parent=1 // loop_header_branch
      %26 = sbr.rel (%p24) target = $region8
    $region5: #{tpu_custom_call.1} parent=1 // loop_body
      %s28 = ssub.s32 %s23, 1
      %s29 = ssub.s32 %s23, 2
      %s30 = sadd.s32 %s23, 1
      %s31 = ssub.s32 %s23, %s30
      %p32 = scmp.eq.s32.totalorder %s31, 0
      %s34 = sadd.s32 %s33, 1
      %s35 = scalar_select %p32, %s33, %s34
      %p38 = pneg %p32
      %p39 = scmp.eq.s32.totalorder %s23, 1
      %p40 = por %p38, %p39
      %p41 = scmp.ne.s32.totalorder %s33, %s36
      %p42 = scmp.eq.s32.totalorder %s23, 0
      %p43 = por %p41, %p42
      %p44 = scmp.ne.s32.totalorder %s33, %s36
      %p45 = scmp.eq.s32.totalorder %s28, 1
      %p46 = por %p44, %p45
      %p47 = scmp.ne.s32.totalorder %s36, %s37
      %p48 = scmp.eq.s32.totalorder %s28, 0
      %p49 = por %p47, %p48
      %p50 = scmp.ne.s32.totalorder %s36, %s37
      %p51 = scmp.eq.s32.totalorder %s29, 1
      %p52 = por %p50, %p51
      %p54 = scmp.ne.s32.totalorder %s37, %s53
      %p55 = scmp.eq.s32.totalorder %s29, 0
      %p56 = por %p54, %p55
      %s57 = ssub.s32 %s23, %s30
      %p58 = scmp.eq.s32.totalorder %s57, 0
      %s60 = sadd.s32 %s59, 1
      %s61 = scalar_select %p58, %s59, %s60
      %p64 = pneg %p58
      %p65 = scmp.eq.s32.totalorder %s23, 1
      %p66 = por %p64, %p65
      %p67 = scmp.ne.s32.totalorder %s59, %s62
      %p68 = scmp.eq.s32.totalorder %s23, 0
      %p69 = por %p67, %p68
      %p70 = scmp.ne.s32.totalorder %s59, %s62
      %p71 = scmp.eq.s32.totalorder %s28, 1
      %p72 = por %p70, %p71
      %p73 = scmp.ne.s32.totalorder %s62, %s63
      %p74 = scmp.eq.s32.totalorder %s28, 0
      %p75 = por %p73, %p74
      %p76 = scmp.ne.s32.totalorder %s62, %s63
      %p77 = scmp.eq.s32.totalorder %s29, 1
      %p78 = por %p76, %p77
      %p80 = scmp.ne.s32.totalorder %s63, %s79
      %p81 = scmp.eq.s32.totalorder %s29, 0
      %p82 = por %p80, %p81
      %s83 = ssub.s32 %s23, %s30
      %p84 = scmp.eq.s32.totalorder %s83, 0
      %s86 = sadd.s32 %s85, 1
      %s87 = scalar_select %p84, %s85, %s86
      %p90 = pneg %p84
      %p91 = scmp.eq.s32.totalorder %s23, 1
      %p92 = por %p90, %p91
      %p93 = scmp.ne.s32.totalorder %s85, %s88
      %p94 = scmp.eq.s32.totalorder %s23, 0
      %p95 = por %p93, %p94
      %p96 = scmp.ne.s32.totalorder %s85, %s88
      %p97 = scmp.eq.s32.totalorder %s28, 1
      %p98 = por %p96, %p97
      %p99 = scmp.ne.s32.totalorder %s88, %s89
      %p100 = scmp.eq.s32.totalorder %s28, 0
      %p101 = por %p99, %p100
      %p102 = scmp.ne.s32.totalorder %s88, %s89
      %p103 = scmp.eq.s32.totalorder %s29, 1
      %p104 = por %p102, %p103
      %p106 = scmp.ne.s32.totalorder %s89, %s105
      %p107 = scmp.eq.s32.totalorder %s29, 0
      %p108 = por %p106, %p107
      %s110 = sadd.s32 %s109, 1
      %p113 = scmp.eq.s32.totalorder %s23, 1
      %p114 = scmp.ne.s32.totalorder %s109, %s111
      %p115 = scmp.eq.s32.totalorder %s23, 0
      %p116 = por %p114, %p115
      %p117 = scmp.ne.s32.totalorder %s109, %s111
      %p118 = scmp.eq.s32.totalorder %s28, 1
      %p119 = por %p117, %p118
      %p120 = scmp.ne.s32.totalorder %s111, %s112
      %p121 = scmp.eq.s32.totalorder %s28, 0
      %p122 = por %p120, %p121
      %p123 = scmp.ne.s32.totalorder %s111, %s112
      %p124 = scmp.eq.s32.totalorder %s29, 1
      %p125 = por %p123, %p124
      %p127 = scmp.ne.s32.totalorder %s112, %s126
      %p128 = scmp.eq.s32.totalorder %s29, 0
      %p129 = por %p127, %p128
      %s131 = sadd.s32 %s130, 1
      %p134 = scmp.eq.s32.totalorder %s23, 1
      %p135 = scmp.ne.s32.totalorder %s130, %s132
      %p136 = scmp.eq.s32.totalorder %s23, 0
      %p137 = por %p135, %p136
      %p138 = scmp.ne.s32.totalorder %s130, %s132
      %p139 = scmp.eq.s32.totalorder %s28, 1
      %p140 = por %p138, %p139
      %p141 = scmp.ne.s32.totalorder %s132, %s133
      %p142 = scmp.eq.s32.totalorder %s28, 0
      %p143 = por %p141, %p142
      %p144 = scmp.ne.s32.totalorder %s132, %s133
      %p145 = scmp.eq.s32.totalorder %s29, 1
      %p146 = por %p144, %p145
      %p148 = scmp.ne.s32.totalorder %s133, %s147
      %p149 = scmp.eq.s32.totalorder %s29, 0
      %p150 = por %p148, %p149
      %s152 = sadd.s32 %s151, 1
      %p155 = scmp.eq.s32.totalorder %s23, 1
      %p156 = scmp.ne.s32.totalorder %s151, %s153
      %p157 = scmp.eq.s32.totalorder %s23, 0
      %p158 = por %p156, %p157
      %p159 = scmp.ne.s32.totalorder %s151, %s153
      %p160 = scmp.eq.s32.totalorder %s28, 1
      %p161 = por %p159, %p160
      %p162 = scmp.ne.s32.totalorder %s153, %s154
      %p163 = scmp.eq.s32.totalorder %s28, 0
      %p164 = por %p162, %p163
      %p165 = scmp.ne.s32.totalorder %s153, %s154
      %p166 = scmp.eq.s32.totalorder %s29, 1
      %p167 = por %p165, %p166
      %p169 = scmp.ne.s32.totalorder %s154, %s168
      %p170 = scmp.eq.s32.totalorder %s29, 0
      %p171 = por %p169, %p170
      %s173 = sadd.s32 %s172, 1
      %p176 = scmp.eq.s32.totalorder %s23, 1
      %p177 = scmp.ne.s32.totalorder %s172, %s174
      %p178 = scmp.eq.s32.totalorder %s23, 0
      %p179 = por %p177, %p178
      %p180 = scmp.ne.s32.totalorder %s172, %s174
      %p181 = scmp.eq.s32.totalorder %s28, 1
      %p182 = por %p180, %p181
      %p183 = scmp.ne.s32.totalorder %s174, %s175
      %p184 = scmp.eq.s32.totalorder %s28, 0
      %p185 = por %p183, %p184
      %p186 = scmp.ne.s32.totalorder %s174, %s175
      %p187 = scmp.eq.s32.totalorder %s29, 1
      %p188 = por %p186, %p187
      %p190 = scmp.ne.s32.totalorder %s175, %s189
      %p191 = scmp.eq.s32.totalorder %s29, 0
      %p192 = por %p190, %p191
      %s194 = sadd.s32 %s193, 1
      %p197 = scmp.eq.s32.totalorder %s23, 1
      %p198 = scmp.ne.s32.totalorder %s193, %s195
      %p199 = scmp.eq.s32.totalorder %s23, 0
      %p200 = por %p198, %p199
      %p201 = scmp.ne.s32.totalorder %s193, %s195
      %p202 = scmp.eq.s32.totalorder %s28, 1
      %p203 = por %p201, %p202
      %p204 = scmp.ne.s32.totalorder %s195, %s196
      %p205 = scmp.eq.s32.totalorder %s28, 0
      %p206 = por %p204, %p205
      %p207 = scmp.ne.s32.totalorder %s195, %s196
      %p208 = scmp.eq.s32.totalorder %s29, 1
      %p209 = por %p207, %p208
      %p211 = scmp.ne.s32.totalorder %s196, %s210
      %p212 = scmp.eq.s32.totalorder %s29, 0
      %p213 = por %p211, %p212
      %s215 = sadd.s32 %s214, 1
      %p218 = scmp.eq.s32.totalorder %s23, 1
      %p219 = scmp.ne.s32.totalorder %s214, %s216
      %p220 = scmp.eq.s32.totalorder %s23, 0
      %p221 = por %p219, %p220
      %p222 = scmp.ne.s32.totalorder %s214, %s216
      %p223 = scmp.eq.s32.totalorder %s28, 1
      %p224 = por %p222, %p223
      %p225 = scmp.ne.s32.totalorder %s216, %s217
      %p226 = scmp.eq.s32.totalorder %s28, 0
      %p227 = por %p225, %p226
      %p228 = scmp.ne.s32.totalorder %s216, %s217
      %p229 = scmp.eq.s32.totalorder %s29, 1
      %p230 = por %p228, %p229
      %p232 = scmp.ne.s32.totalorder %s217, %s231
      %p233 = scmp.eq.s32.totalorder %s29, 0
      %p234 = por %p232, %p233
      %s235 = ssub.s32 %s23, %s30
      %p236 = scmp.eq.s32.totalorder %s235, 0
      %s238 = sadd.s32 %s237, 1
      %s239 = scalar_select %p236, %s237, %s238
      %p242 = pneg %p236
      %p243 = scmp.eq.s32.totalorder %s23, 1
      %p244 = por %p242, %p243
      %p245 = scmp.ne.s32.totalorder %s237, %s240
      %p246 = scmp.eq.s32.totalorder %s23, 0
      %p247 = por %p245, %p246
      %p248 = scmp.ne.s32.totalorder %s237, %s240
      %p249 = scmp.eq.s32.totalorder %s28, 1
      %p250 = por %p248, %p249
      %p251 = scmp.ne.s32.totalorder %s240, %s241
      %p252 = scmp.eq.s32.totalorder %s28, 0
      %p253 = por %p251, %p252
      %p254 = scmp.ne.s32.totalorder %s240, %s241
      %p255 = scmp.eq.s32.totalorder %s29, 1
      %p256 = por %p254, %p255
      %p258 = scmp.ne.s32.totalorder %s241, %s257
      %p259 = scmp.eq.s32.totalorder %s29, 0
      %p260 = por %p258, %p259
      %p261 = scmp.le.s32.totalorder 1, %s23
      %p262 = scmp.lt.s32.totalorder %s23, 3
      %p263 = pnand %p261, %p262
      %p264 = pneg %p263
      // Predicated region
      $region9: #{tpu_custom_call.1} parent=5 // pred_check
        _
      $region10: #{tpu_custom_call.1} parent=5 // pred_check_branch
        %266 = sbr.rel (%p263) target = $region12
      $region11: #{tpu_custom_call.1} parent=5 // pred_region
        %s267 = ssub.s32 %s23, 1
        // Predicated region
        $region13: #{tpu_custom_call.1} parent=11 // pred_check
          %p268 = pneg %p122
        $region14: #{tpu_custom_call.1} parent=11 // pred_check_branch
          %270 = sbr.rel (%p268) target = $region16
        $region15: #{tpu_custom_call.1} parent=11 // pred_region
          _
        $region16: #{tpu_custom_call.1} parent=11 // pred_fallthru
          _
        // Predicated region
        $region17: #{tpu_custom_call.1} parent=11 // pred_check
          %p271 = pneg %p143
        $region18: #{tpu_custom_call.1} parent=11 // pred_check_branch
          %273 = sbr.rel (%p271) target = $region20
        $region19: #{tpu_custom_call.1} parent=11 // pred_region
          %s275 = ssub.s32 512, 512
          %276 = vsyncadd [#allocation8], %s275
          %s277 = sshll.u32 [#allocation7], 4
          %s278 = int_to_ptr.vmem [resolvable:$true] %s277
          %283 = dma.hbm_to_vmem [thread:$0]  %s4, 512, %s278, [#allocation8], 64, 64, 4
        $region20: #{tpu_custom_call.1} parent=11 // pred_fallthru
          _
        // Predicated region
        $region21: #{tpu_custom_call.1} parent=11 // pred_check
          %p284 = pneg %p164
        $region22: #{tpu_custom_call.1} parent=11 // pred_check_branch
          %286 = sbr.rel (%p284) target = $region24
        $region23: #{tpu_custom_call.1} parent=11 // pred_region
          _
        $region24: #{tpu_custom_call.1} parent=11 // pred_fallthru
          _
        // Predicated region
        $region25: #{tpu_custom_call.1} parent=11 // pred_check
          %p287 = pneg %p185
        $region26: #{tpu_custom_call.1} parent=11 // pred_check_branch
          %289 = sbr.rel (%p287) target = $region28
        $region27: #{tpu_custom_call.1} parent=11 // pred_region
          _
        $region28: #{tpu_custom_call.1} parent=11 // pred_fallthru
          _
        // Predicated region
        $region29: #{tpu_custom_call.1} parent=11 // pred_check
          %p290 = pneg %p206
        $region30: #{tpu_custom_call.1} parent=11 // pred_check_branch
          %292 = sbr.rel (%p290) target = $region32
        $region31: #{tpu_custom_call.1} parent=11 // pred_region
          %s294 = ssub.s32 256, 256
          %295 = vsyncadd [#allocation8], %s294
          %s296 = sshll.u32 [#allocation9], 4
          %s297 = int_to_ptr.vmem [resolvable:$true] %s296
          %302 = dma.hbm_to_vmem [thread:$0]  %s7, 256, %s297, [#allocation8], 128, 128, 8
        $region32: #{tpu_custom_call.1} parent=11 // pred_fallthru
          _
        // Predicated region
        $region33: #{tpu_custom_call.1} parent=11 // pred_check
          %p303 = pneg %p227
        $region34: #{tpu_custom_call.1} parent=11 // pred_check_branch
          %305 = sbr.rel (%p303) target = $region36
        $region35: #{tpu_custom_call.1} parent=11 // pred_region
          %s307 = ssub.s32 256, 256
          %308 = vsyncadd [#allocation6], %s307
          %s309 = sshll.u32 %s8, 4
          %s310 = int_to_ptr.vmem [resolvable:$true] %s309
          %315 = dma.vmem_to_smem %s310, 256, [#allocation10], [#allocation6], 128, 128, 8
        $region36: #{tpu_custom_call.1} parent=11 // pred_fallthru
          _
      $region12: #{tpu_custom_call.1} parent=5 // pred_fallthru
        _
      %p316 = scmp.lt.s32.totalorder %s23, 2
      // Predicated region
      $region37: #{tpu_custom_call.1} parent=5 // pred_check
        %p317 = pneg %p316
      $region38: #{tpu_custom_call.1} parent=5 // pred_check_branch
        %319 = sbr.rel (%p317) target = $region40
      $region39: #{tpu_custom_call.1} parent=5 // pred_region
        // Predicated region
        $region41: #{tpu_custom_call.1} parent=39 // pred_check
          %p320 = pneg %p43
        $region42: #{tpu_custom_call.1} parent=39 // pred_check_branch
          %322 = sbr.rel (%p320) target = $region44
        $region43: #{tpu_custom_call.1} parent=39 // pred_region
          %p323 = scmp.lt.s32.totalorder %s23, 1
          %s324 = scalar_select %p323, %s23, 1
          %s325 = smul.addr %s324, 2
          %s326 = smul.addr %s325, 8
          %s327 = scalar_lea.vmem %s0, %s326
        $region44: #{tpu_custom_call.1} parent=39 // pred_fallthru
          _
        // Predicated region
        $region45: #{tpu_custom_call.1} parent=39 // pred_check
          %p328 = pneg %p69
        $region46: #{tpu_custom_call.1} parent=39 // pred_check_branch
          %330 = sbr.rel (%p328) target = $region48
        $region47: #{tpu_custom_call.1} parent=39 // pred_region
          %s331 = sand.u32 %s59, 1
          %s332 = scalar_lea.sflag [#allocation4], %s331
          %s333 = sand.u32 %s59, 1
          %s334 = smul.addr %s333, 128
          %s335 = scalar_lea.vmem [#allocation3], %s334
          %s337 = ssub.s32 2048, 2048
          %338 = vsyncadd %s332, %s337
          %s339 = smul.addr %s23, 16
          %s340 = smul.addr %s339, 128
          %s341 = scalar_lea.hbm %s1, %s340
          %s342 = sshll.u32 %s335, 4
          %s343 = int_to_ptr.vmem [resolvable:$true] %s342
          %348 = dma.hbm_to_vmem [thread:$0]  %s341, 2048, %s343, %s332, 128, 128, 8
        $region48: #{tpu_custom_call.1} parent=39 // pred_fallthru
          _
        // Predicated region
        $region49: #{tpu_custom_call.1} parent=39 // pred_check
          %p349 = pneg %p95
        $region50: #{tpu_custom_call.1} parent=39 // pred_check_branch
          %351 = sbr.rel (%p349) target = $region52
        $region51: #{tpu_custom_call.1} parent=39 // pred_region
          %p352 = scmp.lt.s32.totalorder %s23, 1
          %s353 = scalar_select %p352, %s23, 1
          %s354 = smul.addr %s353, 2
          %s355 = smul.addr %s354, 8
          %s356 = scalar_lea.vmem %s2, %s355
        $region52: #{tpu_custom_call.1} parent=39 // pred_fallthru
          _
      $region40: #{tpu_custom_call.1} parent=5 // pred_fallthru
        _
      %p357 = scmp.le.s32.totalorder 1, %s23
      %p358 = scmp.lt.s32.totalorder %s23, 3
      %p359 = pnand %p357, %p358
      %p360 = pneg %p359
      // Predicated region
      $region53: #{tpu_custom_call.1} parent=5 // pred_check
        _
      $region54: #{tpu_custom_call.1} parent=5 // pred_check_branch
        %362 = sbr.rel (%p359) target = $region56
      $region55: #{tpu_custom_call.1} parent=5 // pred_region
        %s363 = ssub.s32 %s23, 1
        %s364 = sand.u32 %s62, 1
        %s365 = scalar_lea.sflag [#allocation4], %s364
        %s366 = sand.u32 %s62, 1
        %s367 = smul.addr %s366, 128
        %s368 = scalar_lea.vmem [#allocation3], %s367
        // Predicated region
        $region57: #{tpu_custom_call.1} parent=55 // pred_check
          %p369 = pneg %p75
        $region58: #{tpu_custom_call.1} parent=55 // pred_check_branch
          %371 = sbr.rel (%p369) target = $region60
        $region59: #{tpu_custom_call.1} parent=55 // pred_region
          %372 = dma.done %s365, 2048
        $region60: #{tpu_custom_call.1} parent=55 // pred_fallthru
          _
        // Predicated region
        $region61: #{tpu_custom_call.1} parent=55 // pred_check
          %p373 = pneg %p143
        $region62: #{tpu_custom_call.1} parent=55 // pred_check_branch
          %375 = sbr.rel (%p373) target = $region64
        $region63: #{tpu_custom_call.1} parent=55 // pred_region
          %376 = dma.done [#allocation8], 512
        $region64: #{tpu_custom_call.1} parent=55 // pred_fallthru
          _
        // Predicated region
        $region65: #{tpu_custom_call.1} parent=55 // pred_check
          %p377 = pneg %p206
        $region66: #{tpu_custom_call.1} parent=55 // pred_check_branch
          %379 = sbr.rel (%p377) target = $region68
        $region67: #{tpu_custom_call.1} parent=55 // pred_region
          %380 = dma.done [#allocation8], 256
        $region68: #{tpu_custom_call.1} parent=55 // pred_fallthru
          _
        // Predicated region
        $region69: #{tpu_custom_call.1} parent=55 // pred_check
          %p381 = pneg %p227
        $region70: #{tpu_custom_call.1} parent=55 // pred_check_branch
          %383 = sbr.rel (%p381) target = $region72
        $region71: #{tpu_custom_call.1} parent=55 // pred_region
          %384 = dma.done [#allocation6], 256
        $region72: #{tpu_custom_call.1} parent=55 // pred_fallthru
          _
        %385 = sfence
        %p386 = scmp.lt.s32.totalorder %s28, 1
        %s387 = scalar_select %p386, %s28, 1
        %s388 = smul.addr %s387, 2
        %s389 = smul.addr %s388, 8
        %s390 = scalar_lea.vmem %s0, %s389
        %p391 = pneg %p49
        %p392 = pneg %p46
        %s393 = sand.u32 %s62, 1
        %s394 = scalar_lea.sflag [#allocation4], %s393
        %s395 = sand.u32 %s62, 1
        %s396 = smul.addr %s395, 128
        %s397 = scalar_lea.vmem [#allocation3], %s396
        %p398 = pneg %p75
        %p399 = pneg %p72
        %p400 = scmp.lt.s32.totalorder %s28, 1
        %s401 = scalar_select %p400, %s28, 1
        %s402 = smul.addr %s401, 2
        %s403 = smul.addr %s402, 8
        %s404 = scalar_lea.vmem %s2, %s403
        %p405 = pneg %p101
        %p406 = pneg %p98
        %p407 = pneg %p122
        %p408 = pneg %p119
        %p409 = pneg %p143
        %p410 = pneg %p140
        %p411 = pneg %p164
        %p412 = pneg %p161
        %p413 = pneg %p185
        %p414 = pneg %p182
        %p415 = pneg %p206
        %p416 = pneg %p203
        %p417 = pneg %p227
        %p418 = pneg %p224
        %p419 = pneg %p253
        %p420 = pneg %p250
        %s421 = sand.u32 %s240, 1
        %s422 = scalar_lea.sflag [#allocation5], %s421
        %s423 = sand.u32 %s240, 1
        %s424 = smul.addr %s423, 16
        %s425 = scalar_lea.vmem [#allocation11], %s424
        %p426 = scmp.lt.s32.totalorder %s28, 1
        %s427 = scalar_select %p426, %s28, 1
        %s428 = smul.addr %s427, 2
        %s429 = smul.addr %s428, 8
        %s430 = scalar_lea.vmem %s0, %s429
        %p431 = scmp.lt.s32.totalorder %s28, 1
        %s432 = scalar_select %p431, %s28, 1
        %s433 = smul.addr %s432, 2
        %s434 = smul.addr %s433, 8
        %s435 = scalar_lea.vmem %s2, %s434
        %v437 = vld [vmem:[%s368] sm:$0xff]
        %v438 = vld [vmem:[%s368 + $0x8] sm:$0xff]
        %s439 = scalar_lea.vmem %s368, 16 [#allocation3]
        %v440 = vld [vmem:[%s439] sm:$0xff]
        %v441 = vld [vmem:[%s439 + $0x8] sm:$0xff]
        %s442 = scalar_lea.vmem %s368, 32 [#allocation3]
        %v443 = vld [vmem:[%s442] sm:$0xff]
        %v444 = vld [vmem:[%s442 + $0x8] sm:$0xff]
        %s445 = scalar_lea.vmem %s368, 48 [#allocation3]
        %v446 = vld [vmem:[%s445] sm:$0xff]
        %v447 = vld [vmem:[%s445 + $0x8] sm:$0xff]
        %s448 = scalar_lea.vmem %s368, 64 [#allocation3]
        %v449 = vld [vmem:[%s448] sm:$0xff]
        %v450 = vld [vmem:[%s448 + $0x8] sm:$0xff]
        %s451 = scalar_lea.vmem %s368, 80 [#allocation3]
        %v452 = vld [vmem:[%s451] sm:$0xff]
        %v453 = vld [vmem:[%s451 + $0x8] sm:$0xff]
        %s454 = scalar_lea.vmem %s368, 96 [#allocation3]
        %v455 = vld [vmem:[%s454] sm:$0xff]
        %v456 = vld [vmem:[%s454 + $0x8] sm:$0xff]
        %s457 = scalar_lea.vmem %s368, 112 [#allocation3]
        %v458 = vld [vmem:[%s457] sm:$0xff]
        %v459 = vld [vmem:[%s457 + $0x8] sm:$0xff]
        %v460 = vadd.f32 %v437, %v440
        %v461 = vadd.f32 %v438, %v441
        %v462 = vadd.f32 %v460, %v443
        %v463 = vadd.f32 %v461, %v444
        %v464 = vadd.f32 %v462, %v446
        %v465 = vadd.f32 %v463, %v447
        %v466 = vadd.f32 %v464, %v449
        %v467 = vadd.f32 %v465, %v450
        %v468 = vadd.f32 %v466, %v452
        %v469 = vadd.f32 %v467, %v453
        %v470 = vadd.f32 %v468, %v455
        %v471 = vadd.f32 %v469, %v456
        %v472 = vadd.f32 %v470, %v458
        %v473 = vadd.f32 %v471, %v459
        %v474 = vmul.f32 %v472, 0.125
        %v475 = vmul.f32 %v473, 0.125
        %v476 = vsub.f32 %v437, %v474
        %v477 = vsub.f32 %v438, %v475
        %v478 = vmul.f32 %v476, %v476
        %v479 = vmul.f32 %v477, %v477
        %v480 = vsub.f32 %v440, %v474
        %v481 = vsub.f32 %v441, %v475
        %v482 = vmul.f32 %v480, %v480
        %v483 = vmul.f32 %v481, %v481
        %v484 = vadd.f32 %v478, %v482
        %v485 = vadd.f32 %v479, %v483
        %v486 = vsub.f32 %v443, %v474
        %v487 = vsub.f32 %v444, %v475
        %v488 = vmul.f32 %v486, %v486
        %v489 = vmul.f32 %v487, %v487
        %v490 = vadd.f32 %v484, %v488
        %v491 = vadd.f32 %v485, %v489
        %v492 = vsub.f32 %v446, %v474
        %v493 = vsub.f32 %v447, %v475
        %v494 = vmul.f32 %v492, %v492
        %v495 = vmul.f32 %v493, %v493
        %v496 = vadd.f32 %v490, %v494
        %v497 = vadd.f32 %v491, %v495
        %v498 = vsub.f32 %v449, %v474
        %v499 = vsub.f32 %v450, %v475
        %v500 = vmul.f32 %v498, %v498
        %v501 = vmul.f32 %v499, %v499
        %v502 = vadd.f32 %v496, %v500
        %v503 = vadd.f32 %v497, %v501
        %v504 = vsub.f32 %v452, %v474
        %v505 = vsub.f32 %v453, %v475
        %v506 = vmul.f32 %v504, %v504
        %v507 = vmul.f32 %v505, %v505
        %v508 = vadd.f32 %v502, %v506
        %v509 = vadd.f32 %v503, %v507
        %v510 = vsub.f32 %v455, %v474
        %v511 = vsub.f32 %v456, %v475
        %v512 = vmul.f32 %v510, %v510
        %v513 = vmul.f32 %v511, %v511
        %v514 = vadd.f32 %v508, %v512
        %v515 = vadd.f32 %v509, %v513
        %v516 = vsub.f32 %v458, %v474
        %v517 = vsub.f32 %v459, %v475
        %v518 = vmul.f32 %v516, %v516
        %v519 = vmul.f32 %v517, %v517
        %v520 = vadd.f32 %v514, %v518
        %v521 = vadd.f32 %v515, %v519
        %v522 = vmul.f32 %v520, 0.125
        %v523 = vmul.f32 %v521, 0.125
        %v524 = vadd.f32 %v522, 1e-05
        %v525 = vadd.f32 %v523, 1e-05
        %v526 = vrsqrt.pop %v524
        %v527 = vrsqrt.pop %v525
        %v528 = vmul.f32 %v476, %v526
        %v529 = vmul.f32 %v477, %v527
        %v530 = vmul.f32 %v480, %v526
        %v531 = vmul.f32 %v481, %v527
        %v532 = vmul.f32 %v486, %v526
        %v533 = vmul.f32 %v487, %v527
        %v534 = vmul.f32 %v492, %v526
        %v535 = vmul.f32 %v493, %v527
        %v536 = vmul.f32 %v498, %v526
        %v537 = vmul.f32 %v499, %v527
        %v538 = vmul.f32 %v504, %v526
        %v539 = vmul.f32 %v505, %v527
        %v540 = vmul.f32 %v510, %v526
        %v541 = vmul.f32 %v511, %v527
        %v542 = vmul.f32 %v516, %v526
        %v543 = vmul.f32 %v517, %v527
        %v544 = vld [vmem:[%s435] sm:$0xff]
        %v545 = vld [vmem:[%s435 + $0x8] sm:$0xff]
        %v546 = vsub.f32 %v544, 1.0
        %v547 = vsub.f32 %v545, 1.0
        %v548 = vmul.f32 %v546, 1e+09
        %v549 = vmul.f32 %v547, 1e+09
        %s550 = sld [smem:[#allocation10 + $0x400]]
        %v551 = vstv %s550
        %v552 = vadd.f32 %v548, %v551
        %v553 = vadd.f32 %v549, %v551
        %s554 = sld [smem:[#allocation10]]
        %v555 = vstv %s554
        %v556 = vmul.f32 %v528, %v555
        %v557 = vmul.f32 %v529, %v555
        %v558 = vadd.f32 %v552, %v556
        %v559 = vadd.f32 %v553, %v557
        %s560 = sld [smem:[#allocation10 + $0x80]]
        %v561 = vstv %s560
        %v562 = vmul.f32 %v530, %v561
        %v563 = vmul.f32 %v531, %v561
        %v564 = vadd.f32 %v558, %v562
        %v565 = vadd.f32 %v559, %v563
        %s566 = sld [smem:[#allocation10 + $0x100]]
        %v567 = vstv %s566
        %v568 = vmul.f32 %v532, %v567
        %v569 = vmul.f32 %v533, %v567
        %v570 = vadd.f32 %v564, %v568
        %v571 = vadd.f32 %v565, %v569
        %s572 = sld [smem:[#allocation10 + $0x180]]
        %v573 = vstv %s572
        %v574 = vmul.f32 %v534, %v573
        %v575 = vmul.f32 %v535, %v573
        %v576 = vadd.f32 %v570, %v574
        %v577 = vadd.f32 %v571, %v575
        %s578 = sld [smem:[#allocation10 + $0x200]]
        %v579 = vstv %s578
        %v580 = vmul.f32 %v536, %v579
        %v581 = vmul.f32 %v537, %v579
        %v582 = vadd.f32 %v576, %v580
        %v583 = vadd.f32 %v577, %v581
        %s584 = sld [smem:[#allocation10 + $0x280]]
        %v585 = vstv %s584
        %v586 = vmul.f32 %v538, %v585
        %v587 = vmul.f32 %v539, %v585
        %v588 = vadd.f32 %v582, %v586
        %v589 = vadd.f32 %v583, %v587
        %s590 = sld [smem:[#allocation10 + $0x300]]
        %v591 = vstv %s590
        %v592 = vmul.f32 %v540, %v591
        %v593 = vmul.f32 %v541, %v591
        %v594 = vadd.f32 %v588, %v592
        %v595 = vadd.f32 %v589, %v593
        %s596 = sld [smem:[#allocation10 + $0x380]]
        %v597 = vstv %s596
        %v598 = vmul.f32 %v542, %v597
        %v599 = vmul.f32 %v543, %v597
        %v600 = vadd.f32 %v594, %v598
        %v601 = vadd.f32 %v595, %v599
        %vm602 = vcmask 130048
        %603 = vst.msk [vmem:[#allocation2] sm:$0xff] %vm602, %v600
        %604 = vst.msk [vmem:[#allocation2 + $0x8] sm:$0xff] %vm602, %v601
        %s605 = sld [smem:[#allocation10 + $0x401]]
        %v606 = vstv %s605
        %v607 = vadd.f32 %v548, %v606
        %v608 = vadd.f32 %v549, %v606
        %s609 = sld [smem:[#allocation10 + $0x1]]
        %v610 = vstv %s609
        %v611 = vmul.f32 %v528, %v610
        %v612 = vmul.f32 %v529, %v610
        %v613 = vadd.f32 %v607, %v611
        %v614 = vadd.f32 %v608, %v612
        %s615 = sld [smem:[#allocation10 + $0x81]]
        %v616 = vstv %s615
        %v617 = vmul.f32 %v530, %v616
        %v618 = vmul.f32 %v531, %v616
        %v619 = vadd.f32 %v613, %v617
        %v620 = vadd.f32 %v614, %v618
        %s621 = sld [smem:[#allocation10 + $0x101]]
        %v622 = vstv %s621
        %v623 = vmul.f32 %v532, %v622
        %v624 = vmul.f32 %v533, %v622
        %v625 = vadd.f32 %v619, %v623
        %v626 = vadd.f32 %v620, %v624
        %s627 = sld [smem:[#allocation10 + $0x181]]
        %v628 = vstv %s627
        %v629 = vmul.f32 %v534, %v628
        %v630 = vmul.f32 %v535, %v628
        %v631 = vadd.f32 %v625, %v629
        %v632 = vadd.f32 %v626, %v630
        %s633 = sld [smem:[#allocation10 + $0x201]]
        %v634 = vstv %s633
        %v635 = vmul.f32 %v536, %v634
        %v636 = vmul.f32 %v537, %v634
        %v637 = vadd.f32 %v631, %v635
        %v638 = vadd.f32 %v632, %v636
        %s639 = sld [smem:[#allocation10 + $0x281]]
        %v640 = vstv %s639
        %v641 = vmul.f32 %v538, %v640
        %v642 = vmul.f32 %v539, %v640
        %v643 = vadd.f32 %v637, %v641
        %v644 = vadd.f32 %v638, %v642
        %s645 = sld [smem:[#allocation10 + $0x301]]
        %v646 = vstv %s645
        %v647 = vmul.f32 %v540, %v646
        %v648 = vmul.f32 %v541, %v646
        %v649 = vadd.f32 %v643, %v647
        %v650 = vadd.f32 %v644, %v648
        %s651 = sld [smem:[#allocation10 + $0x381]]
        %v652 = vstv %s651
        %v653 = vmul.f32 %v542, %v652
        %v654 = vmul.f32 %v543, %v652
        %v655 = vadd.f32 %v649, %v653
        %v656 = vadd.f32 %v650, %v654
        %s657 = scalar_lea.vmem [#allocation2], 16
        %658 = vst.msk [vmem:[%s657] sm:$0xff] %vm602, %v655
        %659 = vst.msk [vmem:[%s657 + $0x8] sm:$0xff] %vm602, %v656
        %s660 = sld [smem:[#allocation10 + $0x402]]
        %v661 = vstv %s660
        %v662 = vadd.f32 %v548, %v661
        %v663 = vadd.f32 %v549, %v661
        %s664 = sld [smem:[#allocation10 + $0x2]]
        %v665 = vstv %s664
        %v666 = vmul.f32 %v528, %v665
        %v667 = vmul.f32 %v529, %v665
        %v668 = vadd.f32 %v662, %v666
        %v669 = vadd.f32 %v663, %v667
        %s670 = sld [smem:[#allocation10 + $0x82]]
        %v671 = vstv %s670
        %v672 = vmul.f32 %v530, %v671
        %v673 = vmul.f32 %v531, %v671
        %v674 = vadd.f32 %v668, %v672
        %v675 = vadd.f32 %v669, %v673
        %s676 = sld [smem:[#allocation10 + $0x102]]
        %v677 = vstv %s676
        %v678 = vmul.f32 %v532, %v677
        %v679 = vmul.f32 %v533, %v677
        %v680 = vadd.f32 %v674, %v678
        %v681 = vadd.f32 %v675, %v679
        %s682 = sld [smem:[#allocation10 + $0x182]]
        %v683 = vstv %s682
        %v684 = vmul.f32 %v534, %v683
        %v685 = vmul.f32 %v535, %v683
        %v686 = vadd.f32 %v680, %v684
        %v687 = vadd.f32 %v681, %v685
        %s688 = sld [smem:[#allocation10 + $0x202]]
        %v689 = vstv %s688
        %v690 = vmul.f32 %v536, %v689
        %v691 = vmul.f32 %v537, %v689
        %v692 = vadd.f32 %v686, %v690
        %v693 = vadd.f32 %v687, %v691
        %s694 = sld [smem:[#allocation10 + $0x282]]
        %v695 = vstv %s694
        %v696 = vmul.f32 %v538, %v695
        %v697 = vmul.f32 %v539, %v695
        %v698 = vadd.f32 %v692, %v696
        %v699 = vadd.f32 %v693, %v697
        %s700 = sld [smem:[#allocation10 + $0x302]]
        %v701 = vstv %s700
        %v702 = vmul.f32 %v540, %v701
        %v703 = vmul.f32 %v541, %v701
        %v704 = vadd.f32 %v698, %v702
        %v705 = vadd.f32 %v699, %v703
        %s706 = sld [smem:[#allocation10 + $0x382]]
        %v707 = vstv %s706
        %v708 = vmul.f32 %v542, %v707
        %v709 = vmul.f32 %v543, %v707
        %v710 = vadd.f32 %v704, %v708
        %v711 = vadd.f32 %v705, %v709
        %s712 = scalar_lea.vmem [#allocation2], 32
        %713 = vst.msk [vmem:[%s712] sm:$0xff] %vm602, %v710
        %714 = vst.msk [vmem:[%s712 + $0x8] sm:$0xff] %vm602, %v711
        %s715 = sld [smem:[#allocation10 + $0x403]]
        %v716 = vstv %s715
        %v717 = vadd.f32 %v548, %v716
        %v718 = vadd.f32 %v549, %v716
        %s719 = sld [smem:[#allocation10 + $0x3]]
        %v720 = vstv %s719
        %v721 = vmul.f32 %v528, %v720
        %v722 = vmul.f32 %v529, %v720
        %v723 = vadd.f32 %v717, %v721
        %v724 = vadd.f32 %v718, %v722
        %s725 = sld [smem:[#allocation10 + $0x83]]
        %v726 = vstv %s725
        %v727 = vmul.f32 %v530, %v726
        %v728 = vmul.f32 %v531, %v726
        %v729 = vadd.f32 %v723, %v727
        %v730 = vadd.f32 %v724, %v728
        %s731 = sld [smem:[#allocation10 + $0x103]]
        %v732 = vstv %s731
        %v733 = vmul.f32 %v532, %v732
        %v734 = vmul.f32 %v533, %v732
        %v735 = vadd.f32 %v729, %v733
        %v736 = vadd.f32 %v730, %v734
        %s737 = sld [smem:[#allocation10 + $0x183]]
        %v738 = vstv %s737
        %v739 = vmul.f32 %v534, %v738
        %v740 = vmul.f32 %v535, %v738
        %v741 = vadd.f32 %v735, %v739
        %v742 = vadd.f32 %v736, %v740
        %s743 = sld [smem:[#allocation10 + $0x203]]
        %v744 = vstv %s743
        %v745 = vmul.f32 %v536, %v744
        %v746 = vmul.f32 %v537, %v744
        %v747 = vadd.f32 %v741, %v745
        %v748 = vadd.f32 %v742, %v746
        %s749 = sld [smem:[#allocation10 + $0x283]]
        %v750 = vstv %s749
        %v751 = vmul.f32 %v538, %v750
        %v752 = vmul.f32 %v539, %v750
        %v753 = vadd.f32 %v747, %v751
        %v754 = vadd.f32 %v748, %v752
        %s755 = sld [smem:[#allocation10 + $0x303]]
        %v756 = vstv %s755
        %v757 = vmul.f32 %v540, %v756
        %v758 = vmul.f32 %v541, %v756
        %v759 = vadd.f32 %v753, %v757
        %v760 = vadd.f32 %v754, %v758
        %s761 = sld [smem:[#allocation10 + $0x383]]
        %v762 = vstv %s761
        %v763 = vmul.f32 %v542, %v762
        %v764 = vmul.f32 %v543, %v762
        %v765 = vadd.f32 %v759, %v763
        %v766 = vadd.f32 %v760, %v764
        %s767 = scalar_lea.vmem [#allocation2], 48
        %768 = vst.msk [vmem:[%s767] sm:$0xff] %vm602, %v765
        %769 = vst.msk [vmem:[%s767 + $0x8] sm:$0xff] %vm602, %v766
        %s770 = sld [smem:[#allocation10 + $0x404]]
        %v771 = vstv %s770
        %v772 = vadd.f32 %v548, %v771
        %v773 = vadd.f32 %v549, %v771
        %s774 = sld [smem:[#allocation10 + $0x4]]
        %v775 = vstv %s774
        %v776 = vmul.f32 %v528, %v775
        %v777 = vmul.f32 %v529, %v775
        %v778 = vadd.f32 %v772, %v776
        %v779 = vadd.f32 %v773, %v777
        %s780 = sld [smem:[#allocation10 + $0x84]]
        %v781 = vstv %s780
        %v782 = vmul.f32 %v530, %v781
        %v783 = vmul.f32 %v531, %v781
        %v784 = vadd.f32 %v778, %v782
        %v785 = vadd.f32 %v779, %v783
        %s786 = sld [smem:[#allocation10 + $0x104]]
        %v787 = vstv %s786
        %v788 = vmul.f32 %v532, %v787
        %v789 = vmul.f32 %v533, %v787
        %v790 = vadd.f32 %v784, %v788
        %v791 = vadd.f32 %v785, %v789
        %s792 = sld [smem:[#allocation10 + $0x184]]
        %v793 = vstv %s792
        %v794 = vmul.f32 %v534, %v793
        %v795 = vmul.f32 %v535, %v793
        %v796 = vadd.f32 %v790, %v794
        %v797 = vadd.f32 %v791, %v795
        %s798 = sld [smem:[#allocation10 + $0x204]]
        %v799 = vstv %s798
        %v800 = vmul.f32 %v536, %v799
        %v801 = vmul.f32 %v537, %v799
        %v802 = vadd.f32 %v796, %v800
        %v803 = vadd.f32 %v797, %v801
        %s804 = sld [smem:[#allocation10 + $0x284]]
        %v805 = vstv %s804
        %v806 = vmul.f32 %v538, %v805
        %v807 = vmul.f32 %v539, %v805
        %v808 = vadd.f32 %v802, %v806
        %v809 = vadd.f32 %v803, %v807
        %s810 = sld [smem:[#allocation10 + $0x304]]
        %v811 = vstv %s810
        %v812 = vmul.f32 %v540, %v811
        %v813 = vmul.f32 %v541, %v811
        %v814 = vadd.f32 %v808, %v812
        %v815 = vadd.f32 %v809, %v813
        %s816 = sld [smem:[#allocation10 + $0x384]]
        %v817 = vstv %s816
        %v818 = vmul.f32 %v542, %v817
        %v819 = vmul.f32 %v543, %v817
        %v820 = vadd.f32 %v814, %v818
        %v821 = vadd.f32 %v815, %v819
        %s822 = scalar_lea.vmem [#allocation2], 64
        %823 = vst.msk [vmem:[%s822] sm:$0xff] %vm602, %v820
        %824 = vst.msk [vmem:[%s822 + $0x8] sm:$0xff] %vm602, %v821
        %s825 = sld [smem:[#allocation10 + $0x405]]
        %v826 = vstv %s825
        %v827 = vadd.f32 %v548, %v826
        %v828 = vadd.f32 %v549, %v826
        %s829 = sld [smem:[#allocation10 + $0x5]]
        %v830 = vstv %s829
        %v831 = vmul.f32 %v528, %v830
        %v832 = vmul.f32 %v529, %v830
        %v833 = vadd.f32 %v827, %v831
        %v834 = vadd.f32 %v828, %v832
        %s835 = sld [smem:[#allocation10 + $0x85]]
        %v836 = vstv %s835
        %v837 = vmul.f32 %v530, %v836
        %v838 = vmul.f32 %v531, %v836
        %v839 = vadd.f32 %v833, %v837
        %v840 = vadd.f32 %v834, %v838
        %s841 = sld [smem:[#allocation10 + $0x105]]
        %v842 = vstv %s841
        %v843 = vmul.f32 %v532, %v842
        %v844 = vmul.f32 %v533, %v842
        %v845 = vadd.f32 %v839, %v843
        %v846 = vadd.f32 %v840, %v844
        %s847 = sld [smem:[#allocation10 + $0x185]]
        %v848 = vstv %s847
        %v849 = vmul.f32 %v534, %v848
        %v850 = vmul.f32 %v535, %v848
        %v851 = vadd.f32 %v845, %v849
        %v852 = vadd.f32 %v846, %v850
        %s853 = sld [smem:[#allocation10 + $0x205]]
        %v854 = vstv %s853
        %v855 = vmul.f32 %v536, %v854
        %v856 = vmul.f32 %v537, %v854
        %v857 = vadd.f32 %v851, %v855
        %v858 = vadd.f32 %v852, %v856
        %s859 = sld [smem:[#allocation10 + $0x285]]
        %v860 = vstv %s859
        %v861 = vmul.f32 %v538, %v860
        %v862 = vmul.f32 %v539, %v860
        %v863 = vadd.f32 %v857, %v861
        %v864 = vadd.f32 %v858, %v862
        %s865 = sld [smem:[#allocation10 + $0x305]]
        %v866 = vstv %s865
        %v867 = vmul.f32 %v540, %v866
        %v868 = vmul.f32 %v541, %v866
        %v869 = vadd.f32 %v863, %v867
        %v870 = vadd.f32 %v864, %v868
        %s871 = sld [smem:[#allocation10 + $0x385]]
        %v872 = vstv %s871
        %v873 = vmul.f32 %v542, %v872
        %v874 = vmul.f32 %v543, %v872
        %v875 = vadd.f32 %v869, %v873
        %v876 = vadd.f32 %v870, %v874
        %s877 = scalar_lea.vmem [#allocation2], 80
        %878 = vst.msk [vmem:[%s877] sm:$0xff] %vm602, %v875
        %879 = vst.msk [vmem:[%s877 + $0x8] sm:$0xff] %vm602, %v876
        %s880 = sld [smem:[#allocation10 + $0x406]]
        %v881 = vstv %s880
        %v882 = vadd.f32 %v548, %v881
        %v883 = vadd.f32 %v549, %v881
        %s884 = sld [smem:[#allocation10 + $0x6]]
        %v885 = vstv %s884
        %v886 = vmul.f32 %v528, %v885
        %v887 = vmul.f32 %v529, %v885
        %v888 = vadd.f32 %v882, %v886
        %v889 = vadd.f32 %v883, %v887
        %s890 = sld [smem:[#allocation10 + $0x86]]
        %v891 = vstv %s890
        %v892 = vmul.f32 %v530, %v891
        %v893 = vmul.f32 %v531, %v891
        %v894 = vadd.f32 %v888, %v892
        %v895 = vadd.f32 %v889, %v893
        %s896 = sld [smem:[#allocation10 + $0x106]]
        %v897 = vstv %s896
        %v898 = vmul.f32 %v532, %v897
        %v899 = vmul.f32 %v533, %v897
        %v900 = vadd.f32 %v894, %v898
        %v901 = vadd.f32 %v895, %v899
        %s902 = sld [smem:[#allocation10 + $0x186]]
        %v903 = vstv %s902
        %v904 = vmul.f32 %v534, %v903
        %v905 = vmul.f32 %v535, %v903
        %v906 = vadd.f32 %v900, %v904
        %v907 = vadd.f32 %v901, %v905
        %s908 = sld [smem:[#allocation10 + $0x206]]
        %v909 = vstv %s908
        %v910 = vmul.f32 %v536, %v909
        %v911 = vmul.f32 %v537, %v909
        %v912 = vadd.f32 %v906, %v910
        %v913 = vadd.f32 %v907, %v911
        %s914 = sld [smem:[#allocation10 + $0x286]]
        %v915 = vstv %s914
        %v916 = vmul.f32 %v538, %v915
        %v917 = vmul.f32 %v539, %v915
        %v918 = vadd.f32 %v912, %v916
        %v919 = vadd.f32 %v913, %v917
        %s920 = sld [smem:[#allocation10 + $0x306]]
        %v921 = vstv %s920
        %v922 = vmul.f32 %v540, %v921
        %v923 = vmul.f32 %v541, %v921
        %v924 = vadd.f32 %v918, %v922
        %v925 = vadd.f32 %v919, %v923
        %s926 = sld [smem:[#allocation10 + $0x386]]
        %v927 = vstv %s926
        %v928 = vmul.f32 %v542, %v927
        %v929 = vmul.f32 %v543, %v927
        %v930 = vadd.f32 %v924, %v928
        %v931 = vadd.f32 %v925, %v929
        %s932 = scalar_lea.vmem [#allocation2], 96
        %933 = vst.msk [vmem:[%s932] sm:$0xff] %vm602, %v930
        %934 = vst.msk [vmem:[%s932 + $0x8] sm:$0xff] %vm602, %v931
        %s935 = sld [smem:[#allocation10 + $0x407]]
        %v936 = vstv %s935
        %v937 = vadd.f32 %v548, %v936
        %v938 = vadd.f32 %v549, %v936
        %s939 = sld [smem:[#allocation10 + $0x7]]
        %v940 = vstv %s939
        %v941 = vmul.f32 %v528, %v940
        %v942 = vmul.f32 %v529, %v940
        %v943 = vadd.f32 %v937, %v941
        %v944 = vadd.f32 %v938, %v942
        %s945 = sld [smem:[#allocation10 + $0x87]]
        %v946 = vstv %s945
        %v947 = vmul.f32 %v530, %v946
        %v948 = vmul.f32 %v531, %v946
        %v949 = vadd.f32 %v943, %v947
        %v950 = vadd.f32 %v944, %v948
        %s951 = sld [smem:[#allocation10 + $0x107]]
        %v952 = vstv %s951
        %v953 = vmul.f32 %v532, %v952
        %v954 = vmul.f32 %v533, %v952
        %v955 = vadd.f32 %v949, %v953
        %v956 = vadd.f32 %v950, %v954
        %s957 = sld [smem:[#allocation10 + $0x187]]
        %v958 = vstv %s957
        %v959 = vmul.f32 %v534, %v958
        %v960 = vmul.f32 %v535, %v958
        %v961 = vadd.f32 %v955, %v959
        %v962 = vadd.f32 %v956, %v960
        %s963 = sld [smem:[#allocation10 + $0x207]]
        %v964 = vstv %s963
        %v965 = vmul.f32 %v536, %v964
        %v966 = vmul.f32 %v537, %v964
        %v967 = vadd.f32 %v961, %v965
        %v968 = vadd.f32 %v962, %v966
        %s969 = sld [smem:[#allocation10 + $0x287]]
        %v970 = vstv %s969
        %v971 = vmul.f32 %v538, %v970
        %v972 = vmul.f32 %v539, %v970
        %v973 = vadd.f32 %v967, %v971
        %v974 = vadd.f32 %v968, %v972
        %s975 = sld [smem:[#allocation10 + $0x307]]
        %v976 = vstv %s975
        %v977 = vmul.f32 %v540, %v976
        %v978 = vmul.f32 %v541, %v976
        %v979 = vadd.f32 %v973, %v977
        %v980 = vadd.f32 %v974, %v978
        %s981 = sld [smem:[#allocation10 + $0x387]]
        %v982 = vstv %s981
        %v983 = vmul.f32 %v542, %v982
        %v984 = vmul.f32 %v543, %v982
        %v985 = vadd.f32 %v979, %v983
        %v986 = vadd.f32 %v980, %v984
        %s987 = scalar_lea.vmem [#allocation2], 112
        %988 = vst.msk [vmem:[%s987] sm:$0xff] %vm602, %v985
        %989 = vst.msk [vmem:[%s987 + $0x8] sm:$0xff] %vm602, %v986
        %v990 = vld [vmem:[%s430] sm:$0xff]
        %v991 = vld [vmem:[%s430 + $0x8] sm:$0xff]
        %v992 = vld [vmem:[#allocation9] sm:$0xff]
        %vm993 = vcmask 261120
        %v994 = vsel %vm993, %v990, 0.0
        %995 = vadd.xlane.f32.xlu0 %v994
        %v996 = vpop.xlane.xlu0 %995
        %v997 = vsel %vm993, %v991, 0.0
        %998 = vadd.xlane.f32.xlu0 %v997
        %v999 = vpop.xlane.xlu0 %998
        %v1000 = vrcp.pop 32.0
        %v1001 = vmul.f32 %v996, %v1000
        %v1002 = vmul.f32 %v999, %v1000
        %v1003 = vsub.f32 %v990, %v1001
        %v1004 = vsub.f32 %v991, %v1002
        %v1005 = vmul.f32 %v1003, %v1003
        %v1006 = vmul.f32 %v1004, %v1004
        %v1007 = vsel %vm993, %v1005, 0.0
        %1008 = vadd.xlane.f32.xlu0 %v1007
        %v1009 = vpop.xlane.xlu0 %1008
        %v1010 = vsel %vm993, %v1006, 0.0
        %1011 = vadd.xlane.f32.xlu0 %v1010
        %v1012 = vpop.xlane.xlu0 %1011
        %v1013 = vmul.f32 %v1009, %v1000
        %v1014 = vmul.f32 %v1012, %v1000
        %v1015 = vadd.f32 %v1013, 1e-05
        %v1016 = vadd.f32 %v1014, 1e-05
        %v1017 = vrsqrt.pop %v1015
        %v1018 = vrsqrt.pop %v1016
        %v1019 = vmul.f32 %v1003, %v1017
        %v1020 = vmul.f32 %v1004, %v1018
        %v1021 = vlaneseq
        %v1022 = vshrl.u32 %v1021, 7
        %v1023 = vsub.s32 0, %v1022
        %v1024 = vrot.slane %v992, %v1023
        %v1025 = vmul.f32 %v1019, %v1024
        %v1026 = vmul.f32 %v1020, %v1024
        %v1027 = vlaneseq
        %v1028 = vshrl.u32 %v1027, 7
        %v1029 = vsub.s32 1, %v1028
        %v1030 = vrot.slane %v992, %v1029
        %v1031 = vadd.f32 %v1025, %v1030
        %v1032 = vadd.f32 %v1026, %v1030
        %v1033 = vpack.c.bf16 %v1032, %v1031
        %v1034 = vld [vmem:[%s3] sm:$0xf]
        %v1035 = vld [vmem:[%s3 + $0x4] sm:$0xf]
        %v1036 = vld [vmem:[%s3 + $0x8] sm:$0xf]
        %v1037 = vld [vmem:[%s3 + $0xc] sm:$0xf]
        %v1038 = vlaneseq
        %v1039 = vshrl.u32 %v1038, 7
        %v1040 = vsub.s32 2, %v1039
        %v1041 = vrot.slane %v992, %v1040
        %v1046 = vunpack.c.l.b16 %v1034
        %v1047 = vunpack.c.l.b16 %v1035
        %v1048 = vunpack.c.l.b16 %v1036
        %v1049 = vunpack.c.l.b16 %v1037
        %v1050 = vpack.c.b16 %v1047, %v1046
        %v1051 = vpack.c.b16 %v1049, %v1048
        %v1055 = vsel %vm993, %v1033, 0
        %1057 = vmatprep.subr.bf16.mxu0 0
        %1058 = vmatpush1.bf16.msra.mxu0 0
        %1059 = vmatprep.subr.bf16.mxu0 0
        %1060 = vmatpush1.bf16.msra.mxu0 0
        %1061 = vmatprep.subr.bf16.mxu0 0
        %1062 = vmatpush1.bf16.msra.mxu0 0
        %1063 = vmatprep.subr.bf16.mxu0 0
        %1064 = vmatpush1.bf16.msra.mxu0 0
        %1065 = vmatprep.subr.bf16.mxu0 0
        %1066 = vmatpush1.bf16.msra.mxu0 0
        %1067 = vmatprep.subr.bf16.mxu0 0
        %1068 = vmatpush1.bf16.msra.mxu0 0
        %1069 = vmatprep.subr.bf16.mxu0 0
        %1070 = vmatpush1.bf16.msra.mxu0 %v1051
        %1071 = vmatprep.subr.bf16.mxu0 0
        %1072 = vmatpush1.bf16.msra.mxu0 %v1050
        %1073 = vmatprep.subr.bf16.mxu0 0
        %1074 = vmatpush2.bf16.msra.mxu0 0
        %1075 = vmatprep.subr.bf16.mxu0 0
        %1076 = vmatpush2.bf16.msra.mxu0 0
        %1077 = vmatprep.subr.bf16.mxu0 0
        %1078 = vmatpush2.bf16.msra.mxu0 0
        %1079 = vmatprep.subr.bf16.mxu0 0
        %1080 = vmatpush2.bf16.msra.mxu0 0
        %1081 = vmatprep.subr.bf16.mxu0 0
        %1082 = vmatpush2.bf16.msra.mxu0 0
        %1083 = vmatprep.subr.bf16.mxu0 0
        %1084 = vmatpush2.bf16.msra.mxu0 0
        %1085 = vmatprep.subr.bf16.mxu0 0
        %1086 = vmatpush2.bf16.msra.mxu0 0
        %1087 = vmatprep.subr.bf16.mxu0 0
        %1088 = vmatpush2.bf16.msra.mxu0 0
        %1089 = vmatprep.mubr.bf16.mxu0 0
        %1090 = vmatmul.mubr.bf16.gmra.mxu0 %v1055
        %v1091 = vpop.f32.mrf.mxu0
        %v1092 = vadd.f32 %v1041, %v1091
        %v1093 = vpop.f32.mrf.mxu0
        %v1094 = vpop.f32.mrf.mxu0
        %v1095 = vadd.f32 %v1041, %v1094
        %v1096 = vpop.f32.mrf.mxu0
        %1097 = vdwg.mxu0
        %v1098 = vxor.u32 %v1092, 2147483648
        %v1099 = vxor.u32 %v1095, 2147483648
        %v1100 = vmul.f32 %v1098, 1.442695
        %v1101 = vpow.pop %v1100
        %v1102 = vmul.f32 %v1099, 1.442695
        %v1103 = vpow.pop %v1102
        %v1104 = vadd.f32 %v1101, 1.0
        %v1105 = vadd.f32 %v1103, 1.0
        %v1106 = vrcp.pop %v1104
        %v1107 = vmul.f32 1.0, %v1106
        %v1108 = vrcp.pop %v1105
        %v1109 = vmul.f32 1.0, %v1108
        %v1110 = vld [vmem:[#allocation7] sm:$0xf]
        %v1111 = vld [vmem:[#allocation7 + $0x4] sm:$0xf]
        %v1112 = vld [vmem:[#allocation7 + $0x8] sm:$0xf]
        %v1113 = vld [vmem:[#allocation7 + $0xc] sm:$0xf]
        %v1114 = vpack.c.bf16 %v1095, %v1092
        %v1115 = vld [vmem:[#allocation2] sm:$0xff]
        %v1116 = vld [vmem:[#allocation2 + $0x8] sm:$0xff]
        %1118 = vrot.lane.b32.xlu0 %v1114, 96
        %v1119 = vpop.permute.xlu0 %1118
        %vm1120 = vcmask 64512
        %v1122 = vsel %vm1120, %v1114, 0
        %v1125 = vsel %vm1120, %v1119, 0
        %1127 = vmatprep.subr.bf16.mxu0 0
        %1128 = vmatpush1.bf16.xpose.msra.mxu0 0
        %1129 = vmatprep.subr.bf16.mxu0 0
        %1130 = vmatpush1.bf16.xpose.msra.mxu0 0
        %1131 = vmatprep.subr.bf16.mxu0 0
        %1132 = vmatpush1.bf16.xpose.msra.mxu0 0
        %1133 = vmatprep.subr.bf16.mxu0 0
        %1134 = vmatpush1.bf16.xpose.msra.mxu0 0
        %1135 = vmatprep.subr.bf16.mxu0 0
        %1136 = vmatpush1.bf16.xpose.msra.mxu0 0
        %1137 = vmatprep.subr.bf16.mxu0 0
        %1138 = vmatpush1.bf16.xpose.msra.mxu0 0
        %1139 = vmatprep.subr.bf16.mxu0 0
        %1140 = vmatpush1.bf16.xpose.msra.mxu0 0
        %1141 = vmatprep.subr.bf16.mxu0 0
        %1142 = vmatpush1.bf16.xpose.msra.mxu0 %v1125
        %1143 = vmatprep.subr.bf16.mxu0 0
        %1144 = vmatpush2.bf16.xpose.msra.mxu0 0
        %1145 = vmatprep.subr.bf16.mxu0 0
        %1146 = vmatpush2.bf16.xpose.msra.mxu0 0
        %1147 = vmatprep.subr.bf16.mxu0 0
        %1148 = vmatpush2.bf16.xpose.msra.mxu0 0
        %1149 = vmatprep.subr.bf16.mxu0 0
        %1150 = vmatpush2.bf16.xpose.msra.mxu0 0
        %1151 = vmatprep.subr.bf16.mxu0 0
        %1152 = vmatpush2.bf16.xpose.msra.mxu0 0
        %1153 = vmatprep.subr.bf16.mxu0 0
        %1154 = vmatpush2.bf16.xpose.msra.mxu0 0
        %1155 = vmatprep.subr.bf16.mxu0 0
        %1156 = vmatpush2.bf16.xpose.msra.mxu0 0
        %1157 = vmatprep.subr.bf16.mxu0 0
        %1158 = vmatpush2.bf16.xpose.msra.mxu0 0
        %1159 = vmatprep.mubr.bf16.mxu0 0
        %1160 = vmatmul.mubr.bf16.gmra.mxu0 %v1122
        %v1161 = vpop.f32.mrf.mxu0
        %v1162 = vadd.f32 %v1115, %v1161
        %v1163 = vpop.f32.mrf.mxu0
        %v1164 = vpop.f32.mrf.mxu0
        %v1165 = vadd.f32 %v1116, %v1164
        %v1166 = vpop.f32.mrf.mxu0
        %1167 = vdwg.mxu0
        %v1168 = vsel %vm602, %v1162, -inf
        %1169 = vmax.xlane.f32.xlu0 %v1168
        %v1170 = vpop.xlane.xlu0 %1169
        %v1171 = vsel %vm602, %v1165, -inf
        %1172 = vmax.xlane.f32.xlu0 %v1171
        %v1173 = vpop.xlane.xlu0 %1172
        %v1174 = vsub.f32 %v1162, %v1170
        %v1175 = vsub.f32 %v1165, %v1173
        %v1176 = vmul.f32 %v1174, 1.442695
        %v1177 = vpow.pop %v1176
        %v1178 = vmul.f32 %v1175, 1.442695
        %v1179 = vpow.pop %v1178
        %v1180 = vsel %vm602, %v1177, 0.0
        %1181 = vadd.xlane.f32.xlu0 %v1180
        %v1182 = vpop.xlane.xlu0 %1181
        %v1183 = vsel %vm602, %v1179, 0.0
        %1184 = vadd.xlane.f32.xlu0 %v1183
        %v1185 = vpop.xlane.xlu0 %1184
        %v1186 = vrcp.pop %v1182
        %v1187 = vrcp.pop %v1185
        %v1188 = vmul.f32 %v1177, %v1186
        %v1189 = vmul.f32 %v1179, %v1187
        %v1190 = vpack.c.bf16 %v1189, %v1188
        %1191 = vrot.lane.b32.xlu0 %v1114, 64
        %v1192 = vpop.permute.xlu0 %1191
        %v1195 = vsel %vm602, %v1190, 0
        %1197 = vmatprep.subr.bf16.mxu0 0
        %1198 = vmatpush1.bf16.msra.mxu0 0
        %1199 = vmatprep.subr.bf16.mxu0 0
        %1200 = vmatpush1.bf16.msra.mxu0 0
        %1201 = vmatprep.subr.bf16.mxu0 0
        %1202 = vmatpush1.bf16.msra.mxu0 0
        %1203 = vmatprep.subr.bf16.mxu0 0
        %1204 = vmatpush1.bf16.msra.mxu0 0
        %1205 = vmatprep.subr.bf16.mxu0 0
        %1206 = vmatpush1.bf16.msra.mxu0 0
        %1207 = vmatprep.subr.bf16.mxu0 0
        %1208 = vmatpush1.bf16.msra.mxu0 0
        %1209 = vmatprep.subr.bf16.mxu0 0
        %1210 = vmatpush1.bf16.msra.mxu0 0
        %1211 = vmatprep.subr.bf16.mxu0 0
        %1212 = vmatpush1.bf16.msra.mxu0 %v1192
        %1213 = vmatprep.subr.bf16.mxu0 0
        %1214 = vmatpush2.bf16.msra.mxu0 0
        %1215 = vmatprep.subr.bf16.mxu0 0
        %1216 = vmatpush2.bf16.msra.mxu0 0
        %1217 = vmatprep.subr.bf16.mxu0 0
        %1218 = vmatpush2.bf16.msra.mxu0 0
        %1219 = vmatprep.subr.bf16.mxu0 0
        %1220 = vmatpush2.bf16.msra.mxu0 0
        %1221 = vmatprep.subr.bf16.mxu0 0
        %1222 = vmatpush2.bf16.msra.mxu0 0
        %1223 = vmatprep.subr.bf16.mxu0 0
        %1224 = vmatpush2.bf16.msra.mxu0 0
        %1225 = vmatprep.subr.bf16.mxu0 0
        %1226 = vmatpush2.bf16.msra.mxu0 0
        %1227 = vmatprep.subr.bf16.mxu0 0
        %1228 = vmatpush2.bf16.msra.mxu0 0
        %1229 = vmatprep.mubr.bf16.mxu0 0
        %1230 = vmatmul.mubr.bf16.gmra.mxu0 %v1195
        %v1231 = vpop.f32.mrf.mxu0
        %v1232 = vadd.f32 0.0, %v1231
        %v1233 = vpop.f32.mrf.mxu0
        %v1234 = vpop.f32.mrf.mxu0
        %v1235 = vadd.f32 0.0, %v1234
        %v1236 = vpop.f32.mrf.mxu0
        %1237 = vdwg.mxu0
        %1240 = vrot.lane.b32.xlu0 %v1107, 32
        %v1241 = vpop.permute.xlu0 %1240
        %1242 = vrot.lane.b32.xlu0 %v1109, 32
        %v1243 = vpop.permute.xlu0 %1242
        %v1246 = vmul.f32 %v1232, %v1241
        %v1247 = vmul.f32 %v1235, %v1243
        %v1248 = vpack.c.bf16 %v1247, %v1246
        %v1249 = vld [vmem:[%s657] sm:$0xff]
        %v1250 = vld [vmem:[%s657 + $0x8] sm:$0xff]
        %1251 = vrot.lane.b32.xlu0 %v1114, 120
        %v1252 = vpop.permute.xlu0 %1251
        %1253 = vrot.lane.b32.xlu0 %v1114, 88
        %v1254 = vpop.permute.xlu0 %1253
        %v1256 = vsel %vm1120, %v1252, 0
        %v1259 = vsel %vm1120, %v1254, 0
        %1261 = vmatprep.subr.bf16.mxu0 0
        %1262 = vmatpush1.bf16.xpose.msra.mxu0 0
        %1263 = vmatprep.subr.bf16.mxu0 0
        %1264 = vmatpush1.bf16.xpose.msra.mxu0 0
        %1265 = vmatprep.subr.bf16.mxu0 0
        %1266 = vmatpush1.bf16.xpose.msra.mxu0 0
        %1267 = vmatprep.subr.bf16.mxu0 0
        %1268 = vmatpush1.bf16.xpose.msra.mxu0 0
        %1269 = vmatprep.subr.bf16.mxu0 0
        %1270 = vmatpush1.bf16.xpose.msra.mxu0 0
        %1271 = vmatprep.subr.bf16.mxu0 0
        %1272 = vmatpush1.bf16.xpose.msra.mxu0 0
        %1273 = vmatprep.subr.bf16.mxu0 0
        %1274 = vmatpush1.bf16.xpose.msra.mxu0 0
        %1275 = vmatprep.subr.bf16.mxu0 0
        %1276 = vmatpush1.bf16.xpose.msra.mxu0 %v1259
        %1277 = vmatprep.subr.bf16.mxu0 0
        %1278 = vmatpush2.bf16.xpose.msra.mxu0 0
        %1279 = vmatprep.subr.bf16.mxu0 0
        %1280 = vmatpush2.bf16.xpose.msra.mxu0 0
        %1281 = vmatprep.subr.bf16.mxu0 0
        %1282 = vmatpush2.bf16.xpose.msra.mxu0 0
        %1283 = vmatprep.subr.bf16.mxu0 0
        %1284 = vmatpush2.bf16.xpose.msra.mxu0 0
        %1285 = vmatprep.subr.bf16.mxu0 0
        %1286 = vmatpush2.bf16.xpose.msra.mxu0 0
        %1287 = vmatprep.subr.bf16.mxu0 0
        %1288 = vmatpush2.bf16.xpose.msra.mxu0 0
        %1289 = vmatprep.subr.bf16.mxu0 0
        %1290 = vmatpush2.bf16.xpose.msra.mxu0 0
        %1291 = vmatprep.subr.bf16.mxu0 0
        %1292 = vmatpush2.bf16.xpose.msra.mxu0 0
        %1293 = vmatprep.mubr.bf16.mxu0 0
        %1294 = vmatmul.mubr.bf16.gmra.mxu0 %v1256
        %v1295 = vpop.f32.mrf.mxu0
        %v1296 = vadd.f32 %v1249, %v1295
        %v1297 = vpop.f32.mrf.mxu0
        %v1298 = vpop.f32.mrf.mxu0
        %v1299 = vadd.f32 %v1250, %v1298
        %v1300 = vpop.f32.mrf.mxu0
        %1301 = vdwg.mxu0
        %v1302 = vsel %vm602, %v1296, -inf
        %1303 = vmax.xlane.f32.xlu0 %v1302
        %v1304 = vpop.xlane.xlu0 %1303
        %v1305 = vsel %vm602, %v1299, -inf
        %1306 = vmax.xlane.f32.xlu0 %v1305
        %v1307 = vpop.xlane.xlu0 %1306
        %v1308 = vsub.f32 %v1296, %v1304
        %v1309 = vsub.f32 %v1299, %v1307
        %v1310 = vmul.f32 %v1308, 1.442695
        %v1311 = vpow.pop %v1310
        %v1312 = vmul.f32 %v1309, 1.442695
        %v1313 = vpow.pop %v1312
        %v1314 = vsel %vm602, %v1311, 0.0
        %1315 = vadd.xlane.f32.xlu0 %v1314
        %v1316 = vpop.xlane.xlu0 %1315
        %v1317 = vsel %vm602, %v1313, 0.0
        %1318 = vadd.xlane.f32.xlu0 %v1317
        %v1319 = vpop.xlane.xlu0 %1318
        %v1320 = vrcp.pop %v1316
        %v1321 = vrcp.pop %v1319
        %v1322 = vmul.f32 %v1311, %v1320
        %v1323 = vmul.f32 %v1313, %v1321
        %v1324 = vpack.c.bf16 %v1323, %v1322
        %1325 = vrot.lane.b32.xlu0 %v1114, 56
        %v1326 = vpop.permute.xlu0 %1325
        %v1329 = vsel %vm602, %v1324, 0
        %1331 = vmatprep.subr.bf16.mxu0 0
        %1332 = vmatpush1.bf16.msra.mxu0 0
        %1333 = vmatprep.subr.bf16.mxu0 0
        %1334 = vmatpush1.bf16.msra.mxu0 0
        %1335 = vmatprep.subr.bf16.mxu0 0
        %1336 = vmatpush1.bf16.msra.mxu0 0
        %1337 = vmatprep.subr.bf16.mxu0 0
        %1338 = vmatpush1.bf16.msra.mxu0 0
        %1339 = vmatprep.subr.bf16.mxu0 0
        %1340 = vmatpush1.bf16.msra.mxu0 0
        %1341 = vmatprep.subr.bf16.mxu0 0
        %1342 = vmatpush1.bf16.msra.mxu0 0
        %1343 = vmatprep.subr.bf16.mxu0 0
        %1344 = vmatpush1.bf16.msra.mxu0 0
        %1345 = vmatprep.subr.bf16.mxu0 0
        %1346 = vmatpush1.bf16.msra.mxu0 %v1326
        %1347 = vmatprep.subr.bf16.mxu0 0
        %1348 = vmatpush2.bf16.msra.mxu0 0
        %1349 = vmatprep.subr.bf16.mxu0 0
        %1350 = vmatpush2.bf16.msra.mxu0 0
        %1351 = vmatprep.subr.bf16.mxu0 0
        %1352 = vmatpush2.bf16.msra.mxu0 0
        %1353 = vmatprep.subr.bf16.mxu0 0
        %1354 = vmatpush2.bf16.msra.mxu0 0
        %1355 = vmatprep.subr.bf16.mxu0 0
        %1356 = vmatpush2.bf16.msra.mxu0 0
        %1357 = vmatprep.subr.bf16.mxu0 0
        %1358 = vmatpush2.bf16.msra.mxu0 0
        %1359 = vmatprep.subr.bf16.mxu0 0
        %1360 = vmatpush2.bf16.msra.mxu0 0
        %1361 = vmatprep.subr.bf16.mxu0 0
        %1362 = vmatpush2.bf16.msra.mxu0 0
        %1363 = vmatprep.mubr.bf16.mxu0 0
        %1364 = vmatmul.mubr.bf16.gmra.mxu0 %v1329
        %v1365 = vpop.f32.mrf.mxu0
        %v1366 = vadd.f32 0.0, %v1365
        %v1367 = vpop.f32.mrf.mxu0
        %v1368 = vpop.f32.mrf.mxu0
        %v1369 = vadd.f32 0.0, %v1368
        %v1370 = vpop.f32.mrf.mxu0
        %1371 = vdwg.mxu0
        %1372 = vrot.lane.b32.xlu0 %v1107, 24
        %v1373 = vpop.permute.xlu0 %1372
        %1374 = vrot.lane.b32.xlu0 %v1109, 24
        %v1375 = vpop.permute.xlu0 %1374
        %v1378 = vmul.f32 %v1366, %v1373
        %v1379 = vmul.f32 %v1369, %v1375
        %v1380 = vpack.c.bf16 %v1379, %v1378
        %v1382 = vsel %vm1120, %v1380, 0
        %vm1384 = vcmask 1043456
        %v1386 = vsel %vm1384, %v1111, 0
        %1388 = vmatprep.subr.bf16.mxu0 0
        %1389 = vmatpush1.bf16.msra.mxu0 0
        %1390 = vmatprep.subr.bf16.mxu0 0
        %1391 = vmatpush1.bf16.msra.mxu0 0
        %1392 = vmatprep.subr.bf16.mxu0 0
        %1393 = vmatpush1.bf16.msra.mxu0 0
        %1394 = vmatprep.subr.bf16.mxu0 0
        %1395 = vmatpush1.bf16.msra.mxu0 0
        %1396 = vmatprep.subr.bf16.mxu0 0
        %1397 = vmatpush1.bf16.msra.mxu0 0
        %1398 = vmatprep.subr.bf16.mxu0 0
        %1399 = vmatpush1.bf16.msra.mxu0 0
        %1400 = vmatprep.subr.bf16.mxu0 0
        %1401 = vmatpush1.bf16.msra.mxu0 0
        %1402 = vmatprep.subr.bf16.mxu0 0
        %1403 = vmatpush1.bf16.msra.mxu0 %v1386
        %1404 = vmatprep.subr.bf16.mxu0 0
        %1405 = vmatpush2.bf16.msra.mxu0 0
        %1406 = vmatprep.subr.bf16.mxu0 0
        %1407 = vmatpush2.bf16.msra.mxu0 0
        %1408 = vmatprep.subr.bf16.mxu0 0
        %1409 = vmatpush2.bf16.msra.mxu0 0
        %1410 = vmatprep.subr.bf16.mxu0 0
        %1411 = vmatpush2.bf16.msra.mxu0 0
        %1412 = vmatprep.subr.bf16.mxu0 0
        %1413 = vmatpush2.bf16.msra.mxu0 0
        %1414 = vmatprep.subr.bf16.mxu0 0
        %1415 = vmatpush2.bf16.msra.mxu0 0
        %1416 = vmatprep.subr.bf16.mxu0 0
        %1417 = vmatpush2.bf16.msra.mxu0 0
        %1418 = vmatprep.subr.bf16.mxu0 0
        %1419 = vmatpush2.bf16.msra.mxu0 0
        %1420 = vmatprep.mubr.bf16.mxu0 0
        %1421 = vmatmul.mubr.bf16.gmra.mxu0 %v1382
        %v1422 = vpop.f32.mrf.mxu0
        %v1423 = vadd.f32 0.0, %v1422
        %v1424 = vpop.f32.mrf.mxu0
        %v1425 = vpop.f32.mrf.mxu0
        %v1426 = vadd.f32 0.0, %v1425
        %v1427 = vpop.f32.mrf.mxu0
        %1428 = vdwg.mxu0
        %v1430 = vsel %vm1120, %v1248, 0
        %v1433 = vsel %vm1384, %v1110, 0
        %1435 = vmatprep.subr.bf16.mxu0 0
        %1436 = vmatpush1.bf16.msra.mxu0 0
        %1437 = vmatprep.subr.bf16.mxu0 0
        %1438 = vmatpush1.bf16.msra.mxu0 0
        %1439 = vmatprep.subr.bf16.mxu0 0
        %1440 = vmatpush1.bf16.msra.mxu0 0
        %1441 = vmatprep.subr.bf16.mxu0 0
        %1442 = vmatpush1.bf16.msra.mxu0 0
        %1443 = vmatprep.subr.bf16.mxu0 0
        %1444 = vmatpush1.bf16.msra.mxu0 0
        %1445 = vmatprep.subr.bf16.mxu0 0
        %1446 = vmatpush1.bf16.msra.mxu0 0
        %1447 = vmatprep.subr.bf16.mxu0 0
        %1448 = vmatpush1.bf16.msra.mxu0 0
        %1449 = vmatprep.subr.bf16.mxu0 0
        %1450 = vmatpush1.bf16.msra.mxu0 %v1433
        %1451 = vmatprep.subr.bf16.mxu0 0
        %1452 = vmatpush2.bf16.msra.mxu0 0
        %1453 = vmatprep.subr.bf16.mxu0 0
        %1454 = vmatpush2.bf16.msra.mxu0 0
        %1455 = vmatprep.subr.bf16.mxu0 0
        %1456 = vmatpush2.bf16.msra.mxu0 0
        %1457 = vmatprep.subr.bf16.mxu0 0
        %1458 = vmatpush2.bf16.msra.mxu0 0
        %1459 = vmatprep.subr.bf16.mxu0 0
        %1460 = vmatpush2.bf16.msra.mxu0 0
        %1461 = vmatprep.subr.bf16.mxu0 0
        %1462 = vmatpush2.bf16.msra.mxu0 0
        %1463 = vmatprep.subr.bf16.mxu0 0
        %1464 = vmatpush2.bf16.msra.mxu0 0
        %1465 = vmatprep.subr.bf16.mxu0 0
        %1466 = vmatpush2.bf16.msra.mxu0 0
        %1467 = vmatprep.mubr.bf16.mxu0 0
        %1468 = vmatmul.mubr.bf16.gmra.mxu0 %v1430
        %v1469 = vpop.f32.mrf.mxu0
        %v1470 = vadd.f32 %v1423, %v1469
        %v1471 = vpop.f32.mrf.mxu0
        %v1472 = vpop.f32.mrf.mxu0
        %v1473 = vadd.f32 %v1426, %v1472
        %v1474 = vpop.f32.mrf.mxu0
        %1475 = vdwg.mxu0
        %v1476 = vld [vmem:[%s712] sm:$0xff]
        %v1477 = vld [vmem:[%s712 + $0x8] sm:$0xff]
        %1478 = vrot.lane.b32.xlu0 %v1114, 112
        %v1479 = vpop.permute.xlu0 %1478
        %1480 = vrot.lane.b32.xlu0 %v1114, 80
        %v1481 = vpop.permute.xlu0 %1480
        %v1483 = vsel %vm1120, %v1479, 0
        %v1486 = vsel %vm1120, %v1481, 0
        %1488 = vmatprep.subr.bf16.mxu0 0
        %1489 = vmatpush1.bf16.xpose.msra.mxu0 0
        %1490 = vmatprep.subr.bf16.mxu0 0
        %1491 = vmatpush1.bf16.xpose.msra.mxu0 0
        %1492 = vmatprep.subr.bf16.mxu0 0
        %1493 = vmatpush1.bf16.xpose.msra.mxu0 0
        %1494 = vmatprep.subr.bf16.mxu0 0
        %1495 = vmatpush1.bf16.xpose.msra.mxu0 0
        %1496 = vmatprep.subr.bf16.mxu0 0
        %1497 = vmatpush1.bf16.xpose.msra.mxu0 0
        %1498 = vmatprep.subr.bf16.mxu0 0
        %1499 = vmatpush1.bf16.xpose.msra.mxu0 0
        %1500 = vmatprep.subr.bf16.mxu0 0
        %1501 = vmatpush1.bf16.xpose.msra.mxu0 0
        %1502 = vmatprep.subr.bf16.mxu0 0
        %1503 = vmatpush1.bf16.xpose.msra.mxu0 %v1486
        %1504 = vmatprep.subr.bf16.mxu0 0
        %1505 = vmatpush2.bf16.xpose.msra.mxu0 0
        %1506 = vmatprep.subr.bf16.mxu0 0
        %1507 = vmatpush2.bf16.xpose.msra.mxu0 0
        %1508 = vmatprep.subr.bf16.mxu0 0
        %1509 = vmatpush2.bf16.xpose.msra.mxu0 0
        %1510 = vmatprep.subr.bf16.mxu0 0
        %1511 = vmatpush2.bf16.xpose.msra.mxu0 0
        %1512 = vmatprep.subr.bf16.mxu0 0
        %1513 = vmatpush2.bf16.xpose.msra.mxu0 0
        %1514 = vmatprep.subr.bf16.mxu0 0
        %1515 = vmatpush2.bf16.xpose.msra.mxu0 0
        %1516 = vmatprep.subr.bf16.mxu0 0
        %1517 = vmatpush2.bf16.xpose.msra.mxu0 0
        %1518 = vmatprep.subr.bf16.mxu0 0
        %1519 = vmatpush2.bf16.xpose.msra.mxu0 0
        %1520 = vmatprep.mubr.bf16.mxu0 0
        %1521 = vmatmul.mubr.bf16.gmra.mxu0 %v1483
        %v1522 = vpop.f32.mrf.mxu0
        %v1523 = vadd.f32 %v1476, %v1522
        %v1524 = vpop.f32.mrf.mxu0
        %v1525 = vpop.f32.mrf.mxu0
        %v1526 = vadd.f32 %v1477, %v1525
        %v1527 = vpop.f32.mrf.mxu0
        %1528 = vdwg.mxu0
        %v1529 = vsel %vm602, %v1523, -inf
        %1530 = vmax.xlane.f32.xlu0 %v1529
        %v1531 = vpop.xlane.xlu0 %1530
        %v1532 = vsel %vm602, %v1526, -inf
        %1533 = vmax.xlane.f32.xlu0 %v1532
        %v1534 = vpop.xlane.xlu0 %1533
        %v1535 = vsub.f32 %v1523, %v1531
        %v1536 = vsub.f32 %v1526, %v1534
        %v1537 = vmul.f32 %v1535, 1.442695
        %v1538 = vpow.pop %v1537
        %v1539 = vmul.f32 %v1536, 1.442695
        %v1540 = vpow.pop %v1539
        %v1541 = vsel %vm602, %v1538, 0.0
        %1542 = vadd.xlane.f32.xlu0 %v1541
        %v1543 = vpop.xlane.xlu0 %1542
        %v1544 = vsel %vm602, %v1540, 0.0
        %1545 = vadd.xlane.f32.xlu0 %v1544
        %v1546 = vpop.xlane.xlu0 %1545
        %v1547 = vrcp.pop %v1543
        %v1548 = vrcp.pop %v1546
        %v1549 = vmul.f32 %v1538, %v1547
        %v1550 = vmul.f32 %v1540, %v1548
        %v1551 = vpack.c.bf16 %v1550, %v1549
        %1552 = vrot.lane.b32.xlu0 %v1114, 48
        %v1553 = vpop.permute.xlu0 %1552
        %v1556 = vsel %vm602, %v1551, 0
        %1558 = vmatprep.subr.bf16.mxu0 0
        %1559 = vmatpush1.bf16.msra.mxu0 0
        %1560 = vmatprep.subr.bf16.mxu0 0
        %1561 = vmatpush1.bf16.msra.mxu0 0
        %1562 = vmatprep.subr.bf16.mxu0 0
        %1563 = vmatpush1.bf16.msra.mxu0 0
        %1564 = vmatprep.subr.bf16.mxu0 0
        %1565 = vmatpush1.bf16.msra.mxu0 0
        %1566 = vmatprep.subr.bf16.mxu0 0
        %1567 = vmatpush1.bf16.msra.mxu0 0
        %1568 = vmatprep.subr.bf16.mxu0 0
        %1569 = vmatpush1.bf16.msra.mxu0 0
        %1570 = vmatprep.subr.bf16.mxu0 0
        %1571 = vmatpush1.bf16.msra.mxu0 0
        %1572 = vmatprep.subr.bf16.mxu0 0
        %1573 = vmatpush1.bf16.msra.mxu0 %v1553
        %1574 = vmatprep.subr.bf16.mxu0 0
        %1575 = vmatpush2.bf16.msra.mxu0 0
        %1576 = vmatprep.subr.bf16.mxu0 0
        %1577 = vmatpush2.bf16.msra.mxu0 0
        %1578 = vmatprep.subr.bf16.mxu0 0
        %1579 = vmatpush2.bf16.msra.mxu0 0
        %1580 = vmatprep.subr.bf16.mxu0 0
        %1581 = vmatpush2.bf16.msra.mxu0 0
        %1582 = vmatprep.subr.bf16.mxu0 0
        %1583 = vmatpush2.bf16.msra.mxu0 0
        %1584 = vmatprep.subr.bf16.mxu0 0
        %1585 = vmatpush2.bf16.msra.mxu0 0
        %1586 = vmatprep.subr.bf16.mxu0 0
        %1587 = vmatpush2.bf16.msra.mxu0 0
        %1588 = vmatprep.subr.bf16.mxu0 0
        %1589 = vmatpush2.bf16.msra.mxu0 0
        %1590 = vmatprep.mubr.bf16.mxu0 0
        %1591 = vmatmul.mubr.bf16.gmra.mxu0 %v1556
        %v1592 = vpop.f32.mrf.mxu0
        %v1593 = vadd.f32 0.0, %v1592
        %v1594 = vpop.f32.mrf.mxu0
        %v1595 = vpop.f32.mrf.mxu0
        %v1596 = vadd.f32 0.0, %v1595
        %v1597 = vpop.f32.mrf.mxu0
        %1598 = vdwg.mxu0
        %1599 = vrot.lane.b32.xlu0 %v1107, 16
        %v1600 = vpop.permute.xlu0 %1599
        %1601 = vrot.lane.b32.xlu0 %v1109, 16
        %v1602 = vpop.permute.xlu0 %1601
        %v1605 = vmul.f32 %v1593, %v1600
        %v1606 = vmul.f32 %v1596, %v1602
        %v1607 = vpack.c.bf16 %v1606, %v1605
        %v1609 = vsel %vm1120, %v1607, 0
        %v1612 = vsel %vm1384, %v1112, 0
        %1614 = vmatprep.subr.bf16.mxu0 0
        %1615 = vmatpush1.bf16.msra.mxu0 0
        %1616 = vmatprep.subr.bf16.mxu0 0
        %1617 = vmatpush1.bf16.msra.mxu0 0
        %1618 = vmatprep.subr.bf16.mxu0 0
        %1619 = vmatpush1.bf16.msra.mxu0 0
        %1620 = vmatprep.subr.bf16.mxu0 0
        %1621 = vmatpush1.bf16.msra.mxu0 0
        %1622 = vmatprep.subr.bf16.mxu0 0
        %1623 = vmatpush1.bf16.msra.mxu0 0
        %1624 = vmatprep.subr.bf16.mxu0 0
        %1625 = vmatpush1.bf16.msra.mxu0 0
        %1626 = vmatprep.subr.bf16.mxu0 0
        %1627 = vmatpush1.bf16.msra.mxu0 0
        %1628 = vmatprep.subr.bf16.mxu0 0
        %1629 = vmatpush1.bf16.msra.mxu0 %v1612
        %1630 = vmatprep.subr.bf16.mxu0 0
        %1631 = vmatpush2.bf16.msra.mxu0 0
        %1632 = vmatprep.subr.bf16.mxu0 0
        %1633 = vmatpush2.bf16.msra.mxu0 0
        %1634 = vmatprep.subr.bf16.mxu0 0
        %1635 = vmatpush2.bf16.msra.mxu0 0
        %1636 = vmatprep.subr.bf16.mxu0 0
        %1637 = vmatpush2.bf16.msra.mxu0 0
        %1638 = vmatprep.subr.bf16.mxu0 0
        %1639 = vmatpush2.bf16.msra.mxu0 0
        %1640 = vmatprep.subr.bf16.mxu0 0
        %1641 = vmatpush2.bf16.msra.mxu0 0
        %1642 = vmatprep.subr.bf16.mxu0 0
        %1643 = vmatpush2.bf16.msra.mxu0 0
        %1644 = vmatprep.subr.bf16.mxu0 0
        %1645 = vmatpush2.bf16.msra.mxu0 0
        %1646 = vmatprep.mubr.bf16.mxu0 0
        %1647 = vmatmul.mubr.bf16.gmra.mxu0 %v1609
        %v1648 = vpop.f32.mrf.mxu0
        %v1649 = vadd.f32 0.0, %v1648
        %v1650 = vpop.f32.mrf.mxu0
        %v1651 = vpop.f32.mrf.mxu0
        %v1652 = vadd.f32 0.0, %v1651
        %v1653 = vpop.f32.mrf.mxu0
        %1654 = vdwg.mxu0
        %v1655 = vadd.f32 %v1470, %v1649
        %v1656 = vadd.f32 %v1473, %v1652
        %v1657 = vld [vmem:[%s767] sm:$0xff]
        %v1658 = vld [vmem:[%s767 + $0x8] sm:$0xff]
        %1659 = vrot.lane.b32.xlu0 %v1114, 104
        %v1660 = vpop.permute.xlu0 %1659
        %1661 = vrot.lane.b32.xlu0 %v1114, 72
        %v1662 = vpop.permute.xlu0 %1661
        %v1664 = vsel %vm1120, %v1660, 0
        %v1667 = vsel %vm1120, %v1662, 0
        %1669 = vmatprep.subr.bf16.mxu0 0
        %1670 = vmatpush1.bf16.xpose.msra.mxu0 0
        %1671 = vmatprep.subr.bf16.mxu0 0
        %1672 = vmatpush1.bf16.xpose.msra.mxu0 0
        %1673 = vmatprep.subr.bf16.mxu0 0
        %1674 = vmatpush1.bf16.xpose.msra.mxu0 0
        %1675 = vmatprep.subr.bf16.mxu0 0
        %1676 = vmatpush1.bf16.xpose.msra.mxu0 0
        %1677 = vmatprep.subr.bf16.mxu0 0
        %1678 = vmatpush1.bf16.xpose.msra.mxu0 0
        %1679 = vmatprep.subr.bf16.mxu0 0
        %1680 = vmatpush1.bf16.xpose.msra.mxu0 0
        %1681 = vmatprep.subr.bf16.mxu0 0
        %1682 = vmatpush1.bf16.xpose.msra.mxu0 0
        %1683 = vmatprep.subr.bf16.mxu0 0
        %1684 = vmatpush1.bf16.xpose.msra.mxu0 %v1667
        %1685 = vmatprep.subr.bf16.mxu0 0
        %1686 = vmatpush2.bf16.xpose.msra.mxu0 0
        %1687 = vmatprep.subr.bf16.mxu0 0
        %1688 = vmatpush2.bf16.xpose.msra.mxu0 0
        %1689 = vmatprep.subr.bf16.mxu0 0
        %1690 = vmatpush2.bf16.xpose.msra.mxu0 0
        %1691 = vmatprep.subr.bf16.mxu0 0
        %1692 = vmatpush2.bf16.xpose.msra.mxu0 0
        %1693 = vmatprep.subr.bf16.mxu0 0
        %1694 = vmatpush2.bf16.xpose.msra.mxu0 0
        %1695 = vmatprep.subr.bf16.mxu0 0
        %1696 = vmatpush2.bf16.xpose.msra.mxu0 0
        %1697 = vmatprep.subr.bf16.mxu0 0
        %1698 = vmatpush2.bf16.xpose.msra.mxu0 0
        %1699 = vmatprep.subr.bf16.mxu0 0
        %1700 = vmatpush2.bf16.xpose.msra.mxu0 0
        %1701 = vmatprep.mubr.bf16.mxu0 0
        %1702 = vmatmul.mubr.bf16.gmra.mxu0 %v1664
        %v1703 = vpop.f32.mrf.mxu0
        %v1704 = vadd.f32 %v1657, %v1703
        %v1705 = vpop.f32.mrf.mxu0
        %v1706 = vpop.f32.mrf.mxu0
        %v1707 = vadd.f32 %v1658, %v1706
        %v1708 = vpop.f32.mrf.mxu0
        %1709 = vdwg.mxu0
        %v1710 = vsel %vm602, %v1704, -inf
        %1711 = vmax.xlane.f32.xlu0 %v1710
        %v1712 = vpop.xlane.xlu0 %1711
        %v1713 = vsel %vm602, %v1707, -inf
        %1714 = vmax.xlane.f32.xlu0 %v1713
        %v1715 = vpop.xlane.xlu0 %1714
        %v1716 = vsub.f32 %v1704, %v1712
        %v1717 = vsub.f32 %v1707, %v1715
        %v1718 = vmul.f32 %v1716, 1.442695
        %v1719 = vpow.pop %v1718
        %v1720 = vmul.f32 %v1717, 1.442695
        %v1721 = vpow.pop %v1720
        %v1722 = vsel %vm602, %v1719, 0.0
        %1723 = vadd.xlane.f32.xlu0 %v1722
        %v1724 = vpop.xlane.xlu0 %1723
        %v1725 = vsel %vm602, %v1721, 0.0
        %1726 = vadd.xlane.f32.xlu0 %v1725
        %v1727 = vpop.xlane.xlu0 %1726
        %v1728 = vrcp.pop %v1724
        %v1729 = vrcp.pop %v1727
        %v1730 = vmul.f32 %v1719, %v1728
        %v1731 = vmul.f32 %v1721, %v1729
        %v1732 = vpack.c.bf16 %v1731, %v1730
        %1733 = vrot.lane.b32.xlu0 %v1114, 40
        %v1734 = vpop.permute.xlu0 %1733
        %v1737 = vsel %vm602, %v1732, 0
        %1739 = vmatprep.subr.bf16.mxu0 0
        %1740 = vmatpush1.bf16.msra.mxu0 0
        %1741 = vmatprep.subr.bf16.mxu0 0
        %1742 = vmatpush1.bf16.msra.mxu0 0
        %1743 = vmatprep.subr.bf16.mxu0 0
        %1744 = vmatpush1.bf16.msra.mxu0 0
        %1745 = vmatprep.subr.bf16.mxu0 0
        %1746 = vmatpush1.bf16.msra.mxu0 0
        %1747 = vmatprep.subr.bf16.mxu0 0
        %1748 = vmatpush1.bf16.msra.mxu0 0
        %1749 = vmatprep.subr.bf16.mxu0 0
        %1750 = vmatpush1.bf16.msra.mxu0 0
        %1751 = vmatprep.subr.bf16.mxu0 0
        %1752 = vmatpush1.bf16.msra.mxu0 0
        %1753 = vmatprep.subr.bf16.mxu0 0
        %1754 = vmatpush1.bf16.msra.mxu0 %v1734
        %1755 = vmatprep.subr.bf16.mxu0 0
        %1756 = vmatpush2.bf16.msra.mxu0 0
        %1757 = vmatprep.subr.bf16.mxu0 0
        %1758 = vmatpush2.bf16.msra.mxu0 0
        %1759 = vmatprep.subr.bf16.mxu0 0
        %1760 = vmatpush2.bf16.msra.mxu0 0
        %1761 = vmatprep.subr.bf16.mxu0 0
        %1762 = vmatpush2.bf16.msra.mxu0 0
        %1763 = vmatprep.subr.bf16.mxu0 0
        %1764 = vmatpush2.bf16.msra.mxu0 0
        %1765 = vmatprep.subr.bf16.mxu0 0
        %1766 = vmatpush2.bf16.msra.mxu0 0
        %1767 = vmatprep.subr.bf16.mxu0 0
        %1768 = vmatpush2.bf16.msra.mxu0 0
        %1769 = vmatprep.subr.bf16.mxu0 0
        %1770 = vmatpush2.bf16.msra.mxu0 0
        %1771 = vmatprep.mubr.bf16.mxu0 0
        %1772 = vmatmul.mubr.bf16.gmra.mxu0 %v1737
        %v1773 = vpop.f32.mrf.mxu0
        %v1774 = vadd.f32 0.0, %v1773
        %v1775 = vpop.f32.mrf.mxu0
        %v1776 = vpop.f32.mrf.mxu0
        %v1777 = vadd.f32 0.0, %v1776
        %v1778 = vpop.f32.mrf.mxu0
        %1779 = vdwg.mxu0
        %1780 = vrot.lane.b32.xlu0 %v1107, 8
        %v1781 = vpop.permute.xlu0 %1780
        %1782 = vrot.lane.b32.xlu0 %v1109, 8
        %v1783 = vpop.permute.xlu0 %1782
        %v1786 = vmul.f32 %v1774, %v1781
        %v1787 = vmul.f32 %v1777, %v1783
        %v1788 = vpack.c.bf16 %v1787, %v1786
        %v1790 = vsel %vm1120, %v1788, 0
        %v1793 = vsel %vm1384, %v1113, 0
        %1795 = vmatprep.subr.bf16.mxu0 0
        %1796 = vmatpush1.bf16.msra.mxu0 0
        %1797 = vmatprep.subr.bf16.mxu0 0
        %1798 = vmatpush1.bf16.msra.mxu0 0
        %1799 = vmatprep.subr.bf16.mxu0 0
        %1800 = vmatpush1.bf16.msra.mxu0 0
        %1801 = vmatprep.subr.bf16.mxu0 0
        %1802 = vmatpush1.bf16.msra.mxu0 0
        %1803 = vmatprep.subr.bf16.mxu0 0
        %1804 = vmatpush1.bf16.msra.mxu0 0
        %1805 = vmatprep.subr.bf16.mxu0 0
        %1806 = vmatpush1.bf16.msra.mxu0 0
        %1807 = vmatprep.subr.bf16.mxu0 0
        %1808 = vmatpush1.bf16.msra.mxu0 0
        %1809 = vmatprep.subr.bf16.mxu0 0
        %1810 = vmatpush1.bf16.msra.mxu0 %v1793
        %1811 = vmatprep.subr.bf16.mxu0 0
        %1812 = vmatpush2.bf16.msra.mxu0 0
        %1813 = vmatprep.subr.bf16.mxu0 0
        %1814 = vmatpush2.bf16.msra.mxu0 0
        %1815 = vmatprep.subr.bf16.mxu0 0
        %1816 = vmatpush2.bf16.msra.mxu0 0
        %1817 = vmatprep.subr.bf16.mxu0 0
        %1818 = vmatpush2.bf16.msra.mxu0 0
        %1819 = vmatprep.subr.bf16.mxu0 0
        %1820 = vmatpush2.bf16.msra.mxu0 0
        %1821 = vmatprep.subr.bf16.mxu0 0
        %1822 = vmatpush2.bf16.msra.mxu0 0
        %1823 = vmatprep.subr.bf16.mxu0 0
        %1824 = vmatpush2.bf16.msra.mxu0 0
        %1825 = vmatprep.subr.bf16.mxu0 0
        %1826 = vmatpush2.bf16.msra.mxu0 0
        %1827 = vmatprep.mubr.bf16.mxu0 0
        %1828 = vmatmul.mubr.bf16.gmra.mxu0 %v1790
        %v1829 = vpop.f32.mrf.mxu0
        %v1830 = vadd.f32 0.0, %v1829
        %v1831 = vpop.f32.mrf.mxu0
        %v1832 = vpop.f32.mrf.mxu0
        %v1833 = vadd.f32 0.0, %v1832
        %v1834 = vpop.f32.mrf.mxu0
        %1835 = vdwg.mxu0
        %v1836 = vadd.f32 %v1655, %v1830
        %v1837 = vadd.f32 %v1656, %v1833
        %v1838 = vadd.f32 %v990, %v1836
        %v1839 = vadd.f32 %v991, %v1837
        %v1840 = vsel %vm993, %v1838, 0.0
        %1841 = vadd.xlane.f32.xlu0 %v1840
        %v1842 = vpop.xlane.xlu0 %1841
        %v1843 = vsel %vm993, %v1839, 0.0
        %1844 = vadd.xlane.f32.xlu0 %v1843
        %v1845 = vpop.xlane.xlu0 %1844
        %v1846 = vmul.f32 %v1842, %v1000
        %v1847 = vmul.f32 %v1845, %v1000
        %v1848 = vsub.f32 %v1838, %v1846
        %v1849 = vsub.f32 %v1839, %v1847
        %v1850 = vmul.f32 %v1848, %v1848
        %v1851 = vmul.f32 %v1849, %v1849
        %v1852 = vsel %vm993, %v1850, 0.0
        %1853 = vadd.xlane.f32.xlu0 %v1852
        %v1854 = vpop.xlane.xlu0 %1853
        %v1855 = vsel %vm993, %v1851, 0.0
        %1856 = vadd.xlane.f32.xlu0 %v1855
        %v1857 = vpop.xlane.xlu0 %1856
        %v1858 = vmul.f32 %v1854, %v1000
        %v1859 = vmul.f32 %v1857, %v1000
        %v1860 = vadd.f32 %v1858, 1e-05
        %v1861 = vadd.f32 %v1859, 1e-05
        %v1862 = vrsqrt.pop %v1860
        %v1863 = vrsqrt.pop %v1861
        %v1864 = vmul.f32 %v1848, %v1862
        %v1865 = vmul.f32 %v1849, %v1863
        %v1866 = vlaneseq
        %v1867 = vshrl.u32 %v1866, 7
        %v1868 = vsub.s32 3, %v1867
        %v1869 = vrot.slane %v992, %v1868
        %v1870 = vmul.f32 %v1864, %v1869
        %v1871 = vmul.f32 %v1865, %v1869
        %v1872 = vlaneseq
        %v1873 = vshrl.u32 %v1872, 7
        %v1874 = vsub.s32 4, %v1873
        %v1875 = vrot.slane %v992, %v1874
        %v1876 = vadd.f32 %v1870, %v1875
        %v1877 = vadd.f32 %v1871, %v1875
        %v1878 = vpack.c.bf16 %v1877, %v1876
        %v1879 = vld [vmem:[%s5] sm:$0xff]
        %v1880 = vld [vmem:[%s5 + $0x8] sm:$0xff]
        %v1881 = vld [vmem:[%s5 + $0x10] sm:$0xff]
        %v1882 = vld [vmem:[%s5 + $0x18] sm:$0xff]
        %v1887 = vunpack.c.l.b16 %v1879
        %v1888 = vunpack.c.h.b16 %v1879
        %v1889 = vunpack.c.l.b16 %v1880
        %v1890 = vunpack.c.h.b16 %v1880
        %v1891 = vunpack.c.l.b16 %v1881
        %v1892 = vunpack.c.h.b16 %v1881
        %v1893 = vunpack.c.l.b16 %v1882
        %v1894 = vunpack.c.h.b16 %v1882
        %v1895 = vpack.c.b16 %v1889, %v1887
        %v1896 = vpack.c.b16 %v1890, %v1888
        %v1897 = vpack.c.b16 %v1893, %v1891
        %v1898 = vpack.c.b16 %v1894, %v1892
        %v1904 = vsel %vm993, %v1878, 0
        %1906 = vmatprep.subr.bf16.mxu0 0
        %1907 = vmatpush1.bf16.msra.mxu0 0
        %1908 = vmatprep.subr.bf16.mxu0 0
        %1909 = vmatpush1.bf16.msra.mxu0 0
        %1910 = vmatprep.subr.bf16.mxu0 0
        %1911 = vmatpush1.bf16.msra.mxu0 0
        %1912 = vmatprep.subr.bf16.mxu0 0
        %1913 = vmatpush1.bf16.msra.mxu0 0
        %1914 = vmatprep.subr.bf16.mxu0 0
        %1915 = vmatpush1.bf16.msra.mxu0 0
        %1916 = vmatprep.subr.bf16.mxu0 0
        %1917 = vmatpush1.bf16.msra.mxu0 0
        %1918 = vmatprep.subr.bf16.mxu0 %v1898
        %1919 = vmatpush1.bf16.msra.mxu0 %v1897
        %1920 = vmatprep.subr.bf16.mxu0 %v1896
        %1921 = vmatpush1.bf16.msra.mxu0 %v1895
        %1922 = vmatprep.subr.bf16.mxu0 0
        %1923 = vmatpush2.bf16.msra.mxu0 0
        %1924 = vmatprep.subr.bf16.mxu0 0
        %1925 = vmatpush2.bf16.msra.mxu0 0
        %1926 = vmatprep.subr.bf16.mxu0 0
        %1927 = vmatpush2.bf16.msra.mxu0 0
        %1928 = vmatprep.subr.bf16.mxu0 0
        %1929 = vmatpush2.bf16.msra.mxu0 0
        %1930 = vmatprep.subr.bf16.mxu0 0
        %1931 = vmatpush2.bf16.msra.mxu0 0
        %1932 = vmatprep.subr.bf16.mxu0 0
        %1933 = vmatpush2.bf16.msra.mxu0 0
        %1934 = vmatprep.subr.bf16.mxu0 0
        %1935 = vmatpush2.bf16.msra.mxu0 0
        %1936 = vmatprep.subr.bf16.mxu0 0
        %1937 = vmatpush2.bf16.msra.mxu0 0
        %1938 = vmatprep.mubr.bf16.mxu0 0
        %1939 = vmatmul.mubr.bf16.gmra.mxu0 %v1904
        %v1940 = vpop.f32.mrf.mxu0
        %v1941 = vadd.f32 0.0, %v1940
        %v1942 = vpop.f32.mrf.mxu0
        %v1943 = vadd.f32 0.0, %v1942
        %v1944 = vpop.f32.mrf.mxu0
        %v1945 = vadd.f32 0.0, %v1944
        %v1946 = vpop.f32.mrf.mxu0
        %v1947 = vadd.f32 0.0, %v1946
        %1948 = vdwg.mxu0
        %v1949 = vxor.u32 %v1941, 2147483648
        %v1950 = vxor.u32 %v1945, 2147483648
        %v1951 = vmul.f32 %v1949, 1.442695
        %v1952 = vpow.pop %v1951
        %v1953 = vmul.f32 %v1950, 1.442695
        %v1954 = vpow.pop %v1953
        %v1955 = vadd.f32 %v1952, 1.0
        %v1956 = vadd.f32 %v1954, 1.0
        %v1957 = vrcp.pop %v1955
        %v1958 = vmul.f32 1.0, %v1957
        %v1959 = vrcp.pop %v1956
        %v1960 = vmul.f32 1.0, %v1959
        %v1961 = vmul.f32 %v1941, %v1958
        %v1962 = vmul.f32 %v1945, %v1960
        %v1963 = vmul.f32 %v1961, %v1943
        %v1964 = vmul.f32 %v1962, %v1947
        %v1965 = vpack.c.bf16 %v1964, %v1963
        %v1966 = vld [vmem:[%s6] sm:$0xf]
        %v1967 = vld [vmem:[%s6 + $0x4] sm:$0xf]
        %v1968 = vld [vmem:[%s6 + $0x8] sm:$0xf]
        %v1969 = vld [vmem:[%s6 + $0xc] sm:$0xf]
        %v1970 = vld [vmem:[%s6 + $0x10] sm:$0xf]
        %v1971 = vld [vmem:[%s6 + $0x14] sm:$0xf]
        %v1972 = vld [vmem:[%s6 + $0x18] sm:$0xf]
        %v1973 = vld [vmem:[%s6 + $0x1c] sm:$0xf]
        %v1974 = vld [vmem:[%s6 + $0x20] sm:$0xf]
        %v1975 = vld [vmem:[%s6 + $0x24] sm:$0xf]
        %v1976 = vld [vmem:[%s6 + $0x28] sm:$0xf]
        %v1977 = vld [vmem:[%s6 + $0x2c] sm:$0xf]
        %v1978 = vld [vmem:[%s6 + $0x30] sm:$0xf]
        %v1979 = vld [vmem:[%s6 + $0x34] sm:$0xf]
        %v1980 = vld [vmem:[%s6 + $0x38] sm:$0xf]
        %v1981 = vld [vmem:[%s6 + $0x3c] sm:$0xf]
        %v1998 = vunpack.c.l.b16 %v1966
        %v1999 = vunpack.c.l.b16 %v1967
        %v2000 = vunpack.c.l.b16 %v1968
        %v2001 = vunpack.c.l.b16 %v1969
        %v2002 = vunpack.c.l.b16 %v1970
        %v2003 = vunpack.c.l.b16 %v1971
        %v2004 = vunpack.c.l.b16 %v1972
        %v2005 = vunpack.c.l.b16 %v1973
        %v2006 = vunpack.c.l.b16 %v1974
        %v2007 = vunpack.c.l.b16 %v1975
        %v2008 = vunpack.c.l.b16 %v1976
        %v2009 = vunpack.c.l.b16 %v1977
        %v2010 = vunpack.c.l.b16 %v1978
        %v2011 = vunpack.c.l.b16 %v1979
        %v2012 = vunpack.c.l.b16 %v1980
        %v2013 = vunpack.c.l.b16 %v1981
        %v2014 = vpack.c.b16 %v1999, %v1998
        %v2015 = vpack.c.b16 %v2001, %v2000
        %v2016 = vpack.c.b16 %v2003, %v2002
        %v2017 = vpack.c.b16 %v2005, %v2004
        %v2018 = vpack.c.b16 %v2007, %v2006
        %v2019 = vpack.c.b16 %v2009, %v2008
        %v2020 = vpack.c.b16 %v2011, %v2010
        %v2021 = vpack.c.b16 %v2013, %v2012
        %2030 = vmatprep.subr.bf16.mxu0 0
        %2031 = vmatpush1.bf16.msra.mxu0 %v2021
        %2032 = vmatprep.subr.bf16.mxu0 0
        %2033 = vmatpush1.bf16.msra.mxu0 %v2020
        %2034 = vmatprep.subr.bf16.mxu0 0
        %2035 = vmatpush1.bf16.msra.mxu0 %v2019
        %2036 = vmatprep.subr.bf16.mxu0 0
        %2037 = vmatpush1.bf16.msra.mxu0 %v2018
        %2038 = vmatprep.subr.bf16.mxu0 0
        %2039 = vmatpush1.bf16.msra.mxu0 %v2017
        %2040 = vmatprep.subr.bf16.mxu0 0
        %2041 = vmatpush1.bf16.msra.mxu0 %v2016
        %2042 = vmatprep.subr.bf16.mxu0 0
        %2043 = vmatpush1.bf16.msra.mxu0 %v2015
        %2044 = vmatprep.subr.bf16.mxu0 0
        %2045 = vmatpush1.bf16.msra.mxu0 %v2014
        %2046 = vmatprep.subr.bf16.mxu0 0
        %2047 = vmatpush2.bf16.msra.mxu0 0
        %2048 = vmatprep.subr.bf16.mxu0 0
        %2049 = vmatpush2.bf16.msra.mxu0 0
        %2050 = vmatprep.subr.bf16.mxu0 0
        %2051 = vmatpush2.bf16.msra.mxu0 0
        %2052 = vmatprep.subr.bf16.mxu0 0
        %2053 = vmatpush2.bf16.msra.mxu0 0
        %2054 = vmatprep.subr.bf16.mxu0 0
        %2055 = vmatpush2.bf16.msra.mxu0 0
        %2056 = vmatprep.subr.bf16.mxu0 0
        %2057 = vmatpush2.bf16.msra.mxu0 0
        %2058 = vmatprep.subr.bf16.mxu0 0
        %2059 = vmatpush2.bf16.msra.mxu0 0
        %2060 = vmatprep.subr.bf16.mxu0 0
        %2061 = vmatpush2.bf16.msra.mxu0 0
        %2062 = vmatprep.mubr.bf16.mxu0 0
        %2063 = vmatmul.mubr.bf16.gmra.mxu0 %v1965
        %v2064 = vpop.f32.mrf.mxu0
        %v2065 = vadd.f32 0.0, %v2064
        %v2066 = vpop.f32.mrf.mxu0
        %v2067 = vpop.f32.mrf.mxu0
        %v2068 = vadd.f32 0.0, %v2067
        %v2069 = vpop.f32.mrf.mxu0
        %2070 = vdwg.mxu0
        %v2071 = vadd.f32 %v1838, %v2065
        %v2072 = vadd.f32 %v1839, %v2068
        %s2073 = scalar_lea.vmem [#allocation9], 8
        %v2074 = vld [vmem:[%s2073] sm:$0xff]
        %v2075 = vsel %vm993, %v2071, 0.0
        %2076 = vadd.xlane.f32.xlu0 %v2075
        %v2077 = vpop.xlane.xlu0 %2076
        %v2078 = vsel %vm993, %v2072, 0.0
        %2079 = vadd.xlane.f32.xlu0 %v2078
        %v2080 = vpop.xlane.xlu0 %2079
        %v2081 = vmul.f32 %v2077, %v1000
        %v2082 = vmul.f32 %v2080, %v1000
        %v2083 = vsub.f32 %v2071, %v2081
        %v2084 = vsub.f32 %v2072, %v2082
        %v2085 = vmul.f32 %v2083, %v2083
        %v2086 = vmul.f32 %v2084, %v2084
        %v2087 = vsel %vm993, %v2085, 0.0
        %2088 = vadd.xlane.f32.xlu0 %v2087
        %v2089 = vpop.xlane.xlu0 %2088
        %v2090 = vsel %vm993, %v2086, 0.0
        %2091 = vadd.xlane.f32.xlu0 %v2090
        %v2092 = vpop.xlane.xlu0 %2091
        %v2093 = vmul.f32 %v2089, %v1000
        %v2094 = vmul.f32 %v2092, %v1000
        %v2095 = vadd.f32 %v2093, 1e-05
        %v2096 = vadd.f32 %v2094, 1e-05
        %v2097 = vrsqrt.pop %v2095
        %v2098 = vrsqrt.pop %v2096
        %v2099 = vmul.f32 %v2083, %v2097
        %v2100 = vmul.f32 %v2084, %v2098
        %v2101 = vlaneseq
        %v2102 = vshrl.u32 %v2101, 7
        %v2103 = vsub.s32 0, %v2102
        %v2104 = vrot.slane %v2074, %v2103
        %v2105 = vmul.f32 %v2099, %v2104
        %v2106 = vmul.f32 %v2100, %v2104
        %v2107 = vlaneseq
        %v2108 = vshrl.u32 %v2107, 7
        %v2109 = vsub.s32 1, %v2108
        %v2110 = vrot.slane %v2074, %v2109
        %v2111 = vadd.f32 %v2105, %v2110
        %v2112 = vadd.f32 %v2106, %v2110
        %v2113 = vpack.c.bf16 %v2112, %v2111
        %s2114 = scalar_lea.vmem %s3, 16
        %v2115 = vld [vmem:[%s2114] sm:$0xf]
        %v2116 = vld [vmem:[%s2114 + $0x4] sm:$0xf]
        %v2117 = vld [vmem:[%s2114 + $0x8] sm:$0xf]
        %v2118 = vld [vmem:[%s2114 + $0xc] sm:$0xf]
        %v2119 = vlaneseq
        %v2120 = vshrl.u32 %v2119, 7
        %v2121 = vsub.s32 2, %v2120
        %v2122 = vrot.slane %v2074, %v2121
        %v2127 = vunpack.c.l.b16 %v2115
        %v2128 = vunpack.c.l.b16 %v2116
        %v2129 = vunpack.c.l.b16 %v2117
        %v2130 = vunpack.c.l.b16 %v2118
        %v2131 = vpack.c.b16 %v2128, %v2127
        %v2132 = vpack.c.b16 %v2130, %v2129
        %v2136 = vsel %vm993, %v2113, 0
        %2138 = vmatprep.subr.bf16.mxu0 0
        %2139 = vmatpush1.bf16.msra.mxu0 0
        %2140 = vmatprep.subr.bf16.mxu0 0
        %2141 = vmatpush1.bf16.msra.mxu0 0
        %2142 = vmatprep.subr.bf16.mxu0 0
        %2143 = vmatpush1.bf16.msra.mxu0 0
        %2144 = vmatprep.subr.bf16.mxu0 0
        %2145 = vmatpush1.bf16.msra.mxu0 0
        %2146 = vmatprep.subr.bf16.mxu0 0
        %2147 = vmatpush1.bf16.msra.mxu0 0
        %2148 = vmatprep.subr.bf16.mxu0 0
        %2149 = vmatpush1.bf16.msra.mxu0 0
        %2150 = vmatprep.subr.bf16.mxu0 0
        %2151 = vmatpush1.bf16.msra.mxu0 %v2132
        %2152 = vmatprep.subr.bf16.mxu0 0
        %2153 = vmatpush1.bf16.msra.mxu0 %v2131
        %2154 = vmatprep.subr.bf16.mxu0 0
        %2155 = vmatpush2.bf16.msra.mxu0 0
        %2156 = vmatprep.subr.bf16.mxu0 0
        %2157 = vmatpush2.bf16.msra.mxu0 0
        %2158 = vmatprep.subr.bf16.mxu0 0
        %2159 = vmatpush2.bf16.msra.mxu0 0
        %2160 = vmatprep.subr.bf16.mxu0 0
        %2161 = vmatpush2.bf16.msra.mxu0 0
        %2162 = vmatprep.subr.bf16.mxu0 0
        %2163 = vmatpush2.bf16.msra.mxu0 0
        %2164 = vmatprep.subr.bf16.mxu0 0
        %2165 = vmatpush2.bf16.msra.mxu0 0
        %2166 = vmatprep.subr.bf16.mxu0 0
        %2167 = vmatpush2.bf16.msra.mxu0 0
        %2168 = vmatprep.subr.bf16.mxu0 0
        %2169 = vmatpush2.bf16.msra.mxu0 0
        %2170 = vmatprep.mubr.bf16.mxu0 0
        %2171 = vmatmul.mubr.bf16.gmra.mxu0 %v2136
        %v2172 = vpop.f32.mrf.mxu0
        %v2173 = vadd.f32 %v2122, %v2172
        %v2174 = vpop.f32.mrf.mxu0
        %v2175 = vpop.f32.mrf.mxu0
        %v2176 = vadd.f32 %v2122, %v2175
        %v2177 = vpop.f32.mrf.mxu0
        %2178 = vdwg.mxu0
        %v2179 = vxor.u32 %v2173, 2147483648
        %v2180 = vxor.u32 %v2176, 2147483648
        %v2181 = vmul.f32 %v2179, 1.442695
        %v2182 = vpow.pop %v2181
        %v2183 = vmul.f32 %v2180, 1.442695
        %v2184 = vpow.pop %v2183
        %v2185 = vadd.f32 %v2182, 1.0
        %v2186 = vadd.f32 %v2184, 1.0
        %v2187 = vrcp.pop %v2185
        %v2188 = vmul.f32 1.0, %v2187
        %v2189 = vrcp.pop %v2186
        %v2190 = vmul.f32 1.0, %v2189
        %s2191 = scalar_lea.vmem [#allocation7], 16
        %v2192 = vld [vmem:[%s2191] sm:$0xf]
        %v2193 = vld [vmem:[%s2191 + $0x4] sm:$0xf]
        %v2194 = vld [vmem:[%s2191 + $0x8] sm:$0xf]
        %v2195 = vld [vmem:[%s2191 + $0xc] sm:$0xf]
        %v2196 = vpack.c.bf16 %v2176, %v2173
        %v2197 = vld [vmem:[%s822] sm:$0xff]
        %v2198 = vld [vmem:[%s822 + $0x8] sm:$0xff]
        %2200 = vrot.lane.b32.xlu0 %v2196, 96
        %v2201 = vpop.permute.xlu0 %2200
        %v2203 = vsel %vm1120, %v2196, 0
        %v2206 = vsel %vm1120, %v2201, 0
        %2208 = vmatprep.subr.bf16.mxu0 0
        %2209 = vmatpush1.bf16.xpose.msra.mxu0 0
        %2210 = vmatprep.subr.bf16.mxu0 0
        %2211 = vmatpush1.bf16.xpose.msra.mxu0 0
        %2212 = vmatprep.subr.bf16.mxu0 0
        %2213 = vmatpush1.bf16.xpose.msra.mxu0 0
        %2214 = vmatprep.subr.bf16.mxu0 0
        %2215 = vmatpush1.bf16.xpose.msra.mxu0 0
        %2216 = vmatprep.subr.bf16.mxu0 0
        %2217 = vmatpush1.bf16.xpose.msra.mxu0 0
        %2218 = vmatprep.subr.bf16.mxu0 0
        %2219 = vmatpush1.bf16.xpose.msra.mxu0 0
        %2220 = vmatprep.subr.bf16.mxu0 0
        %2221 = vmatpush1.bf16.xpose.msra.mxu0 0
        %2222 = vmatprep.subr.bf16.mxu0 0
        %2223 = vmatpush1.bf16.xpose.msra.mxu0 %v2206
        %2224 = vmatprep.subr.bf16.mxu0 0
        %2225 = vmatpush2.bf16.xpose.msra.mxu0 0
        %2226 = vmatprep.subr.bf16.mxu0 0
        %2227 = vmatpush2.bf16.xpose.msra.mxu0 0
        %2228 = vmatprep.subr.bf16.mxu0 0
        %2229 = vmatpush2.bf16.xpose.msra.mxu0 0
        %2230 = vmatprep.subr.bf16.mxu0 0
        %2231 = vmatpush2.bf16.xpose.msra.mxu0 0
        %2232 = vmatprep.subr.bf16.mxu0 0
        %2233 = vmatpush2.bf16.xpose.msra.mxu0 0
        %2234 = vmatprep.subr.bf16.mxu0 0
        %2235 = vmatpush2.bf16.xpose.msra.mxu0 0
        %2236 = vmatprep.subr.bf16.mxu0 0
        %2237 = vmatpush2.bf16.xpose.msra.mxu0 0
        %2238 = vmatprep.subr.bf16.mxu0 0
        %2239 = vmatpush2.bf16.xpose.msra.mxu0 0
        %2240 = vmatprep.mubr.bf16.mxu0 0
        %2241 = vmatmul.mubr.bf16.gmra.mxu0 %v2203
        %v2242 = vpop.f32.mrf.mxu0
        %v2243 = vadd.f32 %v2197, %v2242
        %v2244 = vpop.f32.mrf.mxu0
        %v2245 = vpop.f32.mrf.mxu0
        %v2246 = vadd.f32 %v2198, %v2245
        %v2247 = vpop.f32.mrf.mxu0
        %2248 = vdwg.mxu0
        %v2249 = vsel %vm602, %v2243, -inf
        %2250 = vmax.xlane.f32.xlu0 %v2249
        %v2251 = vpop.xlane.xlu0 %2250
        %v2252 = vsel %vm602, %v2246, -inf
        %2253 = vmax.xlane.f32.xlu0 %v2252
        %v2254 = vpop.xlane.xlu0 %2253
        %v2255 = vsub.f32 %v2243, %v2251
        %v2256 = vsub.f32 %v2246, %v2254
        %v2257 = vmul.f32 %v2255, 1.442695
        %v2258 = vpow.pop %v2257
        %v2259 = vmul.f32 %v2256, 1.442695
        %v2260 = vpow.pop %v2259
        %v2261 = vsel %vm602, %v2258, 0.0
        %2262 = vadd.xlane.f32.xlu0 %v2261
        %v2263 = vpop.xlane.xlu0 %2262
        %v2264 = vsel %vm602, %v2260, 0.0
        %2265 = vadd.xlane.f32.xlu0 %v2264
        %v2266 = vpop.xlane.xlu0 %2265
        %v2267 = vrcp.pop %v2263
        %v2268 = vrcp.pop %v2266
        %v2269 = vmul.f32 %v2258, %v2267
        %v2270 = vmul.f32 %v2260, %v2268
        %v2271 = vpack.c.bf16 %v2270, %v2269
        %2272 = vrot.lane.b32.xlu0 %v2196, 64
        %v2273 = vpop.permute.xlu0 %2272
        %v2276 = vsel %vm602, %v2271, 0
        %2278 = vmatprep.subr.bf16.mxu0 0
        %2279 = vmatpush1.bf16.msra.mxu0 0
        %2280 = vmatprep.subr.bf16.mxu0 0
        %2281 = vmatpush1.bf16.msra.mxu0 0
        %2282 = vmatprep.subr.bf16.mxu0 0
        %2283 = vmatpush1.bf16.msra.mxu0 0
        %2284 = vmatprep.subr.bf16.mxu0 0
        %2285 = vmatpush1.bf16.msra.mxu0 0
        %2286 = vmatprep.subr.bf16.mxu0 0
        %2287 = vmatpush1.bf16.msra.mxu0 0
        %2288 = vmatprep.subr.bf16.mxu0 0
        %2289 = vmatpush1.bf16.msra.mxu0 0
        %2290 = vmatprep.subr.bf16.mxu0 0
        %2291 = vmatpush1.bf16.msra.mxu0 0
        %2292 = vmatprep.subr.bf16.mxu0 0
        %2293 = vmatpush1.bf16.msra.mxu0 %v2273
        %2294 = vmatprep.subr.bf16.mxu0 0
        %2295 = vmatpush2.bf16.msra.mxu0 0
        %2296 = vmatprep.subr.bf16.mxu0 0
        %2297 = vmatpush2.bf16.msra.mxu0 0
        %2298 = vmatprep.subr.bf16.mxu0 0
        %2299 = vmatpush2.bf16.msra.mxu0 0
        %2300 = vmatprep.subr.bf16.mxu0 0
        %2301 = vmatpush2.bf16.msra.mxu0 0
        %2302 = vmatprep.subr.bf16.mxu0 0
        %2303 = vmatpush2.bf16.msra.mxu0 0
        %2304 = vmatprep.subr.bf16.mxu0 0
        %2305 = vmatpush2.bf16.msra.mxu0 0
        %2306 = vmatprep.subr.bf16.mxu0 0
        %2307 = vmatpush2.bf16.msra.mxu0 0
        %2308 = vmatprep.subr.bf16.mxu0 0
        %2309 = vmatpush2.bf16.msra.mxu0 0
        %2310 = vmatprep.mubr.bf16.mxu0 0
        %2311 = vmatmul.mubr.bf16.gmra.mxu0 %v2276
        %v2312 = vpop.f32.mrf.mxu0
        %v2313 = vadd.f32 0.0, %v2312
        %v2314 = vpop.f32.mrf.mxu0
        %v2315 = vpop.f32.mrf.mxu0
        %v2316 = vadd.f32 0.0, %v2315
        %v2317 = vpop.f32.mrf.mxu0
        %2318 = vdwg.mxu0
        %2321 = vrot.lane.b32.xlu0 %v2188, 32
        %v2322 = vpop.permute.xlu0 %2321
        %2323 = vrot.lane.b32.xlu0 %v2190, 32
        %v2324 = vpop.permute.xlu0 %2323
        %v2327 = vmul.f32 %v2313, %v2322
        %v2328 = vmul.f32 %v2316, %v2324
        %v2329 = vpack.c.bf16 %v2328, %v2327
        %v2330 = vld [vmem:[%s877] sm:$0xff]
        %v2331 = vld [vmem:[%s877 + $0x8] sm:$0xff]
        %2332 = vrot.lane.b32.xlu0 %v2196, 120
        %v2333 = vpop.permute.xlu0 %2332
        %2334 = vrot.lane.b32.xlu0 %v2196, 88
        %v2335 = vpop.permute.xlu0 %2334
        %v2337 = vsel %vm1120, %v2333, 0
        %v2340 = vsel %vm1120, %v2335, 0
        %2342 = vmatprep.subr.bf16.mxu0 0
        %2343 = vmatpush1.bf16.xpose.msra.mxu0 0
        %2344 = vmatprep.subr.bf16.mxu0 0
        %2345 = vmatpush1.bf16.xpose.msra.mxu0 0
        %2346 = vmatprep.subr.bf16.mxu0 0
        %2347 = vmatpush1.bf16.xpose.msra.mxu0 0
        %2348 = vmatprep.subr.bf16.mxu0 0
        %2349 = vmatpush1.bf16.xpose.msra.mxu0 0
        %2350 = vmatprep.subr.bf16.mxu0 0
        %2351 = vmatpush1.bf16.xpose.msra.mxu0 0
        %2352 = vmatprep.subr.bf16.mxu0 0
        %2353 = vmatpush1.bf16.xpose.msra.mxu0 0
        %2354 = vmatprep.subr.bf16.mxu0 0
        %2355 = vmatpush1.bf16.xpose.msra.mxu0 0
        %2356 = vmatprep.subr.bf16.mxu0 0
        %2357 = vmatpush1.bf16.xpose.msra.mxu0 %v2340
        %2358 = vmatprep.subr.bf16.mxu0 0
        %2359 = vmatpush2.bf16.xpose.msra.mxu0 0
        %2360 = vmatprep.subr.bf16.mxu0 0
        %2361 = vmatpush2.bf16.xpose.msra.mxu0 0
        %2362 = vmatprep.subr.bf16.mxu0 0
        %2363 = vmatpush2.bf16.xpose.msra.mxu0 0
        %2364 = vmatprep.subr.bf16.mxu0 0
        %2365 = vmatpush2.bf16.xpose.msra.mxu0 0
        %2366 = vmatprep.subr.bf16.mxu0 0
        %2367 = vmatpush2.bf16.xpose.msra.mxu0 0
        %2368 = vmatprep.subr.bf16.mxu0 0
        %2369 = vmatpush2.bf16.xpose.msra.mxu0 0
        %2370 = vmatprep.subr.bf16.mxu0 0
        %2371 = vmatpush2.bf16.xpose.msra.mxu0 0
        %2372 = vmatprep.subr.bf16.mxu0 0
        %2373 = vmatpush2.bf16.xpose.msra.mxu0 0
        %2374 = vmatprep.mubr.bf16.mxu0 0
        %2375 = vmatmul.mubr.bf16.gmra.mxu0 %v2337
        %v2376 = vpop.f32.mrf.mxu0
        %v2377 = vadd.f32 %v2330, %v2376
        %v2378 = vpop.f32.mrf.mxu0
        %v2379 = vpop.f32.mrf.mxu0
        %v2380 = vadd.f32 %v2331, %v2379
        %v2381 = vpop.f32.mrf.mxu0
        %2382 = vdwg.mxu0
        %v2383 = vsel %vm602, %v2377, -inf
        %2384 = vmax.xlane.f32.xlu0 %v2383
        %v2385 = vpop.xlane.xlu0 %2384
        %v2386 = vsel %vm602, %v2380, -inf
        %2387 = vmax.xlane.f32.xlu0 %v2386
        %v2388 = vpop.xlane.xlu0 %2387
        %v2389 = vsub.f32 %v2377, %v2385
        %v2390 = vsub.f32 %v2380, %v2388
        %v2391 = vmul.f32 %v2389, 1.442695
        %v2392 = vpow.pop %v2391
        %v2393 = vmul.f32 %v2390, 1.442695
        %v2394 = vpow.pop %v2393
        %v2395 = vsel %vm602, %v2392, 0.0
        %2396 = vadd.xlane.f32.xlu0 %v2395
        %v2397 = vpop.xlane.xlu0 %2396
        %v2398 = vsel %vm602, %v2394, 0.0
        %2399 = vadd.xlane.f32.xlu0 %v2398
        %v2400 = vpop.xlane.xlu0 %2399
        %v2401 = vrcp.pop %v2397
        %v2402 = vrcp.pop %v2400
        %v2403 = vmul.f32 %v2392, %v2401
        %v2404 = vmul.f32 %v2394, %v2402
        %v2405 = vpack.c.bf16 %v2404, %v2403
        %2406 = vrot.lane.b32.xlu0 %v2196, 56
        %v2407 = vpop.permute.xlu0 %2406
        %v2410 = vsel %vm602, %v2405, 0
        %2412 = vmatprep.subr.bf16.mxu0 0
        %2413 = vmatpush1.bf16.msra.mxu0 0
        %2414 = vmatprep.subr.bf16.mxu0 0
        %2415 = vmatpush1.bf16.msra.mxu0 0
        %2416 = vmatprep.subr.bf16.mxu0 0
        %2417 = vmatpush1.bf16.msra.mxu0 0
        %2418 = vmatprep.subr.bf16.mxu0 0
        %2419 = vmatpush1.bf16.msra.mxu0 0
        %2420 = vmatprep.subr.bf16.mxu0 0
        %2421 = vmatpush1.bf16.msra.mxu0 0
        %2422 = vmatprep.subr.bf16.mxu0 0
        %2423 = vmatpush1.bf16.msra.mxu0 0
        %2424 = vmatprep.subr.bf16.mxu0 0
        %2425 = vmatpush1.bf16.msra.mxu0 0
        %2426 = vmatprep.subr.bf16.mxu0 0
        %2427 = vmatpush1.bf16.msra.mxu0 %v2407
        %2428 = vmatprep.subr.bf16.mxu0 0
        %2429 = vmatpush2.bf16.msra.mxu0 0
        %2430 = vmatprep.subr.bf16.mxu0 0
        %2431 = vmatpush2.bf16.msra.mxu0 0
        %2432 = vmatprep.subr.bf16.mxu0 0
        %2433 = vmatpush2.bf16.msra.mxu0 0
        %2434 = vmatprep.subr.bf16.mxu0 0
        %2435 = vmatpush2.bf16.msra.mxu0 0
        %2436 = vmatprep.subr.bf16.mxu0 0
        %2437 = vmatpush2.bf16.msra.mxu0 0
        %2438 = vmatprep.subr.bf16.mxu0 0
        %2439 = vmatpush2.bf16.msra.mxu0 0
        %2440 = vmatprep.subr.bf16.mxu0 0
        %2441 = vmatpush2.bf16.msra.mxu0 0
        %2442 = vmatprep.subr.bf16.mxu0 0
        %2443 = vmatpush2.bf16.msra.mxu0 0
        %2444 = vmatprep.mubr.bf16.mxu0 0
        %2445 = vmatmul.mubr.bf16.gmra.mxu0 %v2410
        %v2446 = vpop.f32.mrf.mxu0
        %v2447 = vadd.f32 0.0, %v2446
        %v2448 = vpop.f32.mrf.mxu0
        %v2449 = vpop.f32.mrf.mxu0
        %v2450 = vadd.f32 0.0, %v2449
        %v2451 = vpop.f32.mrf.mxu0
        %2452 = vdwg.mxu0
        %2453 = vrot.lane.b32.xlu0 %v2188, 24
        %v2454 = vpop.permute.xlu0 %2453
        %2455 = vrot.lane.b32.xlu0 %v2190, 24
        %v2456 = vpop.permute.xlu0 %2455
        %v2459 = vmul.f32 %v2447, %v2454
        %v2460 = vmul.f32 %v2450, %v2456
        %v2461 = vpack.c.bf16 %v2460, %v2459
        %v2463 = vsel %vm1120, %v2461, 0
        %v2466 = vsel %vm1384, %v2193, 0
        %2468 = vmatprep.subr.bf16.mxu0 0
        %2469 = vmatpush1.bf16.msra.mxu0 0
        %2470 = vmatprep.subr.bf16.mxu0 0
        %2471 = vmatpush1.bf16.msra.mxu0 0
        %2472 = vmatprep.subr.bf16.mxu0 0
        %2473 = vmatpush1.bf16.msra.mxu0 0
        %2474 = vmatprep.subr.bf16.mxu0 0
        %2475 = vmatpush1.bf16.msra.mxu0 0
        %2476 = vmatprep.subr.bf16.mxu0 0
        %2477 = vmatpush1.bf16.msra.mxu0 0
        %2478 = vmatprep.subr.bf16.mxu0 0
        %2479 = vmatpush1.bf16.msra.mxu0 0
        %2480 = vmatprep.subr.bf16.mxu0 0
        %2481 = vmatpush1.bf16.msra.mxu0 0
        %2482 = vmatprep.subr.bf16.mxu0 0
        %2483 = vmatpush1.bf16.msra.mxu0 %v2466
        %2484 = vmatprep.subr.bf16.mxu0 0
        %2485 = vmatpush2.bf16.msra.mxu0 0
        %2486 = vmatprep.subr.bf16.mxu0 0
        %2487 = vmatpush2.bf16.msra.mxu0 0
        %2488 = vmatprep.subr.bf16.mxu0 0
        %2489 = vmatpush2.bf16.msra.mxu0 0
        %2490 = vmatprep.subr.bf16.mxu0 0
        %2491 = vmatpush2.bf16.msra.mxu0 0
        %2492 = vmatprep.subr.bf16.mxu0 0
        %2493 = vmatpush2.bf16.msra.mxu0 0
        %2494 = vmatprep.subr.bf16.mxu0 0
        %2495 = vmatpush2.bf16.msra.mxu0 0
        %2496 = vmatprep.subr.bf16.mxu0 0
        %2497 = vmatpush2.bf16.msra.mxu0 0
        %2498 = vmatprep.subr.bf16.mxu0 0
        %2499 = vmatpush2.bf16.msra.mxu0 0
        %2500 = vmatprep.mubr.bf16.mxu0 0
        %2501 = vmatmul.mubr.bf16.gmra.mxu0 %v2463
        %v2502 = vpop.f32.mrf.mxu0
        %v2503 = vadd.f32 0.0, %v2502
        %v2504 = vpop.f32.mrf.mxu0
        %v2505 = vpop.f32.mrf.mxu0
        %v2506 = vadd.f32 0.0, %v2505
        %v2507 = vpop.f32.mrf.mxu0
        %2508 = vdwg.mxu0
        %v2510 = vsel %vm1120, %v2329, 0
        %v2513 = vsel %vm1384, %v2192, 0
        %2515 = vmatprep.subr.bf16.mxu0 0
        %2516 = vmatpush1.bf16.msra.mxu0 0
        %2517 = vmatprep.subr.bf16.mxu0 0
        %2518 = vmatpush1.bf16.msra.mxu0 0
        %2519 = vmatprep.subr.bf16.mxu0 0
        %2520 = vmatpush1.bf16.msra.mxu0 0
        %2521 = vmatprep.subr.bf16.mxu0 0
        %2522 = vmatpush1.bf16.msra.mxu0 0
        %2523 = vmatprep.subr.bf16.mxu0 0
        %2524 = vmatpush1.bf16.msra.mxu0 0
        %2525 = vmatprep.subr.bf16.mxu0 0
        %2526 = vmatpush1.bf16.msra.mxu0 0
        %2527 = vmatprep.subr.bf16.mxu0 0
        %2528 = vmatpush1.bf16.msra.mxu0 0
        %2529 = vmatprep.subr.bf16.mxu0 0
        %2530 = vmatpush1.bf16.msra.mxu0 %v2513
        %2531 = vmatprep.subr.bf16.mxu0 0
        %2532 = vmatpush2.bf16.msra.mxu0 0
        %2533 = vmatprep.subr.bf16.mxu0 0
        %2534 = vmatpush2.bf16.msra.mxu0 0
        %2535 = vmatprep.subr.bf16.mxu0 0
        %2536 = vmatpush2.bf16.msra.mxu0 0
        %2537 = vmatprep.subr.bf16.mxu0 0
        %2538 = vmatpush2.bf16.msra.mxu0 0
        %2539 = vmatprep.subr.bf16.mxu0 0
        %2540 = vmatpush2.bf16.msra.mxu0 0
        %2541 = vmatprep.subr.bf16.mxu0 0
        %2542 = vmatpush2.bf16.msra.mxu0 0
        %2543 = vmatprep.subr.bf16.mxu0 0
        %2544 = vmatpush2.bf16.msra.mxu0 0
        %2545 = vmatprep.subr.bf16.mxu0 0
        %2546 = vmatpush2.bf16.msra.mxu0 0
        %2547 = vmatprep.mubr.bf16.mxu0 0
        %2548 = vmatmul.mubr.bf16.gmra.mxu0 %v2510
        %v2549 = vpop.f32.mrf.mxu0
        %v2550 = vadd.f32 %v2503, %v2549
        %v2551 = vpop.f32.mrf.mxu0
        %v2552 = vpop.f32.mrf.mxu0
        %v2553 = vadd.f32 %v2506, %v2552
        %v2554 = vpop.f32.mrf.mxu0
        %2555 = vdwg.mxu0
        %v2556 = vld [vmem:[%s932] sm:$0xff]
        %v2557 = vld [vmem:[%s932 + $0x8] sm:$0xff]
        %2558 = vrot.lane.b32.xlu0 %v2196, 112
        %v2559 = vpop.permute.xlu0 %2558
        %2560 = vrot.lane.b32.xlu0 %v2196, 80
        %v2561 = vpop.permute.xlu0 %2560
        %v2563 = vsel %vm1120, %v2559, 0
        %v2566 = vsel %vm1120, %v2561, 0
        %2568 = vmatprep.subr.bf16.mxu0 0
        %2569 = vmatpush1.bf16.xpose.msra.mxu0 0
        %2570 = vmatprep.subr.bf16.mxu0 0
        %2571 = vmatpush1.bf16.xpose.msra.mxu0 0
        %2572 = vmatprep.subr.bf16.mxu0 0
        %2573 = vmatpush1.bf16.xpose.msra.mxu0 0
        %2574 = vmatprep.subr.bf16.mxu0 0
        %2575 = vmatpush1.bf16.xpose.msra.mxu0 0
        %2576 = vmatprep.subr.bf16.mxu0 0
        %2577 = vmatpush1.bf16.xpose.msra.mxu0 0
        %2578 = vmatprep.subr.bf16.mxu0 0
        %2579 = vmatpush1.bf16.xpose.msra.mxu0 0
        %2580 = vmatprep.subr.bf16.mxu0 0
        %2581 = vmatpush1.bf16.xpose.msra.mxu0 0
        %2582 = vmatprep.subr.bf16.mxu0 0
        %2583 = vmatpush1.bf16.xpose.msra.mxu0 %v2566
        %2584 = vmatprep.subr.bf16.mxu0 0
        %2585 = vmatpush2.bf16.xpose.msra.mxu0 0
        %2586 = vmatprep.subr.bf16.mxu0 0
        %2587 = vmatpush2.bf16.xpose.msra.mxu0 0
        %2588 = vmatprep.subr.bf16.mxu0 0
        %2589 = vmatpush2.bf16.xpose.msra.mxu0 0
        %2590 = vmatprep.subr.bf16.mxu0 0
        %2591 = vmatpush2.bf16.xpose.msra.mxu0 0
        %2592 = vmatprep.subr.bf16.mxu0 0
        %2593 = vmatpush2.bf16.xpose.msra.mxu0 0
        %2594 = vmatprep.subr.bf16.mxu0 0
        %2595 = vmatpush2.bf16.xpose.msra.mxu0 0
        %2596 = vmatprep.subr.bf16.mxu0 0
        %2597 = vmatpush2.bf16.xpose.msra.mxu0 0
        %2598 = vmatprep.subr.bf16.mxu0 0
        %2599 = vmatpush2.bf16.xpose.msra.mxu0 0
        %2600 = vmatprep.mubr.bf16.mxu0 0
        %2601 = vmatmul.mubr.bf16.gmra.mxu0 %v2563
        %v2602 = vpop.f32.mrf.mxu0
        %v2603 = vadd.f32 %v2556, %v2602
        %v2604 = vpop.f32.mrf.mxu0
        %v2605 = vpop.f32.mrf.mxu0
        %v2606 = vadd.f32 %v2557, %v2605
        %v2607 = vpop.f32.mrf.mxu0
        %2608 = vdwg.mxu0
        %v2609 = vsel %vm602, %v2603, -inf
        %2610 = vmax.xlane.f32.xlu0 %v2609
        %v2611 = vpop.xlane.xlu0 %2610
        %v2612 = vsel %vm602, %v2606, -inf
        %2613 = vmax.xlane.f32.xlu0 %v2612
        %v2614 = vpop.xlane.xlu0 %2613
        %v2615 = vsub.f32 %v2603, %v2611
        %v2616 = vsub.f32 %v2606, %v2614
        %v2617 = vmul.f32 %v2615, 1.442695
        %v2618 = vpow.pop %v2617
        %v2619 = vmul.f32 %v2616, 1.442695
        %v2620 = vpow.pop %v2619
        %v2621 = vsel %vm602, %v2618, 0.0
        %2622 = vadd.xlane.f32.xlu0 %v2621
        %v2623 = vpop.xlane.xlu0 %2622
        %v2624 = vsel %vm602, %v2620, 0.0
        %2625 = vadd.xlane.f32.xlu0 %v2624
        %v2626 = vpop.xlane.xlu0 %2625
        %v2627 = vrcp.pop %v2623
        %v2628 = vrcp.pop %v2626
        %v2629 = vmul.f32 %v2618, %v2627
        %v2630 = vmul.f32 %v2620, %v2628
        %v2631 = vpack.c.bf16 %v2630, %v2629
        %2632 = vrot.lane.b32.xlu0 %v2196, 48
        %v2633 = vpop.permute.xlu0 %2632
        %v2636 = vsel %vm602, %v2631, 0
        %2638 = vmatprep.subr.bf16.mxu0 0
        %2639 = vmatpush1.bf16.msra.mxu0 0
        %2640 = vmatprep.subr.bf16.mxu0 0
        %2641 = vmatpush1.bf16.msra.mxu0 0
        %2642 = vmatprep.subr.bf16.mxu0 0
        %2643 = vmatpush1.bf16.msra.mxu0 0
        %2644 = vmatprep.subr.bf16.mxu0 0
        %2645 = vmatpush1.bf16.msra.mxu0 0
        %2646 = vmatprep.subr.bf16.mxu0 0
        %2647 = vmatpush1.bf16.msra.mxu0 0
        %2648 = vmatprep.subr.bf16.mxu0 0
        %2649 = vmatpush1.bf16.msra.mxu0 0
        %2650 = vmatprep.subr.bf16.mxu0 0
        %2651 = vmatpush1.bf16.msra.mxu0 0
        %2652 = vmatprep.subr.bf16.mxu0 0
        %2653 = vmatpush1.bf16.msra.mxu0 %v2633
        %2654 = vmatprep.subr.bf16.mxu0 0
        %2655 = vmatpush2.bf16.msra.mxu0 0
        %2656 = vmatprep.subr.bf16.mxu0 0
        %2657 = vmatpush2.bf16.msra.mxu0 0
        %2658 = vmatprep.subr.bf16.mxu0 0
        %2659 = vmatpush2.bf16.msra.mxu0 0
        %2660 = vmatprep.subr.bf16.mxu0 0
        %2661 = vmatpush2.bf16.msra.mxu0 0
        %2662 = vmatprep.subr.bf16.mxu0 0
        %2663 = vmatpush2.bf16.msra.mxu0 0
        %2664 = vmatprep.subr.bf16.mxu0 0
        %2665 = vmatpush2.bf16.msra.mxu0 0
        %2666 = vmatprep.subr.bf16.mxu0 0
        %2667 = vmatpush2.bf16.msra.mxu0 0
        %2668 = vmatprep.subr.bf16.mxu0 0
        %2669 = vmatpush2.bf16.msra.mxu0 0
        %2670 = vmatprep.mubr.bf16.mxu0 0
        %2671 = vmatmul.mubr.bf16.gmra.mxu0 %v2636
        %v2672 = vpop.f32.mrf.mxu0
        %v2673 = vadd.f32 0.0, %v2672
        %v2674 = vpop.f32.mrf.mxu0
        %v2675 = vpop.f32.mrf.mxu0
        %v2676 = vadd.f32 0.0, %v2675
        %v2677 = vpop.f32.mrf.mxu0
        %2678 = vdwg.mxu0
        %2679 = vrot.lane.b32.xlu0 %v2188, 16
        %v2680 = vpop.permute.xlu0 %2679
        %2681 = vrot.lane.b32.xlu0 %v2190, 16
        %v2682 = vpop.permute.xlu0 %2681
        %v2685 = vmul.f32 %v2673, %v2680
        %v2686 = vmul.f32 %v2676, %v2682
        %v2687 = vpack.c.bf16 %v2686, %v2685
        %v2689 = vsel %vm1120, %v2687, 0
        %v2692 = vsel %vm1384, %v2194, 0
        %2694 = vmatprep.subr.bf16.mxu0 0
        %2695 = vmatpush1.bf16.msra.mxu0 0
        %2696 = vmatprep.subr.bf16.mxu0 0
        %2697 = vmatpush1.bf16.msra.mxu0 0
        %2698 = vmatprep.subr.bf16.mxu0 0
        %2699 = vmatpush1.bf16.msra.mxu0 0
        %2700 = vmatprep.subr.bf16.mxu0 0
        %2701 = vmatpush1.bf16.msra.mxu0 0
        %2702 = vmatprep.subr.bf16.mxu0 0
        %2703 = vmatpush1.bf16.msra.mxu0 0
        %2704 = vmatprep.subr.bf16.mxu0 0
        %2705 = vmatpush1.bf16.msra.mxu0 0
        %2706 = vmatprep.subr.bf16.mxu0 0
        %2707 = vmatpush1.bf16.msra.mxu0 0
        %2708 = vmatprep.subr.bf16.mxu0 0
        %2709 = vmatpush1.bf16.msra.mxu0 %v2692
        %2710 = vmatprep.subr.bf16.mxu0 0
        %2711 = vmatpush2.bf16.msra.mxu0 0
        %2712 = vmatprep.subr.bf16.mxu0 0
        %2713 = vmatpush2.bf16.msra.mxu0 0
        %2714 = vmatprep.subr.bf16.mxu0 0
        %2715 = vmatpush2.bf16.msra.mxu0 0
        %2716 = vmatprep.subr.bf16.mxu0 0
        %2717 = vmatpush2.bf16.msra.mxu0 0
        %2718 = vmatprep.subr.bf16.mxu0 0
        %2719 = vmatpush2.bf16.msra.mxu0 0
        %2720 = vmatprep.subr.bf16.mxu0 0
        %2721 = vmatpush2.bf16.msra.mxu0 0
        %2722 = vmatprep.subr.bf16.mxu0 0
        %2723 = vmatpush2.bf16.msra.mxu0 0
        %2724 = vmatprep.subr.bf16.mxu0 0
        %2725 = vmatpush2.bf16.msra.mxu0 0
        %2726 = vmatprep.mubr.bf16.mxu0 0
        %2727 = vmatmul.mubr.bf16.gmra.mxu0 %v2689
        %v2728 = vpop.f32.mrf.mxu0
        %v2729 = vadd.f32 0.0, %v2728
        %v2730 = vpop.f32.mrf.mxu0
        %v2731 = vpop.f32.mrf.mxu0
        %v2732 = vadd.f32 0.0, %v2731
        %v2733 = vpop.f32.mrf.mxu0
        %2734 = vdwg.mxu0
        %v2735 = vadd.f32 %v2550, %v2729
        %v2736 = vadd.f32 %v2553, %v2732
        %v2737 = vld [vmem:[%s987] sm:$0xff]
        %v2738 = vld [vmem:[%s987 + $0x8] sm:$0xff]
        %2739 = vrot.lane.b32.xlu0 %v2196, 104
        %v2740 = vpop.permute.xlu0 %2739
        %2741 = vrot.lane.b32.xlu0 %v2196, 72
        %v2742 = vpop.permute.xlu0 %2741
        %v2744 = vsel %vm1120, %v2740, 0
        %v2747 = vsel %vm1120, %v2742, 0
        %2749 = vmatprep.subr.bf16.mxu0 0
        %2750 = vmatpush1.bf16.xpose.msra.mxu0 0
        %2751 = vmatprep.subr.bf16.mxu0 0
        %2752 = vmatpush1.bf16.xpose.msra.mxu0 0
        %2753 = vmatprep.subr.bf16.mxu0 0
        %2754 = vmatpush1.bf16.xpose.msra.mxu0 0
        %2755 = vmatprep.subr.bf16.mxu0 0
        %2756 = vmatpush1.bf16.xpose.msra.mxu0 0
        %2757 = vmatprep.subr.bf16.mxu0 0
        %2758 = vmatpush1.bf16.xpose.msra.mxu0 0
        %2759 = vmatprep.subr.bf16.mxu0 0
        %2760 = vmatpush1.bf16.xpose.msra.mxu0 0
        %2761 = vmatprep.subr.bf16.mxu0 0
        %2762 = vmatpush1.bf16.xpose.msra.mxu0 0
        %2763 = vmatprep.subr.bf16.mxu0 0
        %2764 = vmatpush1.bf16.xpose.msra.mxu0 %v2747
        %2765 = vmatprep.subr.bf16.mxu0 0
        %2766 = vmatpush2.bf16.xpose.msra.mxu0 0
        %2767 = vmatprep.subr.bf16.mxu0 0
        %2768 = vmatpush2.bf16.xpose.msra.mxu0 0
        %2769 = vmatprep.subr.bf16.mxu0 0
        %2770 = vmatpush2.bf16.xpose.msra.mxu0 0
        %2771 = vmatprep.subr.bf16.mxu0 0
        %2772 = vmatpush2.bf16.xpose.msra.mxu0 0
        %2773 = vmatprep.subr.bf16.mxu0 0
        %2774 = vmatpush2.bf16.xpose.msra.mxu0 0
        %2775 = vmatprep.subr.bf16.mxu0 0
        %2776 = vmatpush2.bf16.xpose.msra.mxu0 0
        %2777 = vmatprep.subr.bf16.mxu0 0
        %2778 = vmatpush2.bf16.xpose.msra.mxu0 0
        %2779 = vmatprep.subr.bf16.mxu0 0
        %2780 = vmatpush2.bf16.xpose.msra.mxu0 0
        %2781 = vmatprep.mubr.bf16.mxu0 0
        %2782 = vmatmul.mubr.bf16.gmra.mxu0 %v2744
        %v2783 = vpop.f32.mrf.mxu0
        %v2784 = vadd.f32 %v2737, %v2783
        %v2785 = vpop.f32.mrf.mxu0
        %v2786 = vpop.f32.mrf.mxu0
        %v2787 = vadd.f32 %v2738, %v2786
        %v2788 = vpop.f32.mrf.mxu0
        %2789 = vdwg.mxu0
        %v2790 = vsel %vm602, %v2784, -inf
        %2791 = vmax.xlane.f32.xlu0 %v2790
        %v2792 = vpop.xlane.xlu0 %2791
        %v2793 = vsel %vm602, %v2787, -inf
        %2794 = vmax.xlane.f32.xlu0 %v2793
        %v2795 = vpop.xlane.xlu0 %2794
        %v2796 = vsub.f32 %v2784, %v2792
        %v2797 = vsub.f32 %v2787, %v2795
        %v2798 = vmul.f32 %v2796, 1.442695
        %v2799 = vpow.pop %v2798
        %v2800 = vmul.f32 %v2797, 1.442695
        %v2801 = vpow.pop %v2800
        %v2802 = vsel %vm602, %v2799, 0.0
        %2803 = vadd.xlane.f32.xlu0 %v2802
        %v2804 = vpop.xlane.xlu0 %2803
        %v2805 = vsel %vm602, %v2801, 0.0
        %2806 = vadd.xlane.f32.xlu0 %v2805
        %v2807 = vpop.xlane.xlu0 %2806
        %v2808 = vrcp.pop %v2804
        %v2809 = vrcp.pop %v2807
        %v2810 = vmul.f32 %v2799, %v2808
        %v2811 = vmul.f32 %v2801, %v2809
        %v2812 = vpack.c.bf16 %v2811, %v2810
        %2813 = vrot.lane.b32.xlu0 %v2196, 40
        %v2814 = vpop.permute.xlu0 %2813
        %v2817 = vsel %vm602, %v2812, 0
        %2819 = vmatprep.subr.bf16.mxu0 0
        %2820 = vmatpush1.bf16.msra.mxu0 0
        %2821 = vmatprep.subr.bf16.mxu0 0
        %2822 = vmatpush1.bf16.msra.mxu0 0
        %2823 = vmatprep.subr.bf16.mxu0 0
        %2824 = vmatpush1.bf16.msra.mxu0 0
        %2825 = vmatprep.subr.bf16.mxu0 0
        %2826 = vmatpush1.bf16.msra.mxu0 0
        %2827 = vmatprep.subr.bf16.mxu0 0
        %2828 = vmatpush1.bf16.msra.mxu0 0
        %2829 = vmatprep.subr.bf16.mxu0 0
        %2830 = vmatpush1.bf16.msra.mxu0 0
        %2831 = vmatprep.subr.bf16.mxu0 0
        %2832 = vmatpush1.bf16.msra.mxu0 0
        %2833 = vmatprep.subr.bf16.mxu0 0
        %2834 = vmatpush1.bf16.msra.mxu0 %v2814
        %2835 = vmatprep.subr.bf16.mxu0 0
        %2836 = vmatpush2.bf16.msra.mxu0 0
        %2837 = vmatprep.subr.bf16.mxu0 0
        %2838 = vmatpush2.bf16.msra.mxu0 0
        %2839 = vmatprep.subr.bf16.mxu0 0
        %2840 = vmatpush2.bf16.msra.mxu0 0
        %2841 = vmatprep.subr.bf16.mxu0 0
        %2842 = vmatpush2.bf16.msra.mxu0 0
        %2843 = vmatprep.subr.bf16.mxu0 0
        %2844 = vmatpush2.bf16.msra.mxu0 0
        %2845 = vmatprep.subr.bf16.mxu0 0
        %2846 = vmatpush2.bf16.msra.mxu0 0
        %2847 = vmatprep.subr.bf16.mxu0 0
        %2848 = vmatpush2.bf16.msra.mxu0 0
        %2849 = vmatprep.subr.bf16.mxu0 0
        %2850 = vmatpush2.bf16.msra.mxu0 0
        %2851 = vmatprep.mubr.bf16.mxu0 0
        %2852 = vmatmul.mubr.bf16.gmra.mxu0 %v2817
        %v2853 = vpop.f32.mrf.mxu0
        %v2854 = vadd.f32 0.0, %v2853
        %v2855 = vpop.f32.mrf.mxu0
        %v2856 = vpop.f32.mrf.mxu0
        %v2857 = vadd.f32 0.0, %v2856
        %v2858 = vpop.f32.mrf.mxu0
        %2859 = vdwg.mxu0
        %2860 = vrot.lane.b32.xlu0 %v2188, 8
        %v2861 = vpop.permute.xlu0 %2860
        %2862 = vrot.lane.b32.xlu0 %v2190, 8
        %v2863 = vpop.permute.xlu0 %2862
        %v2866 = vmul.f32 %v2854, %v2861
        %v2867 = vmul.f32 %v2857, %v2863
        %v2868 = vpack.c.bf16 %v2867, %v2866
        %v2870 = vsel %vm1120, %v2868, 0
        %v2873 = vsel %vm1384, %v2195, 0
        %2875 = vmatprep.subr.bf16.mxu0 0
        %2876 = vmatpush1.bf16.msra.mxu0 0
        %2877 = vmatprep.subr.bf16.mxu0 0
        %2878 = vmatpush1.bf16.msra.mxu0 0
        %2879 = vmatprep.subr.bf16.mxu0 0
        %2880 = vmatpush1.bf16.msra.mxu0 0
        %2881 = vmatprep.subr.bf16.mxu0 0
        %2882 = vmatpush1.bf16.msra.mxu0 0
        %2883 = vmatprep.subr.bf16.mxu0 0
        %2884 = vmatpush1.bf16.msra.mxu0 0
        %2885 = vmatprep.subr.bf16.mxu0 0
        %2886 = vmatpush1.bf16.msra.mxu0 0
        %2887 = vmatprep.subr.bf16.mxu0 0
        %2888 = vmatpush1.bf16.msra.mxu0 0
        %2889 = vmatprep.subr.bf16.mxu0 0
        %2890 = vmatpush1.bf16.msra.mxu0 %v2873
        %2891 = vmatprep.subr.bf16.mxu0 0
        %2892 = vmatpush2.bf16.msra.mxu0 0
        %2893 = vmatprep.subr.bf16.mxu0 0
        %2894 = vmatpush2.bf16.msra.mxu0 0
        %2895 = vmatprep.subr.bf16.mxu0 0
        %2896 = vmatpush2.bf16.msra.mxu0 0
        %2897 = vmatprep.subr.bf16.mxu0 0
        %2898 = vmatpush2.bf16.msra.mxu0 0
        %2899 = vmatprep.subr.bf16.mxu0 0
        %2900 = vmatpush2.bf16.msra.mxu0 0
        %2901 = vmatprep.subr.bf16.mxu0 0
        %2902 = vmatpush2.bf16.msra.mxu0 0
        %2903 = vmatprep.subr.bf16.mxu0 0
        %2904 = vmatpush2.bf16.msra.mxu0 0
        %2905 = vmatprep.subr.bf16.mxu0 0
        %2906 = vmatpush2.bf16.msra.mxu0 0
        %2907 = vmatprep.mubr.bf16.mxu0 0
        %2908 = vmatmul.mubr.bf16.gmra.mxu0 %v2870
        %v2909 = vpop.f32.mrf.mxu0
        %v2910 = vadd.f32 0.0, %v2909
        %v2911 = vpop.f32.mrf.mxu0
        %v2912 = vpop.f32.mrf.mxu0
        %v2913 = vadd.f32 0.0, %v2912
        %v2914 = vpop.f32.mrf.mxu0
        %2915 = vdwg.mxu0
        %v2916 = vadd.f32 %v2735, %v2910
        %v2917 = vadd.f32 %v2736, %v2913
        %v2918 = vadd.f32 %v2071, %v2916
        %v2919 = vadd.f32 %v2072, %v2917
        %v2920 = vsel %vm993, %v2918, 0.0
        %2921 = vadd.xlane.f32.xlu0 %v2920
        %v2922 = vpop.xlane.xlu0 %2921
        %v2923 = vsel %vm993, %v2919, 0.0
        %2924 = vadd.xlane.f32.xlu0 %v2923
        %v2925 = vpop.xlane.xlu0 %2924
        %v2926 = vmul.f32 %v2922, %v1000
        %v2927 = vmul.f32 %v2925, %v1000
        %v2928 = vsub.f32 %v2918, %v2926
        %v2929 = vsub.f32 %v2919, %v2927
        %v2930 = vmul.f32 %v2928, %v2928
        %v2931 = vmul.f32 %v2929, %v2929
        %v2932 = vsel %vm993, %v2930, 0.0
        %2933 = vadd.xlane.f32.xlu0 %v2932
        %v2934 = vpop.xlane.xlu0 %2933
        %v2935 = vsel %vm993, %v2931, 0.0
        %2936 = vadd.xlane.f32.xlu0 %v2935
        %v2937 = vpop.xlane.xlu0 %2936
        %v2938 = vmul.f32 %v2934, %v1000
        %v2939 = vmul.f32 %v2937, %v1000
        %v2940 = vadd.f32 %v2938, 1e-05
        %v2941 = vadd.f32 %v2939, 1e-05
        %v2942 = vrsqrt.pop %v2940
        %v2943 = vrsqrt.pop %v2941
        %v2944 = vmul.f32 %v2928, %v2942
        %v2945 = vmul.f32 %v2929, %v2943
        %v2946 = vlaneseq
        %v2947 = vshrl.u32 %v2946, 7
        %v2948 = vsub.s32 3, %v2947
        %v2949 = vrot.slane %v2074, %v2948
        %v2950 = vmul.f32 %v2944, %v2949
        %v2951 = vmul.f32 %v2945, %v2949
        %v2952 = vlaneseq
        %v2953 = vshrl.u32 %v2952, 7
        %v2954 = vsub.s32 4, %v2953
        %v2955 = vrot.slane %v2074, %v2954
        %v2956 = vadd.f32 %v2950, %v2955
        %v2957 = vadd.f32 %v2951, %v2955
        %v2958 = vpack.c.bf16 %v2957, %v2956
        %s2959 = scalar_lea.vmem %s5, 32
        %v2960 = vld [vmem:[%s2959] sm:$0xff]
        %v2961 = vld [vmem:[%s2959 + $0x8] sm:$0xff]
        %v2962 = vld [vmem:[%s2959 + $0x10] sm:$0xff]
        %v2963 = vld [vmem:[%s2959 + $0x18] sm:$0xff]
        %v2968 = vunpack.c.l.b16 %v2960
        %v2969 = vunpack.c.h.b16 %v2960
        %v2970 = vunpack.c.l.b16 %v2961
        %v2971 = vunpack.c.h.b16 %v2961
        %v2972 = vunpack.c.l.b16 %v2962
        %v2973 = vunpack.c.h.b16 %v2962
        %v2974 = vunpack.c.l.b16 %v2963
        %v2975 = vunpack.c.h.b16 %v2963
        %v2976 = vpack.c.b16 %v2970, %v2968
        %v2977 = vpack.c.b16 %v2971, %v2969
        %v2978 = vpack.c.b16 %v2974, %v2972
        %v2979 = vpack.c.b16 %v2975, %v2973
        %v2985 = vsel %vm993, %v2958, 0
        %2987 = vmatprep.subr.bf16.mxu0 0
        %2988 = vmatpush1.bf16.msra.mxu0 0
        %2989 = vmatprep.subr.bf16.mxu0 0
        %2990 = vmatpush1.bf16.msra.mxu0 0
        %2991 = vmatprep.subr.bf16.mxu0 0
        %2992 = vmatpush1.bf16.msra.mxu0 0
        %2993 = vmatprep.subr.bf16.mxu0 0
        %2994 = vmatpush1.bf16.msra.mxu0 0
        %2995 = vmatprep.subr.bf16.mxu0 0
        %2996 = vmatpush1.bf16.msra.mxu0 0
        %2997 = vmatprep.subr.bf16.mxu0 0
        %2998 = vmatpush1.bf16.msra.mxu0 0
        %2999 = vmatprep.subr.bf16.mxu0 %v2979
        %3000 = vmatpush1.bf16.msra.mxu0 %v2978
        %3001 = vmatprep.subr.bf16.mxu0 %v2977
        %3002 = vmatpush1.bf16.msra.mxu0 %v2976
        %3003 = vmatprep.subr.bf16.mxu0 0
        %3004 = vmatpush2.bf16.msra.mxu0 0
        %3005 = vmatprep.subr.bf16.mxu0 0
        %3006 = vmatpush2.bf16.msra.mxu0 0
        %3007 = vmatprep.subr.bf16.mxu0 0
        %3008 = vmatpush2.bf16.msra.mxu0 0
        %3009 = vmatprep.subr.bf16.mxu0 0
        %3010 = vmatpush2.bf16.msra.mxu0 0
        %3011 = vmatprep.subr.bf16.mxu0 0
        %3012 = vmatpush2.bf16.msra.mxu0 0
        %3013 = vmatprep.subr.bf16.mxu0 0
        %3014 = vmatpush2.bf16.msra.mxu0 0
        %3015 = vmatprep.subr.bf16.mxu0 0
        %3016 = vmatpush2.bf16.msra.mxu0 0
        %3017 = vmatprep.subr.bf16.mxu0 0
        %3018 = vmatpush2.bf16.msra.mxu0 0
        %3019 = vmatprep.mubr.bf16.mxu0 0
        %3020 = vmatmul.mubr.bf16.gmra.mxu0 %v2985
        %v3021 = vpop.f32.mrf.mxu0
        %v3022 = vadd.f32 0.0, %v3021
        %v3023 = vpop.f32.mrf.mxu0
        %v3024 = vadd.f32 0.0, %v3023
        %v3025 = vpop.f32.mrf.mxu0
        %v3026 = vadd.f32 0.0, %v3025
        %v3027 = vpop.f32.mrf.mxu0
        %v3028 = vadd.f32 0.0, %v3027
        %3029 = vdwg.mxu0
        %v3030 = vxor.u32 %v3022, 2147483648
        %v3031 = vxor.u32 %v3026, 2147483648
        %v3032 = vmul.f32 %v3030, 1.442695
        %v3033 = vpow.pop %v3032
        %v3034 = vmul.f32 %v3031, 1.442695
        %v3035 = vpow.pop %v3034
        %v3036 = vadd.f32 %v3033, 1.0
        %v3037 = vadd.f32 %v3035, 1.0
        %v3038 = vrcp.pop %v3036
        %v3039 = vmul.f32 1.0, %v3038
        %v3040 = vrcp.pop %v3037
        %v3041 = vmul.f32 1.0, %v3040
        %v3042 = vmul.f32 %v3022, %v3039
        %v3043 = vmul.f32 %v3026, %v3041
        %v3044 = vmul.f32 %v3042, %v3024
        %v3045 = vmul.f32 %v3043, %v3028
        %v3046 = vpack.c.bf16 %v3045, %v3044
        %s3047 = scalar_lea.vmem %s6, 64
        %v3048 = vld [vmem:[%s3047] sm:$0xf]
        %v3049 = vld [vmem:[%s3047 + $0x4] sm:$0xf]
        %v3050 = vld [vmem:[%s3047 + $0x8] sm:$0xf]
        %v3051 = vld [vmem:[%s3047 + $0xc] sm:$0xf]
        %v3052 = vld [vmem:[%s3047 + $0x10] sm:$0xf]
        %v3053 = vld [vmem:[%s3047 + $0x14] sm:$0xf]
        %v3054 = vld [vmem:[%s3047 + $0x18] sm:$0xf]
        %v3055 = vld [vmem:[%s3047 + $0x1c] sm:$0xf]
        %v3056 = vld [vmem:[%s3047 + $0x20] sm:$0xf]
        %v3057 = vld [vmem:[%s3047 + $0x24] sm:$0xf]
        %v3058 = vld [vmem:[%s3047 + $0x28] sm:$0xf]
        %v3059 = vld [vmem:[%s3047 + $0x2c] sm:$0xf]
        %v3060 = vld [vmem:[%s3047 + $0x30] sm:$0xf]
        %v3061 = vld [vmem:[%s3047 + $0x34] sm:$0xf]
        %v3062 = vld [vmem:[%s3047 + $0x38] sm:$0xf]
        %v3063 = vld [vmem:[%s3047 + $0x3c] sm:$0xf]
        %v3080 = vunpack.c.l.b16 %v3048
        %v3081 = vunpack.c.l.b16 %v3049
        %v3082 = vunpack.c.l.b16 %v3050
        %v3083 = vunpack.c.l.b16 %v3051
        %v3084 = vunpack.c.l.b16 %v3052
        %v3085 = vunpack.c.l.b16 %v3053
        %v3086 = vunpack.c.l.b16 %v3054
        %v3087 = vunpack.c.l.b16 %v3055
        %v3088 = vunpack.c.l.b16 %v3056
        %v3089 = vunpack.c.l.b16 %v3057
        %v3090 = vunpack.c.l.b16 %v3058
        %v3091 = vunpack.c.l.b16 %v3059
        %v3092 = vunpack.c.l.b16 %v3060
        %v3093 = vunpack.c.l.b16 %v3061
        %v3094 = vunpack.c.l.b16 %v3062
        %v3095 = vunpack.c.l.b16 %v3063
        %v3096 = vpack.c.b16 %v3081, %v3080
        %v3097 = vpack.c.b16 %v3083, %v3082
        %v3098 = vpack.c.b16 %v3085, %v3084
        %v3099 = vpack.c.b16 %v3087, %v3086
        %v3100 = vpack.c.b16 %v3089, %v3088
        %v3101 = vpack.c.b16 %v3091, %v3090
        %v3102 = vpack.c.b16 %v3093, %v3092
        %v3103 = vpack.c.b16 %v3095, %v3094
        %3112 = vmatprep.subr.bf16.mxu0 0
        %3113 = vmatpush1.bf16.msra.mxu0 %v3103
        %3114 = vmatprep.subr.bf16.mxu0 0
        %3115 = vmatpush1.bf16.msra.mxu0 %v3102
        %3116 = vmatprep.subr.bf16.mxu0 0
        %3117 = vmatpush1.bf16.msra.mxu0 %v3101
        %3118 = vmatprep.subr.bf16.mxu0 0
        %3119 = vmatpush1.bf16.msra.mxu0 %v3100
        %3120 = vmatprep.subr.bf16.mxu0 0
        %3121 = vmatpush1.bf16.msra.mxu0 %v3099
        %3122 = vmatprep.subr.bf16.mxu0 0
        %3123 = vmatpush1.bf16.msra.mxu0 %v3098
        %3124 = vmatprep.subr.bf16.mxu0 0
        %3125 = vmatpush1.bf16.msra.mxu0 %v3097
        %3126 = vmatprep.subr.bf16.mxu0 0
        %3127 = vmatpush1.bf16.msra.mxu0 %v3096
        %3128 = vmatprep.subr.bf16.mxu0 0
        %3129 = vmatpush2.bf16.msra.mxu0 0
        %3130 = vmatprep.subr.bf16.mxu0 0
        %3131 = vmatpush2.bf16.msra.mxu0 0
        %3132 = vmatprep.subr.bf16.mxu0 0
        %3133 = vmatpush2.bf16.msra.mxu0 0
        %3134 = vmatprep.subr.bf16.mxu0 0
        %3135 = vmatpush2.bf16.msra.mxu0 0
        %3136 = vmatprep.subr.bf16.mxu0 0
        %3137 = vmatpush2.bf16.msra.mxu0 0
        %3138 = vmatprep.subr.bf16.mxu0 0
        %3139 = vmatpush2.bf16.msra.mxu0 0
        %3140 = vmatprep.subr.bf16.mxu0 0
        %3141 = vmatpush2.bf16.msra.mxu0 0
        %3142 = vmatprep.subr.bf16.mxu0 0
        %3143 = vmatpush2.bf16.msra.mxu0 0
        %3144 = vmatprep.mubr.bf16.mxu0 0
        %3145 = vmatmul.mubr.bf16.gmra.mxu0 %v3046
        %v3146 = vpop.f32.mrf.mxu0
        %v3147 = vadd.f32 0.0, %v3146
        %v3148 = vpop.f32.mrf.mxu0
        %v3149 = vpop.f32.mrf.mxu0
        %v3150 = vadd.f32 0.0, %v3149
        %v3151 = vpop.f32.mrf.mxu0
        %3152 = vdwg.mxu0
        %v3153 = vadd.f32 %v2918, %v3147
        %v3154 = vadd.f32 %v2919, %v3150
        %3155 = vst.msk [vmem:[%s425] sm:$0xff] %vm993, %v3153
        %3156 = vst.msk [vmem:[%s425 + $0x8] sm:$0xff] %vm993, %v3154
        %s3157 = sand.u32 %s240, 1
        %s3158 = scalar_lea.sflag [#allocation5], %s3157
        %s3159 = sand.u32 %s240, 1
        %s3160 = smul.addr %s3159, 16
        %s3161 = scalar_lea.vmem [#allocation11], %s3160
        // Predicated region
        $region73: #{tpu_custom_call.1} parent=55 // pred_check
          %p3162 = pneg %p250
        $region74: #{tpu_custom_call.1} parent=55 // pred_check_branch
          %3164 = sbr.rel (%p3162) target = $region76
        $region75: #{tpu_custom_call.1} parent=55 // pred_region
          %s3166 = ssub.s32 256, 256
          %3167 = vsyncadd %s3158, %s3166
          %s3168 = smul.addr %s28, 2
          %s3169 = smul.addr %s3168, 128
          %s3170 = scalar_lea.hbm %s9, %s3169
          %s3171 = sshll.u32 %s3161, 4
          %s3172 = int_to_ptr.vmem [resolvable:$true] %s3171
          %3177 = dma.vmem_to_hbm [thread:$0]  %s3172, 256, %s3170, %s3158, 128, 128, 8
        $region76: #{tpu_custom_call.1} parent=55 // pred_fallthru
          _
      $region56: #{tpu_custom_call.1} parent=5 // pred_fallthru
        _
      %p3178 = scmp.le.s32.totalorder 2, %s23
      // Predicated region
      $region77: #{tpu_custom_call.1} parent=5 // pred_check
        %p3179 = pneg %p3178
      $region78: #{tpu_custom_call.1} parent=5 // pred_check_branch
        %3181 = sbr.rel (%p3179) target = $region80
      $region79: #{tpu_custom_call.1} parent=5 // pred_region
        %s3182 = ssub.s32 %s23, 2
        // Predicated region
        $region81: #{tpu_custom_call.1} parent=79 // pred_check
          %p3183 = pneg %p256
        $region82: #{tpu_custom_call.1} parent=79 // pred_check_branch
          %3185 = sbr.rel (%p3183) target = $region84
        $region83: #{tpu_custom_call.1} parent=79 // pred_region
          %s3186 = sand.u32 %s241, 1
          %s3187 = scalar_lea.sflag [#allocation5], %s3186
          %s3188 = sand.u32 %s241, 1
          %s3189 = smul.addr %s3188, 16
          %s3190 = scalar_lea.vmem [#allocation11], %s3189
          %3191 = dma.done %s3187, 256
        $region84: #{tpu_custom_call.1} parent=79 // pred_fallthru
          _
      $region80: #{tpu_custom_call.1} parent=5 // pred_fallthru
        _
    $region6: #{tpu_custom_call.1} parent=1 // loop_footer
      %s27 = sadd.s32 1, %s23
    $region7: #{tpu_custom_call.1} parent=1 // loop_footer_branch
      %22 = sbr.rel target = $region3
    $region8: #{tpu_custom_call.1} parent=1 // loop_exit
      _
    %3192 = vsyncpa [#allocation4], 1
    %s3193 = scalar_lea.sflag [#allocation4], 1
    %3194 = vsyncpa %s3193, 1
    %3195 = vsyncpa [#allocation8], 1
    %3196 = vsyncpa [#allocation5], 1
    %s3197 = scalar_lea.sflag [#allocation5], 1
    %3198 = vsyncpa %s3197, 1
    %3199 = vsyncpa [#allocation6], 1
    %s3200 = scalar_lea.sflag [#allocation6], 1
    %3201 = vsyncpa %s3200, 1

</llo_original>
